<compile_context>
chip_gen: v5e
topology: v5e:2x2
jax: 0.10.0
libtpu: 0.0.40
codegen_flags: <defaults>
</compile_context>

<pallas_src>
import jax
import jax.numpy as jnp
from jax.experimental import pallas as pl
from jax.experimental.pallas import tpu as pltpu

STATE_DIM = 4
CONV_UNITS = 32
BOARD = 8
ACTION_SIZE = BOARD * BOARD   # 64
BATCH = 2
BN_EPS = 1e-5

VMEM_SPEC = pl.BlockSpec(memory_space=pltpu.MemorySpace.VMEM)


# ----------------------------------------------------------------------------
# Single fused kernel: conv1+BN+ReLU -> conv2+BN+ReLU -> maxpool -> heads
# ----------------------------------------------------------------------------
def net_kernel(x_ref, w1_ref, w2_ref, gamma_ref, beta_ref,
               wh_ref, bh_ref, wp_ref, bp_ref, wv_ref, bv_ref,
               policy_ref, value_ref,
               pad1_ref, pad2_ref, pad3_ref, patch1_ref, patch2_ref):
    # x_ref:   (N, H, W, Cin)        input (NHWC)
    # w1_ref:  (9*Cin, C)            conv1 taps, row index = (dy*3+dx)*Cin + ci
    # w2_ref:  (9*C, C)              conv2 taps
    # gamma/beta: (1, C)             shared BatchNorm affine params
    # wh_ref:  (C, 3)  bh_ref:(1,3)  merged 1x1 head convs [p_ch0, p_ch1, v_ch0]
    # wp_ref:  (2A, A) bp_ref:(1,A)  policy Linear (channel-major K order)
    # wv_ref:  (A, 1)  bv_ref:(1,1)  value Linear
    # policy_ref: (N, A)   value_ref: (N, 1)
    N, H, W, Cin = x_ref.shape
    C = w1_ref.shape[1]          # conv_units
    M = N * H * W                # 128 rows (one full sublane tile)
    A = H * W                    # action size

    def conv_bn_relu(pad_ref, patch_ref, w_ref):
        """3x3 conv (padding prebuilt in pad_ref) + BN(batch stats) + ReLU."""
        cin = pad_ref.shape[-1]
        # im2col: build one (M, 9*cin) patch matrix -> single MXU matmul.
        for k in range(9):
            dy, dx = k // 3, k % 3
            patch_ref[:, k * cin:(k + 1) * cin] = (
                pad_ref[:, dy:dy + H, dx:dx + W, :].reshape(M, cin))
        acc = jnp.dot(patch_ref[...], w_ref[...],
                      preferred_element_type=jnp.float32)          # (M, C)
        # training-mode BatchNorm over (N, H, W) per channel (biased variance)
        mean = jnp.mean(acc, axis=0, keepdims=True)
        var = jnp.mean((acc - mean) ** 2, axis=0, keepdims=True)
        y = (acc - mean) * jax.lax.rsqrt(var + BN_EPS) * gamma_ref[...] \
            + beta_ref[...]
        return jnp.maximum(y, 0.0)                                  # (M, C)

    # ---- stage 1: conv1 + BN + ReLU (zero padding built in VMEM) -----------
    pad1_ref[...] = jnp.zeros_like(pad1_ref)
    pad1_ref[:, 1:H + 1, 1:W + 1, :] = x_ref[...]
    y1 = conv_bn_relu(pad1_ref, patch1_ref, w1_ref)                 # (M, C)

    # ---- stage 2: conv2 + BN + ReLU ----------------------------------------
    pad2_ref[...] = jnp.zeros_like(pad2_ref)
    pad2_ref[:, 1:H + 1, 1:W + 1, :] = y1.reshape(N, H, W, C)
    y2 = conv_bn_relu(pad2_ref, patch2_ref, w2_ref)                 # (M, C)

    # ---- stage 3: 3x3 max-pool, stride 1, padding 1 (-inf implicit pad) ----
    pad3_ref[...] = jnp.full(pad3_ref.shape, -jnp.inf, jnp.float32)
    pad3_ref[:, 1:H + 1, 1:W + 1, :] = y2.reshape(N, H, W, C)
    pooled = pad3_ref[:, 0:H, 0:W, :].reshape(M, C)
    for k in range(1, 9):
        dy, dx = k // 3, k % 3
        pooled = jnp.maximum(
            pooled, pad3_ref[:, dy:dy + H, dx:dx + W, :].reshape(M, C))

    # ---- stage 4: heads (merged 1x1 convs + linears) -----------------------
    h = jnp.dot(pooled, wh_ref[...], preferred_element_type=jnp.float32) \
        + bh_ref[...]
    h = jnp.maximum(h, 0.0)                                         # (M, 3)
    h3 = h.reshape(N, A, 3)
    p0 = h3[:, :, 0]                                                # (N, A)
    p1 = h3[:, :, 1]
    v0 = h3[:, :, 2]

    # policy: Linear(2A -> A) on the channel-major flatten, then softmax
    pflat = jnp.concatenate([p0, p1], axis=1)                       # (N, 2A)
    logits = jnp.dot(pflat, wp_ref[...],
                     preferred_element_type=jnp.float32) + bp_ref[...]
    mx = jnp.max(logits, axis=1, keepdims=True)
    e = jnp.exp(logits - mx)
    denom = jnp.sum(e, axis=1, keepdims=True)
    policy_ref[...] = e * pl.reciprocal(denom, approx=True)         # EUP slot

    # value: Linear(A -> 1) + tanh
    val = jnp.dot(v0, wv_ref[...], preferred_element_type=jnp.float32) \
        + bv_ref[...]
    value_ref[...] = jnp.tanh(val)


# ----------------------------------------------------------------------------
# One-time parameter preparation (hoisted weight re-layouts)
# ----------------------------------------------------------------------------
def prepare_params(params):
    C, A = CONV_UNITS, ACTION_SIZE

    def conv_taps(w_pt):  # PyTorch (Cout, Cin, 3, 3) -> (9*Cin, Cout)
        co, ci, _, _ = w_pt.shape
        return jnp.transpose(w_pt, (2, 3, 1, 0)).reshape(9 * ci, co)

    wh = jnp.concatenate([params["pconv_w"].reshape(2, C),
                          params["vconv_w"].reshape(1, C)], axis=0).T  # (C, 3)
    bh = jnp.concatenate([params["pconv_b"],
                          params["vconv_b"]]).reshape(1, 3)
    return {
        "w1": conv_taps(params["conv1_w"]),          # (36, C)
        "w2": conv_taps(params["conv2_w"]),          # (288, C)
        "gamma": params["bn_gamma"].reshape(1, C),
        "beta": params["bn_beta"].reshape(1, C),
        "wh": wh, "bh": bh,
        "wp": params["plin_w"].T,                    # (2A, A), channel-major K
        "bp": params["plin_b"].reshape(1, A),
        "wv": params["vlin_w"].T,                    # (A, 1)
        "bv": params["vlin_b"].reshape(1, 1),
    }


# ----------------------------------------------------------------------------
# Forward pass: single fused pallas_call
# ----------------------------------------------------------------------------
@jax.jit
def net_forward(x_nchw, prep):
    N, Cin, H, W = x_nchw.shape
    C, A = CONV_UNITS, H * W
    x = jnp.transpose(x_nchw, (0, 2, 3, 1)).astype(jnp.float32)   # NCHW->NHWC

    # Grid-less fused call: whole working set (<250 KiB) lives in VMEM, far
    # under the scoped default on v5e/v6e/v7x, so no vmem_limit/Buffered
    # tuning is needed.  On v7x this uses one TensorCore; add a batch grid
    # axis with dimension_semantics=("parallel",) once batch outgrows toy size.
    policy, value = pl.pallas_call(
        net_kernel,
        out_shape=(jax.ShapeDtypeStruct((N, A), jnp.float32),
                   jax.ShapeDtypeStruct((N, 1), jnp.float32)),
        in_specs=[VMEM_SPEC] * 11,
        out_specs=(VMEM_SPEC, VMEM_SPEC),
        scratch_shapes=[
            pltpu.VMEM((N, H + 2, W + 2, Cin), jnp.float32),   # pad1 (conv1 in)
            pltpu.VMEM((N, H + 2, W + 2, C), jnp.float32),     # pad2 (conv2 in)
            pltpu.VMEM((N, H + 2, W + 2, C), jnp.float32),     # pad3 (pool in)
            pltpu.VMEM((N * H * W, 9 * Cin), jnp.float32),     # im2col conv1
            pltpu.VMEM((N * H * W, 9 * C), jnp.float32),       # im2col conv2
        ],
    )(x, prep["w1"], prep["w2"], prep["gamma"], prep["beta"],
      prep["wh"], prep["bh"], prep["wp"], prep["bp"],
      prep["wv"], prep["bv"])
    return policy, value


# ----------------------------------------------------------------------------
# Deterministic synthetic parameters
# ----------------------------------------------------------------------------
def init_params(key):
    ks = jax.random.split(key, 12)
    n = lambda k, s: 0.1 * jax.random.normal(k, s, jnp.float32)
    return {
        "conv1_w": n(ks[0], (CONV_UNITS, STATE_DIM, 3, 3)),
        "conv2_w": n(ks[1], (CONV_UNITS, CONV_UNITS, 3, 3)),
        "bn_gamma": 1.0 + n(ks[2], (CONV_UNITS,)),
        "bn_beta": n(ks[3], (CONV_UNITS,)),
        "pconv_w": n(ks[4], (2, CONV_UNITS, 1, 1)),
        "pconv_b": n(ks[5], (2,)),
        "plin_w": n(ks[6], (ACTION_SIZE, 2 * ACTION_SIZE)),
        "plin_b": n(ks[7], (ACTION_SIZE,)),
        "vconv_w": n(ks[8], (1, CONV_UNITS, 1, 1)),
        "vconv_b": n(ks[9], (1,)),
        "vlin_w": n(ks[10], (1, ACTION_SIZE)),
        "vlin_b": n(ks[11], (1,)),
    }


if __name__ == "__main__":
    key = jax.random.PRNGKey(0)
    k_params, k_x = jax.random.split(key)
    params = init_params(k_params)
    prep = prepare_params(params)     # one-time weight re-layout (hoisted)
    x = jax.random.normal(k_x, (BATCH, STATE_DIM, BOARD, BOARD), jnp.float32)

    policy, value = net_forward(x, prep)
    jax.block_until_ready((policy, value))

    assert policy.shape == (BATCH, ACTION_SIZE)
    assert value.shape == (BATCH, 1)
    # softmax rows sum to 1 (tolerance relaxed for approx-reciprocal ~1e-3),
    # tanh output in [-1, 1]
    assert bool(jnp.all(jnp.abs(jnp.sum(policy, axis=1) - 1.0) < 1e-2))
    assert bool(jnp.all(jnp.abs(value) <= 1.0))
    print("KERNEL_OK")
</pallas_src>

<mosaic_0001>
module attributes {stable_mosaic.version = 11 : i64} {
  func.func @net_kernel(%arg0: memref<2x8x8x4xf32, #tpu.memory_space<vmem>>, %arg1: memref<36x32xf32, #tpu.memory_space<vmem>>, %arg2: memref<288x32xf32, #tpu.memory_space<vmem>>, %arg3: memref<1x32xf32, #tpu.memory_space<vmem>>, %arg4: memref<1x32xf32, #tpu.memory_space<vmem>>, %arg5: memref<32x3xf32, #tpu.memory_space<vmem>>, %arg6: memref<1x3xf32, #tpu.memory_space<vmem>>, %arg7: memref<128x64xf32, #tpu.memory_space<vmem>>, %arg8: memref<1x64xf32, #tpu.memory_space<vmem>>, %arg9: memref<64x1xf32, #tpu.memory_space<vmem>>, %arg10: memref<1x1xf32, #tpu.memory_space<vmem>>, %arg11: memref<2x64xf32, #tpu.memory_space<vmem>>, %arg12: memref<2x1xf32, #tpu.memory_space<vmem>>, %arg13: memref<2x10x10x4xf32, #tpu.memory_space<vmem>>, %arg14: memref<2x10x10x32xf32, #tpu.memory_space<vmem>>, %arg15: memref<2x10x10x32xf32, #tpu.memory_space<vmem>>, %arg16: memref<128x36xf32, #tpu.memory_space<vmem>>, %arg17: memref<128x288xf32, #tpu.memory_space<vmem>>) attributes {dimension_semantics = [], scalar_prefetch = 0 : i64, scratch_operands = 5 : i64, tpu.core_type = #tpu.core_type<tc>} {
    %cst = arith.constant 0.000000e+00 : f32
    %0 = vector.broadcast %cst : f32 to vector<2x10x10x4xf32>
    %c0 = arith.constant 0 : index
    %c0_0 = arith.constant 0 : index
    %c0_1 = arith.constant 0 : index
    %c0_2 = arith.constant 0 : index
    %1 = vector.load %arg13[%c0, %c0_0, %c0_1, %c0_2] : memref<2x10x10x4xf32, #tpu.memory_space<vmem>>, vector<2x10x10x4xf32>
    tpu.vector_store %arg13[%c0, %c0_0, %c0_1, %c0_2], %0 {strides = array<i32>} : memref<2x10x10x4xf32, #tpu.memory_space<vmem>>, vector<2x10x10x4xf32>,
    %c0_3 = arith.constant 0 : index
    %c0_4 = arith.constant 0 : index
    %c0_5 = arith.constant 0 : index
    %c0_6 = arith.constant 0 : index
    %2 = vector.load %arg0[%c0_3, %c0_4, %c0_5, %c0_6] : memref<2x8x8x4xf32, #tpu.memory_space<vmem>>, vector<2x8x8x4xf32>
    %c0_7 = arith.constant 0 : index
    %c1 = arith.constant 1 : index
    %c1_8 = arith.constant 1 : index
    %c0_9 = arith.constant 0 : index
    %3 = vector.load %arg13[%c0_7, %c1, %c1_8, %c0_9] : memref<2x10x10x4xf32, #tpu.memory_space<vmem>>, vector<2x8x8x4xf32>
    tpu.vector_store %arg13[%c0_7, %c1, %c1_8, %c0_9], %2 {strides = array<i32>} : memref<2x10x10x4xf32, #tpu.memory_space<vmem>>, vector<2x8x8x4xf32>,
    %c0_10 = arith.constant 0 : index
    %c0_11 = arith.constant 0 : index
    %c0_12 = arith.constant 0 : index
    %c0_13 = arith.constant 0 : index
    %4 = vector.load %arg13[%c0_10, %c0_11, %c0_12, %c0_13] : memref<2x10x10x4xf32, #tpu.memory_space<vmem>>, vector<2x8x8x4xf32>
    %5 = vector.shape_cast %4 : vector<2x8x8x4xf32> to vector<128x4xf32>
    %c0_14 = arith.constant 0 : index
    %c0_15 = arith.constant 0 : index
    %6 = vector.load %arg16[%c0_14, %c0_15] : memref<128x36xf32, #tpu.memory_space<vmem>>, vector<128x4xf32>
    tpu.vector_store %arg16[%c0_14, %c0_15], %5 {strides = array<i32>} : memref<128x36xf32, #tpu.memory_space<vmem>>, vector<128x4xf32>,
    %c0_16 = arith.constant 0 : index
    %c0_17 = arith.constant 0 : index
    %c1_18 = arith.constant 1 : index
    %c0_19 = arith.constant 0 : index
    %7 = vector.load %arg13[%c0_16, %c0_17, %c1_18, %c0_19] : memref<2x10x10x4xf32, #tpu.memory_space<vmem>>, vector<2x8x8x4xf32>
    %8 = vector.shape_cast %7 : vector<2x8x8x4xf32> to vector<128x4xf32>
    %c0_20 = arith.constant 0 : index
    %c4 = arith.constant 4 : index
    %9 = vector.load %arg16[%c0_20, %c4] : memref<128x36xf32, #tpu.memory_space<vmem>>, vector<128x4xf32>
    tpu.vector_store %arg16[%c0_20, %c4], %8 {strides = array<i32>} : memref<128x36xf32, #tpu.memory_space<vmem>>, vector<128x4xf32>,
    %c0_21 = arith.constant 0 : index
    %c0_22 = arith.constant 0 : index
    %c2 = arith.constant 2 : index
    %c0_23 = arith.constant 0 : index
    %10 = vector.load %arg13[%c0_21, %c0_22, %c2, %c0_23] : memref<2x10x10x4xf32, #tpu.memory_space<vmem>>, vector<2x8x8x4xf32>
    %11 = vector.shape_cast %10 : vector<2x8x8x4xf32> to vector<128x4xf32>
    %c0_24 = arith.constant 0 : index
    %c8 = arith.constant 8 : index
    %12 = vector.load %arg16[%c0_24, %c8] : memref<128x36xf32, #tpu.memory_space<vmem>>, vector<128x4xf32>
    tpu.vector_store %arg16[%c0_24, %c8], %11 {strides = array<i32>} : memref<128x36xf32, #tpu.memory_space<vmem>>, vector<128x4xf32>,
    %c0_25 = arith.constant 0 : index
    %c1_26 = arith.constant 1 : index
    %c0_27 = arith.constant 0 : index
    %c0_28 = arith.constant 0 : index
    %13 = vector.load %arg13[%c0_25, %c1_26, %c0_27, %c0_28] : memref<2x10x10x4xf32, #tpu.memory_space<vmem>>, vector<2x8x8x4xf32>
    %14 = vector.shape_cast %13 : vector<2x8x8x4xf32> to vector<128x4xf32>
    %c0_29 = arith.constant 0 : index
    %c12 = arith.constant 12 : index
    %15 = vector.load %arg16[%c0_29, %c12] : memref<128x36xf32, #tpu.memory_space<vmem>>, vector<128x4xf32>
    tpu.vector_store %arg16[%c0_29, %c12], %14 {strides = array<i32>} : memref<128x36xf32, #tpu.memory_space<vmem>>, vector<128x4xf32>,
    %c0_30 = arith.constant 0 : index
    %c1_31 = arith.constant 1 : index
    %c1_32 = arith.constant 1 : index
    %c0_33 = arith.constant 0 : index
    %16 = vector.load %arg13[%c0_30, %c1_31, %c1_32, %c0_33] : memref<2x10x10x4xf32, #tpu.memory_space<vmem>>, vector<2x8x8x4xf32>
    %17 = vector.shape_cast %16 : vector<2x8x8x4xf32> to vector<128x4xf32>
    %c0_34 = arith.constant 0 : index
    %c16 = arith.constant 16 : index
    %18 = vector.load %arg16[%c0_34, %c16] : memref<128x36xf32, #tpu.memory_space<vmem>>, vector<128x4xf32>
    tpu.vector_store %arg16[%c0_34, %c16], %17 {strides = array<i32>} : memref<128x36xf32, #tpu.memory_space<vmem>>, vector<128x4xf32>,
    %c0_35 = arith.constant 0 : index
    %c1_36 = arith.constant 1 : index
    %c2_37 = arith.constant 2 : index
    %c0_38 = arith.constant 0 : index
    %19 = vector.load %arg13[%c0_35, %c1_36, %c2_37, %c0_38] : memref<2x10x10x4xf32, #tpu.memory_space<vmem>>, vector<2x8x8x4xf32>
    %20 = vector.shape_cast %19 : vector<2x8x8x4xf32> to vector<128x4xf32>
    %c0_39 = arith.constant 0 : index
    %c20 = arith.constant 20 : index
    %21 = vector.load %arg16[%c0_39, %c20] : memref<128x36xf32, #tpu.memory_space<vmem>>, vector<128x4xf32>
    tpu.vector_store %arg16[%c0_39, %c20], %20 {strides = array<i32>} : memref<128x36xf32, #tpu.memory_space<vmem>>, vector<128x4xf32>,
    %c0_40 = arith.constant 0 : index
    %c2_41 = arith.constant 2 : index
    %c0_42 = arith.constant 0 : index
    %c0_43 = arith.constant 0 : index
    %22 = vector.load %arg13[%c0_40, %c2_41, %c0_42, %c0_43] : memref<2x10x10x4xf32, #tpu.memory_space<vmem>>, vector<2x8x8x4xf32>
    %23 = vector.shape_cast %22 : vector<2x8x8x4xf32> to vector<128x4xf32>
    %c0_44 = arith.constant 0 : index
    %c24 = arith.constant 24 : index
    %24 = vector.load %arg16[%c0_44, %c24] : memref<128x36xf32, #tpu.memory_space<vmem>>, vector<128x4xf32>
    tpu.vector_store %arg16[%c0_44, %c24], %23 {strides = array<i32>} : memref<128x36xf32, #tpu.memory_space<vmem>>, vector<128x4xf32>,
    %c0_45 = arith.constant 0 : index
    %c2_46 = arith.constant 2 : index
    %c1_47 = arith.constant 1 : index
    %c0_48 = arith.constant 0 : index
    %25 = vector.load %arg13[%c0_45, %c2_46, %c1_47, %c0_48] : memref<2x10x10x4xf32, #tpu.memory_space<vmem>>, vector<2x8x8x4xf32>
    %26 = vector.shape_cast %25 : vector<2x8x8x4xf32> to vector<128x4xf32>
    %c0_49 = arith.constant 0 : index
    %c28 = arith.constant 28 : index
    %27 = vector.load %arg16[%c0_49, %c28] : memref<128x36xf32, #tpu.memory_space<vmem>>, vector<128x4xf32>
    tpu.vector_store %arg16[%c0_49, %c28], %26 {strides = array<i32>} : memref<128x36xf32, #tpu.memory_space<vmem>>, vector<128x4xf32>,
    %c0_50 = arith.constant 0 : index
    %c2_51 = arith.constant 2 : index
    %c2_52 = arith.constant 2 : index
    %c0_53 = arith.constant 0 : index
    %28 = vector.load %arg13[%c0_50, %c2_51, %c2_52, %c0_53] : memref<2x10x10x4xf32, #tpu.memory_space<vmem>>, vector<2x8x8x4xf32>
    %29 = vector.shape_cast %28 : vector<2x8x8x4xf32> to vector<128x4xf32>
    %c0_54 = arith.constant 0 : index
    %c32 = arith.constant 32 : index
    %30 = vector.load %arg16[%c0_54, %c32] : memref<128x36xf32, #tpu.memory_space<vmem>>, vector<128x4xf32>
    tpu.vector_store %arg16[%c0_54, %c32], %29 {strides = array<i32>} : memref<128x36xf32, #tpu.memory_space<vmem>>, vector<128x4xf32>,
    %c0_55 = arith.constant 0 : index
    %c0_56 = arith.constant 0 : index
    %31 = vector.load %arg16[%c0_55, %c0_56] : memref<128x36xf32, #tpu.memory_space<vmem>>, vector<128x36xf32>
    %c0_57 = arith.constant 0 : index
    %c0_58 = arith.constant 0 : index
    %32 = vector.load %arg1[%c0_57, %c0_58] : memref<36x32xf32, #tpu.memory_space<vmem>>, vector<36x32xf32>
    %cst_59 = arith.constant dense<0.000000e+00> : vector<128x32xf32>
    %33 = tpu.matmul %31, %32, %cst_59 {dimension_numbers = #tpu.dot_dimension_numbers<[1], [0], [0], [1], [0, 0, 1, 1], [], []>} : vector<128x36xf32>, vector<36x32xf32>, vector<128x32xf32> -> vector<128x32xf32>
    %cst_60 = arith.constant dense<0.000000e+00> : vector<32xf32>
    %34 = vector.multi_reduction <add>, %33, %cst_60 [0] : vector<128x32xf32> to vector<32xf32>
    %35 = vector.shape_cast %34 : vector<32xf32> to vector<1x32xf32>
    %cst_61 = arith.constant 1.280000e+02 : f32
    %36 = vector.broadcast %cst_61 : f32 to vector<1x32xf32>
    %37 = arith.divf %35, %36 : vector<1x32xf32>
    %38 = vector.broadcast %37 : vector<1x32xf32> to vector<128x32xf32>
    %39 = arith.subf %33, %38 : vector<128x32xf32>
    %40 = arith.mulf %39, %39 : vector<128x32xf32>
    %cst_62 = arith.constant dense<0.000000e+00> : vector<32xf32>
    %41 = vector.multi_reduction <add>, %40, %cst_62 [0] : vector<128x32xf32> to vector<32xf32>
    %42 = vector.shape_cast %41 : vector<32xf32> to vector<1x32xf32>
    %cst_63 = arith.constant 1.280000e+02 : f32
    %43 = vector.broadcast %cst_63 : f32 to vector<1x32xf32>
    %44 = arith.divf %42, %43 : vector<1x32xf32>
    %45 = vector.broadcast %37 : vector<1x32xf32> to vector<128x32xf32>
    %46 = arith.subf %33, %45 : vector<128x32xf32>
    %cst_64 = arith.constant 9.99999974E-6 : f32
    %47 = vector.broadcast %cst_64 : f32 to vector<1x32xf32>
    %48 = arith.addf %44, %47 : vector<1x32xf32>
    %49 = math.rsqrt %48 : vector<1x32xf32>
    %50 = vector.broadcast %49 : vector<1x32xf32> to vector<128x32xf32>
    %51 = arith.mulf %46, %50 : vector<128x32xf32>
    %c0_65 = arith.constant 0 : index
    %c0_66 = arith.constant 0 : index
    %52 = vector.load %arg3[%c0_65, %c0_66] : memref<1x32xf32, #tpu.memory_space<vmem>>, vector<1x32xf32>
    %53 = vector.broadcast %52 : vector<1x32xf32> to vector<128x32xf32>
    %54 = arith.mulf %51, %53 : vector<128x32xf32>
    %c0_67 = arith.constant 0 : index
    %c0_68 = arith.constant 0 : index
    %55 = vector.load %arg4[%c0_67, %c0_68] : memref<1x32xf32, #tpu.memory_space<vmem>>, vector<1x32xf32>
    %56 = vector.broadcast %55 : vector<1x32xf32> to vector<128x32xf32>
    %57 = arith.addf %54, %56 : vector<128x32xf32>
    %cst_69 = arith.constant 0.000000e+00 : f32
    %58 = vector.broadcast %cst_69 : f32 to vector<128x32xf32>
    %59 = arith.maximumf %57, %58 : vector<128x32xf32>
    %cst_70 = arith.constant 0.000000e+00 : f32
    %60 = vector.broadcast %cst_70 : f32 to vector<2x10x10x32xf32>
    %c0_71 = arith.constant 0 : index
    %c0_72 = arith.constant 0 : index
    %c0_73 = arith.constant 0 : index
    %c0_74 = arith.constant 0 : index
    %61 = vector.load %arg14[%c0_71, %c0_72, %c0_73, %c0_74] : memref<2x10x10x32xf32, #tpu.memory_space<vmem>>, vector<2x10x10x32xf32>
    tpu.vector_store %arg14[%c0_71, %c0_72, %c0_73, %c0_74], %60 {strides = array<i32>} : memref<2x10x10x32xf32, #tpu.memory_space<vmem>>, vector<2x10x10x32xf32>,
    %62 = vector.shape_cast %59 : vector<128x32xf32> to vector<2x8x8x32xf32>
    %c0_75 = arith.constant 0 : index
    %c1_76 = arith.constant 1 : index
    %c1_77 = arith.constant 1 : index
    %c0_78 = arith.constant 0 : index
    %63 = vector.load %arg14[%c0_75, %c1_76, %c1_77, %c0_78] : memref<2x10x10x32xf32, #tpu.memory_space<vmem>>, vector<2x8x8x32xf32>
    tpu.vector_store %arg14[%c0_75, %c1_76, %c1_77, %c0_78], %62 {strides = array<i32>} : memref<2x10x10x32xf32, #tpu.memory_space<vmem>>, vector<2x8x8x32xf32>,
    %c0_79 = arith.constant 0 : index
    %c0_80 = arith.constant 0 : index
    %c0_81 = arith.constant 0 : index
    %c0_82 = arith.constant 0 : index
    %64 = vector.load %arg14[%c0_79, %c0_80, %c0_81, %c0_82] : memref<2x10x10x32xf32, #tpu.memory_space<vmem>>, vector<2x8x8x32xf32>
    %65 = vector.shape_cast %64 : vector<2x8x8x32xf32> to vector<128x32xf32>
    %c0_83 = arith.constant 0 : index
    %c0_84 = arith.constant 0 : index
    %66 = vector.load %arg17[%c0_83, %c0_84] : memref<128x288xf32, #tpu.memory_space<vmem>>, vector<128x32xf32>
    tpu.vector_store %arg17[%c0_83, %c0_84], %65 {strides = array<i32>} : memref<128x288xf32, #tpu.memory_space<vmem>>, vector<128x32xf32>,
    %c0_85 = arith.constant 0 : index
    %c0_86 = arith.constant 0 : index
    %c1_87 = arith.constant 1 : index
    %c0_88 = arith.constant 0 : index
    %67 = vector.load %arg14[%c0_85, %c0_86, %c1_87, %c0_88] : memref<2x10x10x32xf32, #tpu.memory_space<vmem>>, vector<2x8x8x32xf32>
    %68 = vector.shape_cast %67 : vector<2x8x8x32xf32> to vector<128x32xf32>
    %c0_89 = arith.constant 0 : index
    %c32_90 = arith.constant 32 : index
    %69 = vector.load %arg17[%c0_89, %c32_90] : memref<128x288xf32, #tpu.memory_space<vmem>>, vector<128x32xf32>
    tpu.vector_store %arg17[%c0_89, %c32_90], %68 {strides = array<i32>} : memref<128x288xf32, #tpu.memory_space<vmem>>, vector<128x32xf32>,
    %c0_91 = arith.constant 0 : index
    %c0_92 = arith.constant 0 : index
    %c2_93 = arith.constant 2 : index
    %c0_94 = arith.constant 0 : index
    %70 = vector.load %arg14[%c0_91, %c0_92, %c2_93, %c0_94] : memref<2x10x10x32xf32, #tpu.memory_space<vmem>>, vector<2x8x8x32xf32>
    %71 = vector.shape_cast %70 : vector<2x8x8x32xf32> to vector<128x32xf32>
    %c0_95 = arith.constant 0 : index
    %c64 = arith.constant 64 : index
    %72 = vector.load %arg17[%c0_95, %c64] : memref<128x288xf32, #tpu.memory_space<vmem>>, vector<128x32xf32>
    tpu.vector_store %arg17[%c0_95, %c64], %71 {strides = array<i32>} : memref<128x288xf32, #tpu.memory_space<vmem>>, vector<128x32xf32>,
    %c0_96 = arith.constant 0 : index
    %c1_97 = arith.constant 1 : index
    %c0_98 = arith.constant 0 : index
    %c0_99 = arith.constant 0 : index
    %73 = vector.load %arg14[%c0_96, %c1_97, %c0_98, %c0_99] : memref<2x10x10x32xf32, #tpu.memory_space<vmem>>, vector<2x8x8x32xf32>
    %74 = vector.shape_cast %73 : vector<2x8x8x32xf32> to vector<128x32xf32>
    %c0_100 = arith.constant 0 : index
    %c96 = arith.constant 96 : index
    %75 = vector.load %arg17[%c0_100, %c96] : memref<128x288xf32, #tpu.memory_space<vmem>>, vector<128x32xf32>
    tpu.vector_store %arg17[%c0_100, %c96], %74 {strides = array<i32>} : memref<128x288xf32, #tpu.memory_space<vmem>>, vector<128x32xf32>,
    %c0_101 = arith.constant 0 : index
    %c1_102 = arith.constant 1 : index
    %c1_103 = arith.constant 1 : index
    %c0_104 = arith.constant 0 : index
    %76 = vector.load %arg14[%c0_101, %c1_102, %c1_103, %c0_104] : memref<2x10x10x32xf32, #tpu.memory_space<vmem>>, vector<2x8x8x32xf32>
    %77 = vector.shape_cast %76 : vector<2x8x8x32xf32> to vector<128x32xf32>
    %c0_105 = arith.constant 0 : index
    %c128 = arith.constant 128 : index
    %78 = vector.load %arg17[%c0_105, %c128] : memref<128x288xf32, #tpu.memory_space<vmem>>, vector<128x32xf32>
    tpu.vector_store %arg17[%c0_105, %c128], %77 {strides = array<i32>} : memref<128x288xf32, #tpu.memory_space<vmem>>, vector<128x32xf32>,
    %c0_106 = arith.constant 0 : index
    %c1_107 = arith.constant 1 : index
    %c2_108 = arith.constant 2 : index
    %c0_109 = arith.constant 0 : index
    %79 = vector.load %arg14[%c0_106, %c1_107, %c2_108, %c0_109] : memref<2x10x10x32xf32, #tpu.memory_space<vmem>>, vector<2x8x8x32xf32>
    %80 = vector.shape_cast %79 : vector<2x8x8x32xf32> to vector<128x32xf32>
    %c0_110 = arith.constant 0 : index
    %c160 = arith.constant 160 : index
    %81 = vector.load %arg17[%c0_110, %c160] : memref<128x288xf32, #tpu.memory_space<vmem>>, vector<128x32xf32>
    tpu.vector_store %arg17[%c0_110, %c160], %80 {strides = array<i32>} : memref<128x288xf32, #tpu.memory_space<vmem>>, vector<128x32xf32>,
    %c0_111 = arith.constant 0 : index
    %c2_112 = arith.constant 2 : index
    %c0_113 = arith.constant 0 : index
    %c0_114 = arith.constant 0 : index
    %82 = vector.load %arg14[%c0_111, %c2_112, %c0_113, %c0_114] : memref<2x10x10x32xf32, #tpu.memory_space<vmem>>, vector<2x8x8x32xf32>
    %83 = vector.shape_cast %82 : vector<2x8x8x32xf32> to vector<128x32xf32>
    %c0_115 = arith.constant 0 : index
    %c192 = arith.constant 192 : index
    %84 = vector.load %arg17[%c0_115, %c192] : memref<128x288xf32, #tpu.memory_space<vmem>>, vector<128x32xf32>
    tpu.vector_store %arg17[%c0_115, %c192], %83 {strides = array<i32>} : memref<128x288xf32, #tpu.memory_space<vmem>>, vector<128x32xf32>,
    %c0_116 = arith.constant 0 : index
    %c2_117 = arith.constant 2 : index
    %c1_118 = arith.constant 1 : index
    %c0_119 = arith.constant 0 : index
    %85 = vector.load %arg14[%c0_116, %c2_117, %c1_118, %c0_119] : memref<2x10x10x32xf32, #tpu.memory_space<vmem>>, vector<2x8x8x32xf32>
    %86 = vector.shape_cast %85 : vector<2x8x8x32xf32> to vector<128x32xf32>
    %c0_120 = arith.constant 0 : index
    %c224 = arith.constant 224 : index
    %87 = vector.load %arg17[%c0_120, %c224] : memref<128x288xf32, #tpu.memory_space<vmem>>, vector<128x32xf32>
    tpu.vector_store %arg17[%c0_120, %c224], %86 {strides = array<i32>} : memref<128x288xf32, #tpu.memory_space<vmem>>, vector<128x32xf32>,
    %c0_121 = arith.constant 0 : index
    %c2_122 = arith.constant 2 : index
    %c2_123 = arith.constant 2 : index
    %c0_124 = arith.constant 0 : index
    %88 = vector.load %arg14[%c0_121, %c2_122, %c2_123, %c0_124] : memref<2x10x10x32xf32, #tpu.memory_space<vmem>>, vector<2x8x8x32xf32>
    %89 = vector.shape_cast %88 : vector<2x8x8x32xf32> to vector<128x32xf32>
    %c0_125 = arith.constant 0 : index
    %c256 = arith.constant 256 : index
    %90 = vector.load %arg17[%c0_125, %c256] : memref<128x288xf32, #tpu.memory_space<vmem>>, vector<128x32xf32>
    tpu.vector_store %arg17[%c0_125, %c256], %89 {strides = array<i32>} : memref<128x288xf32, #tpu.memory_space<vmem>>, vector<128x32xf32>,
    %c0_126 = arith.constant 0 : index
    %c0_127 = arith.constant 0 : index
    %91 = vector.load %arg17[%c0_126, %c0_127] : memref<128x288xf32, #tpu.memory_space<vmem>>, vector<128x288xf32>
    %c0_128 = arith.constant 0 : index
    %c0_129 = arith.constant 0 : index
    %92 = vector.load %arg2[%c0_128, %c0_129] : memref<288x32xf32, #tpu.memory_space<vmem>>, vector<288x32xf32>
    %cst_130 = arith.constant dense<0.000000e+00> : vector<128x32xf32>
    %93 = tpu.matmul %91, %92, %cst_130 {dimension_numbers = #tpu.dot_dimension_numbers<[1], [0], [0], [1], [0, 0, 1, 1], [], []>} : vector<128x288xf32>, vector<288x32xf32>, vector<128x32xf32> -> vector<128x32xf32>
    %cst_131 = arith.constant dense<0.000000e+00> : vector<32xf32>
    %94 = vector.multi_reduction <add>, %93, %cst_131 [0] : vector<128x32xf32> to vector<32xf32>
    %95 = vector.shape_cast %94 : vector<32xf32> to vector<1x32xf32>
    %cst_132 = arith.constant 1.280000e+02 : f32
    %96 = vector.broadcast %cst_132 : f32 to vector<1x32xf32>
    %97 = arith.divf %95, %96 : vector<1x32xf32>
    %98 = vector.broadcast %97 : vector<1x32xf32> to vector<128x32xf32>
    %99 = arith.subf %93, %98 : vector<128x32xf32>
    %100 = arith.mulf %99, %99 : vector<128x32xf32>
    %cst_133 = arith.constant dense<0.000000e+00> : vector<32xf32>
    %101 = vector.multi_reduction <add>, %100, %cst_133 [0] : vector<128x32xf32> to vector<32xf32>
    %102 = vector.shape_cast %101 : vector<32xf32> to vector<1x32xf32>
    %cst_134 = arith.constant 1.280000e+02 : f32
    %103 = vector.broadcast %cst_134 : f32 to vector<1x32xf32>
    %104 = arith.divf %102, %103 : vector<1x32xf32>
    %105 = vector.broadcast %97 : vector<1x32xf32> to vector<128x32xf32>
    %106 = arith.subf %93, %105 : vector<128x32xf32>
    %cst_135 = arith.constant 9.99999974E-6 : f32
    %107 = vector.broadcast %cst_135 : f32 to vector<1x32xf32>
    %108 = arith.addf %104, %107 : vector<1x32xf32>
    %109 = math.rsqrt %108 : vector<1x32xf32>
    %110 = vector.broadcast %109 : vector<1x32xf32> to vector<128x32xf32>
    %111 = arith.mulf %106, %110 : vector<128x32xf32>
    %c0_136 = arith.constant 0 : index
    %c0_137 = arith.constant 0 : index
    %112 = vector.load %arg3[%c0_136, %c0_137] : memref<1x32xf32, #tpu.memory_space<vmem>>, vector<1x32xf32>
    %113 = vector.broadcast %112 : vector<1x32xf32> to vector<128x32xf32>
    %114 = arith.mulf %111, %113 : vector<128x32xf32>
    %c0_138 = arith.constant 0 : index
    %c0_139 = arith.constant 0 : index
    %115 = vector.load %arg4[%c0_138, %c0_139] : memref<1x32xf32, #tpu.memory_space<vmem>>, vector<1x32xf32>
    %116 = vector.broadcast %115 : vector<1x32xf32> to vector<128x32xf32>
    %117 = arith.addf %114, %116 : vector<128x32xf32>
    %cst_140 = arith.constant 0.000000e+00 : f32
    %118 = vector.broadcast %cst_140 : f32 to vector<128x32xf32>
    %119 = arith.maximumf %117, %118 : vector<128x32xf32>
    %cst_141 = arith.constant 0xFF800000 : f32
    %120 = vector.broadcast %cst_141 : f32 to vector<2x10x10x32xf32>
    %c0_142 = arith.constant 0 : index
    %c0_143 = arith.constant 0 : index
    %c0_144 = arith.constant 0 : index
    %c0_145 = arith.constant 0 : index
    %121 = vector.load %arg15[%c0_142, %c0_143, %c0_144, %c0_145] : memref<2x10x10x32xf32, #tpu.memory_space<vmem>>, vector<2x10x10x32xf32>
    tpu.vector_store %arg15[%c0_142, %c0_143, %c0_144, %c0_145], %120 {strides = array<i32>} : memref<2x10x10x32xf32, #tpu.memory_space<vmem>>, vector<2x10x10x32xf32>,
    %122 = vector.shape_cast %119 : vector<128x32xf32> to vector<2x8x8x32xf32>
    %c0_146 = arith.constant 0 : index
    %c1_147 = arith.constant 1 : index
    %c1_148 = arith.constant 1 : index
    %c0_149 = arith.constant 0 : index
    %123 = vector.load %arg15[%c0_146, %c1_147, %c1_148, %c0_149] : memref<2x10x10x32xf32, #tpu.memory_space<vmem>>, vector<2x8x8x32xf32>
    tpu.vector_store %arg15[%c0_146, %c1_147, %c1_148, %c0_149], %122 {strides = array<i32>} : memref<2x10x10x32xf32, #tpu.memory_space<vmem>>, vector<2x8x8x32xf32>,
    %c0_150 = arith.constant 0 : index
    %c0_151 = arith.constant 0 : index
    %c0_152 = arith.constant 0 : index
    %c0_153 = arith.constant 0 : index
    %124 = vector.load %arg15[%c0_150, %c0_151, %c0_152, %c0_153] : memref<2x10x10x32xf32, #tpu.memory_space<vmem>>, vector<2x8x8x32xf32>
    %125 = vector.shape_cast %124 : vector<2x8x8x32xf32> to vector<128x32xf32>
    %c0_154 = arith.constant 0 : index
    %c0_155 = arith.constant 0 : index
    %c1_156 = arith.constant 1 : index
    %c0_157 = arith.constant 0 : index
    %126 = vector.load %arg15[%c0_154, %c0_155, %c1_156, %c0_157] : memref<2x10x10x32xf32, #tpu.memory_space<vmem>>, vector<2x8x8x32xf32>
    %127 = vector.shape_cast %126 : vector<2x8x8x32xf32> to vector<128x32xf32>
    %128 = arith.maximumf %125, %127 : vector<128x32xf32>
    %c0_158 = arith.constant 0 : index
    %c0_159 = arith.constant 0 : index
    %c2_160 = arith.constant 2 : index
    %c0_161 = arith.constant 0 : index
    %129 = vector.load %arg15[%c0_158, %c0_159, %c2_160, %c0_161] : memref<2x10x10x32xf32, #tpu.memory_space<vmem>>, vector<2x8x8x32xf32>
    %130 = vector.shape_cast %129 : vector<2x8x8x32xf32> to vector<128x32xf32>
    %131 = arith.maximumf %128, %130 : vector<128x32xf32>
    %c0_162 = arith.constant 0 : index
    %c1_163 = arith.constant 1 : index
    %c0_164 = arith.constant 0 : index
    %c0_165 = arith.constant 0 : index
    %132 = vector.load %arg15[%c0_162, %c1_163, %c0_164, %c0_165] : memref<2x10x10x32xf32, #tpu.memory_space<vmem>>, vector<2x8x8x32xf32>
    %133 = vector.shape_cast %132 : vector<2x8x8x32xf32> to vector<128x32xf32>
    %134 = arith.maximumf %131, %133 : vector<128x32xf32>
    %c0_166 = arith.constant 0 : index
    %c1_167 = arith.constant 1 : index
    %c1_168 = arith.constant 1 : index
    %c0_169 = arith.constant 0 : index
    %135 = vector.load %arg15[%c0_166, %c1_167, %c1_168, %c0_169] : memref<2x10x10x32xf32, #tpu.memory_space<vmem>>, vector<2x8x8x32xf32>
    %136 = vector.shape_cast %135 : vector<2x8x8x32xf32> to vector<128x32xf32>
    %137 = arith.maximumf %134, %136 : vector<128x32xf32>
    %c0_170 = arith.constant 0 : index
    %c1_171 = arith.constant 1 : index
    %c2_172 = arith.constant 2 : index
    %c0_173 = arith.constant 0 : index
    %138 = vector.load %arg15[%c0_170, %c1_171, %c2_172, %c0_173] : memref<2x10x10x32xf32, #tpu.memory_space<vmem>>, vector<2x8x8x32xf32>
    %139 = vector.shape_cast %138 : vector<2x8x8x32xf32> to vector<128x32xf32>
    %140 = arith.maximumf %137, %139 : vector<128x32xf32>
    %c0_174 = arith.constant 0 : index
    %c2_175 = arith.constant 2 : index
    %c0_176 = arith.constant 0 : index
    %c0_177 = arith.constant 0 : index
    %141 = vector.load %arg15[%c0_174, %c2_175, %c0_176, %c0_177] : memref<2x10x10x32xf32, #tpu.memory_space<vmem>>, vector<2x8x8x32xf32>
    %142 = vector.shape_cast %141 : vector<2x8x8x32xf32> to vector<128x32xf32>
    %143 = arith.maximumf %140, %142 : vector<128x32xf32>
    %c0_178 = arith.constant 0 : index
    %c2_179 = arith.constant 2 : index
    %c1_180 = arith.constant 1 : index
    %c0_181 = arith.constant 0 : index
    %144 = vector.load %arg15[%c0_178, %c2_179, %c1_180, %c0_181] : memref<2x10x10x32xf32, #tpu.memory_space<vmem>>, vector<2x8x8x32xf32>
    %145 = vector.shape_cast %144 : vector<2x8x8x32xf32> to vector<128x32xf32>
    %146 = arith.maximumf %143, %145 : vector<128x32xf32>
    %c0_182 = arith.constant 0 : index
    %c2_183 = arith.constant 2 : index
    %c2_184 = arith.constant 2 : index
    %c0_185 = arith.constant 0 : index
    %147 = vector.load %arg15[%c0_182, %c2_183, %c2_184, %c0_185] : memref<2x10x10x32xf32, #tpu.memory_space<vmem>>, vector<2x8x8x32xf32>
    %148 = vector.shape_cast %147 : vector<2x8x8x32xf32> to vector<128x32xf32>
    %149 = arith.maximumf %146, %148 : vector<128x32xf32>
    %c0_186 = arith.constant 0 : index
    %c0_187 = arith.constant 0 : index
    %150 = vector.load %arg5[%c0_186, %c0_187] : memref<32x3xf32, #tpu.memory_space<vmem>>, vector<32x3xf32>
    %cst_188 = arith.constant dense<0.000000e+00> : vector<128x3xf32>
    %151 = tpu.matmul %149, %150, %cst_188 {dimension_numbers = #tpu.dot_dimension_numbers<[1], [0], [0], [1], [0, 0, 1, 1], [], []>} : vector<128x32xf32>, vector<32x3xf32>, vector<128x3xf32> -> vector<128x3xf32>
    %c0_189 = arith.constant 0 : index
    %c0_190 = arith.constant 0 : index
    %152 = vector.load %arg6[%c0_189, %c0_190] : memref<1x3xf32, #tpu.memory_space<vmem>>, vector<1x3xf32>
    %153 = vector.broadcast %152 : vector<1x3xf32> to vector<128x3xf32>
    %154 = arith.addf %151, %153 : vector<128x3xf32>
    %cst_191 = arith.constant 0.000000e+00 : f32
    %155 = vector.broadcast %cst_191 : f32 to vector<128x3xf32>
    %156 = arith.maximumf %154, %155 : vector<128x3xf32>
    %157 = vector.shape_cast %156 : vector<128x3xf32> to vector<2x64x3xf32>
    %158 = vector.extract_strided_slice %157 {offsets = [0, 0, 0], sizes = [2, 64, 1], strides = [1, 1, 1]} : vector<2x64x3xf32> to vector<2x64x1xf32>
    %159 = vector.shape_cast %158 : vector<2x64x1xf32> to vector<2x64xf32>
    %160 = vector.extract_strided_slice %157 {offsets = [0, 0, 1], sizes = [2, 64, 1], strides = [1, 1, 1]} : vector<2x64x3xf32> to vector<2x64x1xf32>
    %161 = vector.shape_cast %160 : vector<2x64x1xf32> to vector<2x64xf32>
    %162 = vector.extract_strided_slice %157 {offsets = [0, 0, 2], sizes = [2, 64, 1], strides = [1, 1, 1]} : vector<2x64x3xf32> to vector<2x64x1xf32>
    %163 = vector.shape_cast %162 : vector<2x64x1xf32> to vector<2x64xf32>
    %164 = tpu.concatenate %159, %161 in 1 : vector<2x64xf32>, vector<2x64xf32> -> vector<2x128xf32>
    %c0_192 = arith.constant 0 : index
    %c0_193 = arith.constant 0 : index
    %165 = vector.load %arg7[%c0_192, %c0_193] : memref<128x64xf32, #tpu.memory_space<vmem>>, vector<128x64xf32>
    %cst_194 = arith.constant dense<0.000000e+00> : vector<2x64xf32>
    %166 = tpu.matmul %164, %165, %cst_194 {dimension_numbers = #tpu.dot_dimension_numbers<[1], [0], [0], [1], [0, 0, 1, 1], [], []>} : vector<2x128xf32>, vector<128x64xf32>, vector<2x64xf32> -> vector<2x64xf32>
    %c0_195 = arith.constant 0 : index
    %c0_196 = arith.constant 0 : index
    %167 = vector.load %arg8[%c0_195, %c0_196] : memref<1x64xf32, #tpu.memory_space<vmem>>, vector<1x64xf32>
    %168 = vector.broadcast %167 : vector<1x64xf32> to vector<2x64xf32>
    %169 = arith.addf %166, %168 : vector<2x64xf32>
    %cst_197 = arith.constant dense<0xFF800000> : vector<2xf32>
    %170 = vector.multi_reduction <maximumf>, %169, %cst_197 [1] : vector<2x64xf32> to vector<2xf32>
    %171 = vector.shape_cast %170 : vector<2xf32> to vector<2x1xf32>
    %172 = vector.broadcast %171 : vector<2x1xf32> to vector<2x64xf32>
    %173 = arith.subf %169, %172 : vector<2x64xf32>
    %174 = math.exp %173 : vector<2x64xf32>
    %cst_198 = arith.constant dense<0.000000e+00> : vector<2xf32>
    %175 = vector.multi_reduction <add>, %174, %cst_198 [1] : vector<2x64xf32> to vector<2xf32>
    %176 = vector.shape_cast %175 : vector<2xf32> to vector<2x1xf32>
    %177 = tpu.reciprocal %176 {approx = true} : vector<2x1xf32> -> vector<2x1xf32>
    %178 = vector.broadcast %177 : vector<2x1xf32> to vector<2x64xf32>
    %179 = arith.mulf %174, %178 : vector<2x64xf32>
    %c0_199 = arith.constant 0 : index
    %c0_200 = arith.constant 0 : index
    %180 = vector.load %arg11[%c0_199, %c0_200] : memref<2x64xf32, #tpu.memory_space<vmem>>, vector<2x64xf32>
    tpu.vector_store %arg11[%c0_199, %c0_200], %179 {strides = array<i32>} : memref<2x64xf32, #tpu.memory_space<vmem>>, vector<2x64xf32>,
    %c0_201 = arith.constant 0 : index
    %c0_202 = arith.constant 0 : index
    %181 = vector.load %arg9[%c0_201, %c0_202] : memref<64x1xf32, #tpu.memory_space<vmem>>, vector<64x1xf32>
    %cst_203 = arith.constant dense<0.000000e+00> : vector<2x1xf32>
    %182 = tpu.matmul %163, %181, %cst_203 {dimension_numbers = #tpu.dot_dimension_numbers<[1], [0], [0], [1], [0, 0, 1, 1], [], []>} : vector<2x64xf32>, vector<64x1xf32>, vector<2x1xf32> -> vector<2x1xf32>
    %c0_204 = arith.constant 0 : index
    %c0_205 = arith.constant 0 : index
    %183 = vector.load %arg10[%c0_204, %c0_205] : memref<1x1xf32, #tpu.memory_space<vmem>>, vector<1x1xf32>
    %184 = vector.broadcast %183 : vector<1x1xf32> to vector<2x1xf32>
    %185 = arith.addf %182, %184 : vector<2x1xf32>
    %186 = math.tanh %185 : vector<2x1xf32>
    %c0_206 = arith.constant 0 : index
    %c0_207 = arith.constant 0 : index
    %187 = vector.load %arg12[%c0_206, %c0_207] : memref<2x1xf32, #tpu.memory_space<vmem>>, vector<2x1xf32>
    tpu.vector_store %arg12[%c0_206, %c0_207], %186 {strides = array<i32>} : memref<2x1xf32, #tpu.memory_space<vmem>>, vector<2x1xf32>,
    return
  }
}

</mosaic_0001>

<llo_original>
// kernel: net_forward.1
$region0: #{net_forward.1}
  #allocation0 [shape = 'u32[]', space=smem, size = 0x4, offset = 0x4, fixed_abs, tag = 'smem constant byte address 0x4 - core index']
  #allocation1 [shape = 'u32[72,128]{1,0:T(1,128)}', space=vmem, size = 0x9000, scoped, tag = 'internal scratch']
  #allocation2 [shape = 'f32[2,10,10,4]{3,2,1,0:T(8,128)}', space=vmem, size = 0x28000, scoped, tag = 'scratch operand']
  #allocation3 [shape = 'f32[2,10,10,32]{3,2,1,0:T(8,128)}', space=vmem, size = 0x28000, scoped, tag = 'scratch operand']
  #allocation4 [shape = 'f32[2,10,10,32]{3,2,1,0:T(8,128)}', space=vmem, size = 0x28000, scoped, tag = 'scratch operand']
  #allocation5 [shape = 'f32[128,36]{1,0:T(8,128)}', space=vmem, size = 0x10000, scoped, tag = 'scratch operand']
  #allocation6 [shape = 'f32[128,288]{1,0:T(8,128)}', space=vmem, size = 0x30000, scoped, tag = 'scratch operand']
  #allocation7 [shape = 'f32[1,1]{1,0:T(1,128)S(1)}', space=vmem, size = 0x200, scoped, tag = 'scoped memory for net_forward.1']
  %s0 = inlined_call_operand.vmem [shape: f32[2,8,8,4], index: 0, kind: input, shape index: {}]
  %s1 = inlined_call_operand.vmem [shape: f32[36,32], index: 1, kind: input, shape index: {}]
  %s2 = inlined_call_operand.vmem [shape: f32[288,32], index: 2, kind: input, shape index: {}]
  %s3 = inlined_call_operand.vmem [shape: f32[1,32], index: 3, kind: input, shape index: {}]
  %s4 = inlined_call_operand.vmem [shape: f32[1,32], index: 4, kind: input, shape index: {}]
  %s5 = inlined_call_operand.vmem [shape: f32[32,3], index: 5, kind: input, shape index: {}]
  %s6 = inlined_call_operand.vmem [shape: f32[1,3], index: 6, kind: input, shape index: {}]
  %s7 = inlined_call_operand.vmem [shape: f32[128,64], index: 7, kind: input, shape index: {}]
  %s8 = inlined_call_operand.vmem [shape: f32[1,64], index: 8, kind: input, shape index: {}]
  %s9 = inlined_call_operand.vmem [shape: f32[64,1], index: 9, kind: input, shape index: {}]
  %s10 = inlined_call_operand.<no memory space> [shape: f32[1,1], index: 10, kind: input, shape index: {}]
  %s11 = inlined_call_operand.hbm [shape: f32[2,64], index: 11, kind: output, shape index: {0}]
  %s12 = inlined_call_operand.vmem [shape: f32[2,1], index: 12, kind: output, shape index: {1}]
  %13 = xla_tuple %s11, %s12
  %s14 = sld [smem:[#allocation0]]
  $region62: #{net_forward.1} parent=0
    _
  %s16 = ssub.s32 1, %s14
  %s17 = scalar_select 0, %s16, %s14
  %v18 = vstv %s10
  %19 = vst [vmem:[#allocation7] sm:$0x1] %v18
  $region1: #{net_forward.1} parent=0
    #allocation8 [shape = 'u8[1024]{0}', space=vmem, size = 0x400, scoped, tag = 'output window, operand 0, single buffered']
    #allocation9 [shape = 's32[1]{0}', space=sflag, size = 0x4, scoped, tag = 'scoped memory for net_forward.1']
    %20 = vsyncpa [#allocation9], 0
    // Predicated region
    $region2: #{net_forward.1} parent=1 // pred_check
      _
    $region3: #{net_forward.1} parent=1 // pred_check_branch
      %22 = sbr.rel (0) target = $region5
    $region4: #{net_forward.1} parent=1 // pred_region
      _
    $region5: #{net_forward.1} parent=1 // pred_fallthru
      _
    // Predicated region
    $region6: #{net_forward.1} parent=1 // pred_check
      _
    $region7: #{net_forward.1} parent=1 // pred_check_branch
      %24 = sbr.rel (0) target = $region9
    $region8: #{net_forward.1} parent=1 // pred_region
      _
    $region9: #{net_forward.1} parent=1 // pred_fallthru
      _
    // Predicated region
    $region10: #{net_forward.1} parent=1 // pred_check
      _
    $region11: #{net_forward.1} parent=1 // pred_check_branch
      %26 = sbr.rel (0) target = $region13
    $region12: #{net_forward.1} parent=1 // pred_region
      _
    $region13: #{net_forward.1} parent=1 // pred_fallthru
      _
    // Predicated region
    $region14: #{net_forward.1} parent=1 // pred_check
      _
    $region15: #{net_forward.1} parent=1 // pred_check_branch
      %28 = sbr.rel (0) target = $region17
    $region16: #{net_forward.1} parent=1 // pred_region
      _
    $region17: #{net_forward.1} parent=1 // pred_fallthru
      _
    // Predicated region
    $region18: #{net_forward.1} parent=1 // pred_check
      _
    $region19: #{net_forward.1} parent=1 // pred_check_branch
      %30 = sbr.rel (0) target = $region21
    $region20: #{net_forward.1} parent=1 // pred_region
      _
    $region21: #{net_forward.1} parent=1 // pred_fallthru
      _
    // Predicated region
    $region22: #{net_forward.1} parent=1 // pred_check
      _
    $region23: #{net_forward.1} parent=1 // pred_check_branch
      %32 = sbr.rel (0) target = $region25
    $region24: #{net_forward.1} parent=1 // pred_region
      _
    $region25: #{net_forward.1} parent=1 // pred_fallthru
      _
    // Predicated region
    $region26: #{net_forward.1} parent=1 // pred_check
      _
    $region27: #{net_forward.1} parent=1 // pred_check_branch
      %34 = sbr.rel (0) target = $region29
    $region28: #{net_forward.1} parent=1 // pred_region
      _
    $region29: #{net_forward.1} parent=1 // pred_fallthru
      _
    // Predicated region
    $region30: #{net_forward.1} parent=1 // pred_check
      _
    $region31: #{net_forward.1} parent=1 // pred_check_branch
      %36 = sbr.rel (0) target = $region33
    $region32: #{net_forward.1} parent=1 // pred_region
      _
    $region33: #{net_forward.1} parent=1 // pred_fallthru
      _
    // Predicated region
    $region34: #{net_forward.1} parent=1 // pred_check
      _
    $region35: #{net_forward.1} parent=1 // pred_check_branch
      %38 = sbr.rel (0) target = $region37
    $region36: #{net_forward.1} parent=1 // pred_region
      _
    $region37: #{net_forward.1} parent=1 // pred_fallthru
      _
    // Predicated region
    $region38: #{net_forward.1} parent=1 // pred_check
      _
    $region39: #{net_forward.1} parent=1 // pred_check_branch
      %40 = sbr.rel (0) target = $region41
    $region40: #{net_forward.1} parent=1 // pred_region
      _
    $region41: #{net_forward.1} parent=1 // pred_fallthru
      _
    // Predicated region
    $region42: #{net_forward.1} parent=1 // pred_check
      _
    $region43: #{net_forward.1} parent=1 // pred_check_branch
      %42 = sbr.rel (0) target = $region45
    $region44: #{net_forward.1} parent=1 // pred_region
      _
    $region45: #{net_forward.1} parent=1 // pred_fallthru
      _
    %vm43 = vcmask 31744
    %44 = vst.msk [vmem:[#allocation2] sm:$0xff] %vm43, 0.0
    %vm45 = vcmask 25600
    %46 = vst.msk [vmem:[#allocation2 + $0x8] sm:$0x3] %vm45, 0.0
    %47 = vst.msk [vmem:[#allocation2 + $0x10] sm:$0xff] %vm43, 0.0
    %48 = vst.msk [vmem:[#allocation2 + $0x18] sm:$0x3] %vm45, 0.0
    %49 = vst.msk [vmem:[#allocation2 + $0x20] sm:$0xff] %vm43, 0.0
    %50 = vst.msk [vmem:[#allocation2 + $0x28] sm:$0x3] %vm45, 0.0
    %51 = vst.msk [vmem:[#allocation2 + $0x30] sm:$0xff] %vm43, 0.0
    %52 = vst.msk [vmem:[#allocation2 + $0x38] sm:$0x3] %vm45, 0.0
    %53 = vst.msk [vmem:[#allocation2 + $0x40] sm:$0xff] %vm43, 0.0
    %54 = vst.msk [vmem:[#allocation2 + $0x48] sm:$0x3] %vm45, 0.0
    %55 = vst.msk [vmem:[#allocation2 + $0x50] sm:$0xff] %vm43, 0.0
    %56 = vst.msk [vmem:[#allocation2 + $0x58] sm:$0x3] %vm45, 0.0
    %57 = vst.msk [vmem:[#allocation2 + $0x60] sm:$0xff] %vm43, 0.0
    %58 = vst.msk [vmem:[#allocation2 + $0x68] sm:$0x3] %vm45, 0.0
    %59 = vst.msk [vmem:[#allocation2 + $0x70] sm:$0xff] %vm43, 0.0
    %60 = vst.msk [vmem:[#allocation2 + $0x78] sm:$0x3] %vm45, 0.0
    %61 = vst.msk [vmem:[#allocation2 + $0x80] sm:$0xff] %vm43, 0.0
    %62 = vst.msk [vmem:[#allocation2 + $0x88] sm:$0x3] %vm45, 0.0
    %63 = vst.msk [vmem:[#allocation2 + $0x90] sm:$0xff] %vm43, 0.0
    %64 = vst.msk [vmem:[#allocation2 + $0x98] sm:$0x3] %vm45, 0.0
    %65 = vst.msk [vmem:[#allocation2 + $0xa0] sm:$0xff] %vm43, 0.0
    %66 = vst.msk [vmem:[#allocation2 + $0xa8] sm:$0x3] %vm45, 0.0
    %67 = vst.msk [vmem:[#allocation2 + $0xb0] sm:$0xff] %vm43, 0.0
    %68 = vst.msk [vmem:[#allocation2 + $0xb8] sm:$0x3] %vm45, 0.0
    %69 = vst.msk [vmem:[#allocation2 + $0xc0] sm:$0xff] %vm43, 0.0
    %70 = vst.msk [vmem:[#allocation2 + $0xc8] sm:$0x3] %vm45, 0.0
    %71 = vst.msk [vmem:[#allocation2 + $0xd0] sm:$0xff] %vm43, 0.0
    %72 = vst.msk [vmem:[#allocation2 + $0xd8] sm:$0x3] %vm45, 0.0
    %73 = vst.msk [vmem:[#allocation2 + $0xe0] sm:$0xff] %vm43, 0.0
    %74 = vst.msk [vmem:[#allocation2 + $0xe8] sm:$0x3] %vm45, 0.0
    %75 = vst.msk [vmem:[#allocation2 + $0xf0] sm:$0xff] %vm43, 0.0
    %76 = vst.msk [vmem:[#allocation2 + $0xf8] sm:$0x3] %vm45, 0.0
    %77 = vst.msk [vmem:[#allocation2 + $0x100] sm:$0xff] %vm43, 0.0
    %78 = vst.msk [vmem:[#allocation2 + $0x108] sm:$0x3] %vm45, 0.0
    %79 = vst.msk [vmem:[#allocation2 + $0x110] sm:$0xff] %vm43, 0.0
    %80 = vst.msk [vmem:[#allocation2 + $0x118] sm:$0x3] %vm45, 0.0
    %81 = vst.msk [vmem:[#allocation2 + $0x120] sm:$0xff] %vm43, 0.0
    %82 = vst.msk [vmem:[#allocation2 + $0x128] sm:$0x3] %vm45, 0.0
    %83 = vst.msk [vmem:[#allocation2 + $0x130] sm:$0xff] %vm43, 0.0
    %84 = vst.msk [vmem:[#allocation2 + $0x138] sm:$0x3] %vm45, 0.0
    %v85 = vld [vmem:[%s0] sm:$0xff]
    %v86 = vld [vmem:[%s0 + $0x8] sm:$0xff]
    %v87 = vld [vmem:[%s0 + $0x10] sm:$0xff]
    %v88 = vld [vmem:[%s0 + $0x18] sm:$0xff]
    %v89 = vld [vmem:[%s0 + $0x20] sm:$0xff]
    %v90 = vld [vmem:[%s0 + $0x28] sm:$0xff]
    %v91 = vld [vmem:[%s0 + $0x30] sm:$0xff]
    %v92 = vld [vmem:[%s0 + $0x38] sm:$0xff]
    %v93 = vld [vmem:[%s0 + $0x40] sm:$0xff]
    %v94 = vld [vmem:[%s0 + $0x48] sm:$0xff]
    %v95 = vld [vmem:[%s0 + $0x50] sm:$0xff]
    %v96 = vld [vmem:[%s0 + $0x58] sm:$0xff]
    %v97 = vld [vmem:[%s0 + $0x60] sm:$0xff]
    %v98 = vld [vmem:[%s0 + $0x68] sm:$0xff]
    %v99 = vld [vmem:[%s0 + $0x70] sm:$0xff]
    %v100 = vld [vmem:[%s0 + $0x78] sm:$0xff]
    %s101 = scalar_lea.vmem [#allocation2], 16
    %102 = vst.msk [vmem:[%s101 + $0x1] sm:$0xff] %vm43, %v85
    %103 = vst.msk [vmem:[%s101 + $0x11] sm:$0xff] %vm43, %v86
    %104 = vst.msk [vmem:[%s101 + $0x21] sm:$0xff] %vm43, %v87
    %105 = vst.msk [vmem:[%s101 + $0x31] sm:$0xff] %vm43, %v88
    %106 = vst.msk [vmem:[%s101 + $0x41] sm:$0xff] %vm43, %v89
    %107 = vst.msk [vmem:[%s101 + $0x51] sm:$0xff] %vm43, %v90
    %108 = vst.msk [vmem:[%s101 + $0x61] sm:$0xff] %vm43, %v91
    %109 = vst.msk [vmem:[%s101 + $0x71] sm:$0xff] %vm43, %v92
    %110 = vst.msk [vmem:[%s101 + $0xa1] sm:$0xff] %vm43, %v93
    %111 = vst.msk [vmem:[%s101 + $0xb1] sm:$0xff] %vm43, %v94
    %112 = vst.msk [vmem:[%s101 + $0xc1] sm:$0xff] %vm43, %v95
    %113 = vst.msk [vmem:[%s101 + $0xd1] sm:$0xff] %vm43, %v96
    %114 = vst.msk [vmem:[%s101 + $0xe1] sm:$0xff] %vm43, %v97
    %115 = vst.msk [vmem:[%s101 + $0xf1] sm:$0xff] %vm43, %v98
    %116 = vst.msk [vmem:[%s101 + $0x101] sm:$0xff] %vm43, %v99
    %117 = vst.msk [vmem:[%s101 + $0x111] sm:$0xff] %vm43, %v100
    %v118 = vld [vmem:[#allocation2] sm:$0xff]
    %v119 = vld [vmem:[#allocation2 + $0x10] sm:$0xff]
    %v120 = vld [vmem:[#allocation2 + $0x20] sm:$0xff]
    %v121 = vld [vmem:[#allocation2 + $0x30] sm:$0xff]
    %v122 = vld [vmem:[#allocation2 + $0x40] sm:$0xff]
    %v123 = vld [vmem:[#allocation2 + $0x50] sm:$0xff]
    %v124 = vld [vmem:[#allocation2 + $0x60] sm:$0xff]
    %v125 = vld [vmem:[#allocation2 + $0x70] sm:$0xff]
    %v126 = vld [vmem:[#allocation2 + $0xa0] sm:$0xff]
    %v127 = vld [vmem:[#allocation2 + $0xb0] sm:$0xff]
    %v128 = vld [vmem:[#allocation2 + $0xc0] sm:$0xff]
    %v129 = vld [vmem:[#allocation2 + $0xd0] sm:$0xff]
    %v130 = vld [vmem:[#allocation2 + $0xe0] sm:$0xff]
    %v131 = vld [vmem:[#allocation2 + $0xf0] sm:$0xff]
    %v132 = vld [vmem:[#allocation2 + $0x100] sm:$0xff]
    %v133 = vld [vmem:[#allocation2 + $0x110] sm:$0xff]
    %134 = vst.msk [vmem:[#allocation5] sm:$0xff] %vm43, %v118
    %135 = vst.msk [vmem:[#allocation5 + $0x8] sm:$0xff] %vm43, %v119
    %136 = vst.msk [vmem:[#allocation5 + $0x10] sm:$0xff] %vm43, %v120
    %137 = vst.msk [vmem:[#allocation5 + $0x18] sm:$0xff] %vm43, %v121
    %138 = vst.msk [vmem:[#allocation5 + $0x20] sm:$0xff] %vm43, %v122
    %139 = vst.msk [vmem:[#allocation5 + $0x28] sm:$0xff] %vm43, %v123
    %140 = vst.msk [vmem:[#allocation5 + $0x30] sm:$0xff] %vm43, %v124
    %141 = vst.msk [vmem:[#allocation5 + $0x38] sm:$0xff] %vm43, %v125
    %142 = vst.msk [vmem:[#allocation5 + $0x40] sm:$0xff] %vm43, %v126
    %143 = vst.msk [vmem:[#allocation5 + $0x48] sm:$0xff] %vm43, %v127
    %144 = vst.msk [vmem:[#allocation5 + $0x50] sm:$0xff] %vm43, %v128
    %145 = vst.msk [vmem:[#allocation5 + $0x58] sm:$0xff] %vm43, %v129
    %146 = vst.msk [vmem:[#allocation5 + $0x60] sm:$0xff] %vm43, %v130
    %147 = vst.msk [vmem:[#allocation5 + $0x68] sm:$0xff] %vm43, %v131
    %148 = vst.msk [vmem:[#allocation5 + $0x70] sm:$0xff] %vm43, %v132
    %149 = vst.msk [vmem:[#allocation5 + $0x78] sm:$0xff] %vm43, %v133
    %v150 = vld [vmem:[#allocation2 + $0x1] sm:$0xff]
    %v151 = vld [vmem:[#allocation2 + $0x11] sm:$0xff]
    %v152 = vld [vmem:[#allocation2 + $0x21] sm:$0xff]
    %v153 = vld [vmem:[#allocation2 + $0x31] sm:$0xff]
    %v154 = vld [vmem:[#allocation2 + $0x41] sm:$0xff]
    %v155 = vld [vmem:[#allocation2 + $0x51] sm:$0xff]
    %v156 = vld [vmem:[#allocation2 + $0x61] sm:$0xff]
    %v157 = vld [vmem:[#allocation2 + $0x71] sm:$0xff]
    %v158 = vld [vmem:[#allocation2 + $0xa1] sm:$0xff]
    %v159 = vld [vmem:[#allocation2 + $0xb1] sm:$0xff]
    %v160 = vld [vmem:[#allocation2 + $0xc1] sm:$0xff]
    %v161 = vld [vmem:[#allocation2 + $0xd1] sm:$0xff]
    %v162 = vld [vmem:[#allocation2 + $0xe1] sm:$0xff]
    %v163 = vld [vmem:[#allocation2 + $0xf1] sm:$0xff]
    %v164 = vld [vmem:[#allocation2 + $0x101] sm:$0xff]
    %v165 = vld [vmem:[#allocation2 + $0x111] sm:$0xff]
    %182 = vrot.lane.b32.xlu0 %v150, 4
    %v183 = vpop.permute.xlu0 %182
    %184 = vrot.lane.b32.xlu0 %v151, 4
    %v185 = vpop.permute.xlu0 %184
    %186 = vrot.lane.b32.xlu0 %v152, 4
    %v187 = vpop.permute.xlu0 %186
    %188 = vrot.lane.b32.xlu0 %v153, 4
    %v189 = vpop.permute.xlu0 %188
    %190 = vrot.lane.b32.xlu0 %v154, 4
    %v191 = vpop.permute.xlu0 %190
    %192 = vrot.lane.b32.xlu0 %v155, 4
    %v193 = vpop.permute.xlu0 %192
    %194 = vrot.lane.b32.xlu0 %v156, 4
    %v195 = vpop.permute.xlu0 %194
    %196 = vrot.lane.b32.xlu0 %v157, 4
    %v197 = vpop.permute.xlu0 %196
    %198 = vrot.lane.b32.xlu0 %v158, 4
    %v199 = vpop.permute.xlu0 %198
    %200 = vrot.lane.b32.xlu0 %v159, 4
    %v201 = vpop.permute.xlu0 %200
    %202 = vrot.lane.b32.xlu0 %v160, 4
    %v203 = vpop.permute.xlu0 %202
    %204 = vrot.lane.b32.xlu0 %v161, 4
    %v205 = vpop.permute.xlu0 %204
    %206 = vrot.lane.b32.xlu0 %v162, 4
    %v207 = vpop.permute.xlu0 %206
    %208 = vrot.lane.b32.xlu0 %v163, 4
    %v209 = vpop.permute.xlu0 %208
    %210 = vrot.lane.b32.xlu0 %v164, 4
    %v211 = vpop.permute.xlu0 %210
    %212 = vrot.lane.b32.xlu0 %v165, 4
    %v213 = vpop.permute.xlu0 %212
    %vm230 = vcmask 64544
    %231 = vst.msk [vmem:[#allocation5] sm:$0xff] %vm230, %v183
    %232 = vst.msk [vmem:[#allocation5 + $0x8] sm:$0xff] %vm230, %v185
    %233 = vst.msk [vmem:[#allocation5 + $0x10] sm:$0xff] %vm230, %v187
    %234 = vst.msk [vmem:[#allocation5 + $0x18] sm:$0xff] %vm230, %v189
    %235 = vst.msk [vmem:[#allocation5 + $0x20] sm:$0xff] %vm230, %v191
    %236 = vst.msk [vmem:[#allocation5 + $0x28] sm:$0xff] %vm230, %v193
    %237 = vst.msk [vmem:[#allocation5 + $0x30] sm:$0xff] %vm230, %v195
    %238 = vst.msk [vmem:[#allocation5 + $0x38] sm:$0xff] %vm230, %v197
    %239 = vst.msk [vmem:[#allocation5 + $0x40] sm:$0xff] %vm230, %v199
    %240 = vst.msk [vmem:[#allocation5 + $0x48] sm:$0xff] %vm230, %v201
    %241 = vst.msk [vmem:[#allocation5 + $0x50] sm:$0xff] %vm230, %v203
    %242 = vst.msk [vmem:[#allocation5 + $0x58] sm:$0xff] %vm230, %v205
    %243 = vst.msk [vmem:[#allocation5 + $0x60] sm:$0xff] %vm230, %v207
    %244 = vst.msk [vmem:[#allocation5 + $0x68] sm:$0xff] %vm230, %v209
    %245 = vst.msk [vmem:[#allocation5 + $0x70] sm:$0xff] %vm230, %v211
    %246 = vst.msk [vmem:[#allocation5 + $0x78] sm:$0xff] %vm230, %v213
    %v247 = vld [vmem:[#allocation2 + $0x2] sm:$0xff]
    %v248 = vld [vmem:[#allocation2 + $0x12] sm:$0xff]
    %v249 = vld [vmem:[#allocation2 + $0x22] sm:$0xff]
    %v250 = vld [vmem:[#allocation2 + $0x32] sm:$0xff]
    %v251 = vld [vmem:[#allocation2 + $0x42] sm:$0xff]
    %v252 = vld [vmem:[#allocation2 + $0x52] sm:$0xff]
    %v253 = vld [vmem:[#allocation2 + $0x62] sm:$0xff]
    %v254 = vld [vmem:[#allocation2 + $0x72] sm:$0xff]
    %v255 = vld [vmem:[#allocation2 + $0xa2] sm:$0xff]
    %v256 = vld [vmem:[#allocation2 + $0xb2] sm:$0xff]
    %v257 = vld [vmem:[#allocation2 + $0xc2] sm:$0xff]
    %v258 = vld [vmem:[#allocation2 + $0xd2] sm:$0xff]
    %v259 = vld [vmem:[#allocation2 + $0xe2] sm:$0xff]
    %v260 = vld [vmem:[#allocation2 + $0xf2] sm:$0xff]
    %v261 = vld [vmem:[#allocation2 + $0x102] sm:$0xff]
    %v262 = vld [vmem:[#allocation2 + $0x112] sm:$0xff]
    %279 = vrot.lane.b32.xlu0 %v247, 8
    %v280 = vpop.permute.xlu0 %279
    %281 = vrot.lane.b32.xlu0 %v248, 8
    %v282 = vpop.permute.xlu0 %281
    %283 = vrot.lane.b32.xlu0 %v249, 8
    %v284 = vpop.permute.xlu0 %283
    %285 = vrot.lane.b32.xlu0 %v250, 8
    %v286 = vpop.permute.xlu0 %285
    %287 = vrot.lane.b32.xlu0 %v251, 8
    %v288 = vpop.permute.xlu0 %287
    %289 = vrot.lane.b32.xlu0 %v252, 8
    %v290 = vpop.permute.xlu0 %289
    %291 = vrot.lane.b32.xlu0 %v253, 8
    %v292 = vpop.permute.xlu0 %291
    %293 = vrot.lane.b32.xlu0 %v254, 8
    %v294 = vpop.permute.xlu0 %293
    %295 = vrot.lane.b32.xlu0 %v255, 8
    %v296 = vpop.permute.xlu0 %295
    %297 = vrot.lane.b32.xlu0 %v256, 8
    %v298 = vpop.permute.xlu0 %297
    %299 = vrot.lane.b32.xlu0 %v257, 8
    %v300 = vpop.permute.xlu0 %299
    %301 = vrot.lane.b32.xlu0 %v258, 8
    %v302 = vpop.permute.xlu0 %301
    %303 = vrot.lane.b32.xlu0 %v259, 8
    %v304 = vpop.permute.xlu0 %303
    %305 = vrot.lane.b32.xlu0 %v260, 8
    %v306 = vpop.permute.xlu0 %305
    %307 = vrot.lane.b32.xlu0 %v261, 8
    %v308 = vpop.permute.xlu0 %307
    %309 = vrot.lane.b32.xlu0 %v262, 8
    %v310 = vpop.permute.xlu0 %309
    %vm327 = vcmask 97344
    %328 = vst.msk [vmem:[#allocation5] sm:$0xff] %vm327, %v280
    %329 = vst.msk [vmem:[#allocation5 + $0x8] sm:$0xff] %vm327, %v282
    %330 = vst.msk [vmem:[#allocation5 + $0x10] sm:$0xff] %vm327, %v284
    %331 = vst.msk [vmem:[#allocation5 + $0x18] sm:$0xff] %vm327, %v286
    %332 = vst.msk [vmem:[#allocation5 + $0x20] sm:$0xff] %vm327, %v288
    %333 = vst.msk [vmem:[#allocation5 + $0x28] sm:$0xff] %vm327, %v290
    %334 = vst.msk [vmem:[#allocation5 + $0x30] sm:$0xff] %vm327, %v292
    %335 = vst.msk [vmem:[#allocation5 + $0x38] sm:$0xff] %vm327, %v294
    %336 = vst.msk [vmem:[#allocation5 + $0x40] sm:$0xff] %vm327, %v296
    %337 = vst.msk [vmem:[#allocation5 + $0x48] sm:$0xff] %vm327, %v298
    %338 = vst.msk [vmem:[#allocation5 + $0x50] sm:$0xff] %vm327, %v300
    %339 = vst.msk [vmem:[#allocation5 + $0x58] sm:$0xff] %vm327, %v302
    %340 = vst.msk [vmem:[#allocation5 + $0x60] sm:$0xff] %vm327, %v304
    %341 = vst.msk [vmem:[#allocation5 + $0x68] sm:$0xff] %vm327, %v306
    %342 = vst.msk [vmem:[#allocation5 + $0x70] sm:$0xff] %vm327, %v308
    %343 = vst.msk [vmem:[#allocation5 + $0x78] sm:$0xff] %vm327, %v310
    %v344 = vld [vmem:[%s101] sm:$0xff]
    %v345 = vld [vmem:[%s101 + $0x10] sm:$0xff]
    %v346 = vld [vmem:[%s101 + $0x20] sm:$0xff]
    %v347 = vld [vmem:[%s101 + $0x30] sm:$0xff]
    %v348 = vld [vmem:[%s101 + $0x40] sm:$0xff]
    %v349 = vld [vmem:[%s101 + $0x50] sm:$0xff]
    %v350 = vld [vmem:[%s101 + $0x60] sm:$0xff]
    %v351 = vld [vmem:[%s101 + $0x70] sm:$0xff]
    %v352 = vld [vmem:[%s101 + $0xa0] sm:$0xff]
    %v353 = vld [vmem:[%s101 + $0xb0] sm:$0xff]
    %v354 = vld [vmem:[%s101 + $0xc0] sm:$0xff]
    %v355 = vld [vmem:[%s101 + $0xd0] sm:$0xff]
    %v356 = vld [vmem:[%s101 + $0xe0] sm:$0xff]
    %v357 = vld [vmem:[%s101 + $0xf0] sm:$0xff]
    %v358 = vld [vmem:[%s101 + $0x100] sm:$0xff]
    %v359 = vld [vmem:[%s101 + $0x110] sm:$0xff]
    %376 = vrot.lane.b32.xlu0 %v344, 12
    %v377 = vpop.permute.xlu0 %376
    %378 = vrot.lane.b32.xlu0 %v345, 12
    %v379 = vpop.permute.xlu0 %378
    %380 = vrot.lane.b32.xlu0 %v346, 12
    %v381 = vpop.permute.xlu0 %380
    %382 = vrot.lane.b32.xlu0 %v347, 12
    %v383 = vpop.permute.xlu0 %382
    %384 = vrot.lane.b32.xlu0 %v348, 12
    %v385 = vpop.permute.xlu0 %384
    %386 = vrot.lane.b32.xlu0 %v349, 12
    %v387 = vpop.permute.xlu0 %386
    %388 = vrot.lane.b32.xlu0 %v350, 12
    %v389 = vpop.permute.xlu0 %388
    %390 = vrot.lane.b32.xlu0 %v351, 12
    %v391 = vpop.permute.xlu0 %390
    %392 = vrot.lane.b32.xlu0 %v352, 12
    %v393 = vpop.permute.xlu0 %392
    %394 = vrot.lane.b32.xlu0 %v353, 12
    %v395 = vpop.permute.xlu0 %394
    %396 = vrot.lane.b32.xlu0 %v354, 12
    %v397 = vpop.permute.xlu0 %396
    %398 = vrot.lane.b32.xlu0 %v355, 12
    %v399 = vpop.permute.xlu0 %398
    %400 = vrot.lane.b32.xlu0 %v356, 12
    %v401 = vpop.permute.xlu0 %400
    %402 = vrot.lane.b32.xlu0 %v357, 12
    %v403 = vpop.permute.xlu0 %402
    %404 = vrot.lane.b32.xlu0 %v358, 12
    %v405 = vpop.permute.xlu0 %404
    %406 = vrot.lane.b32.xlu0 %v359, 12
    %v407 = vpop.permute.xlu0 %406
    %vm424 = vcmask 130144
    %425 = vst.msk [vmem:[#allocation5] sm:$0xff] %vm424, %v377
    %426 = vst.msk [vmem:[#allocation5 + $0x8] sm:$0xff] %vm424, %v379
    %427 = vst.msk [vmem:[#allocation5 + $0x10] sm:$0xff] %vm424, %v381
    %428 = vst.msk [vmem:[#allocation5 + $0x18] sm:$0xff] %vm424, %v383
    %429 = vst.msk [vmem:[#allocation5 + $0x20] sm:$0xff] %vm424, %v385
    %430 = vst.msk [vmem:[#allocation5 + $0x28] sm:$0xff] %vm424, %v387
    %431 = vst.msk [vmem:[#allocation5 + $0x30] sm:$0xff] %vm424, %v389
    %432 = vst.msk [vmem:[#allocation5 + $0x38] sm:$0xff] %vm424, %v391
    %433 = vst.msk [vmem:[#allocation5 + $0x40] sm:$0xff] %vm424, %v393
    %434 = vst.msk [vmem:[#allocation5 + $0x48] sm:$0xff] %vm424, %v395
    %435 = vst.msk [vmem:[#allocation5 + $0x50] sm:$0xff] %vm424, %v397
    %436 = vst.msk [vmem:[#allocation5 + $0x58] sm:$0xff] %vm424, %v399
    %437 = vst.msk [vmem:[#allocation5 + $0x60] sm:$0xff] %vm424, %v401
    %438 = vst.msk [vmem:[#allocation5 + $0x68] sm:$0xff] %vm424, %v403
    %439 = vst.msk [vmem:[#allocation5 + $0x70] sm:$0xff] %vm424, %v405
    %440 = vst.msk [vmem:[#allocation5 + $0x78] sm:$0xff] %vm424, %v407
    %v441 = vld [vmem:[%s101 + $0x1] sm:$0xff]
    %v442 = vld [vmem:[%s101 + $0x11] sm:$0xff]
    %v443 = vld [vmem:[%s101 + $0x21] sm:$0xff]
    %v444 = vld [vmem:[%s101 + $0x31] sm:$0xff]
    %v445 = vld [vmem:[%s101 + $0x41] sm:$0xff]
    %v446 = vld [vmem:[%s101 + $0x51] sm:$0xff]
    %v447 = vld [vmem:[%s101 + $0x61] sm:$0xff]
    %v448 = vld [vmem:[%s101 + $0x71] sm:$0xff]
    %v449 = vld [vmem:[%s101 + $0xa1] sm:$0xff]
    %v450 = vld [vmem:[%s101 + $0xb1] sm:$0xff]
    %v451 = vld [vmem:[%s101 + $0xc1] sm:$0xff]
    %v452 = vld [vmem:[%s101 + $0xd1] sm:$0xff]
    %v453 = vld [vmem:[%s101 + $0xe1] sm:$0xff]
    %v454 = vld [vmem:[%s101 + $0xf1] sm:$0xff]
    %v455 = vld [vmem:[%s101 + $0x101] sm:$0xff]
    %v456 = vld [vmem:[%s101 + $0x111] sm:$0xff]
    %473 = vrot.lane.b32.xlu0 %v441, 16
    %v474 = vpop.permute.xlu0 %473
    %475 = vrot.lane.b32.xlu0 %v442, 16
    %v476 = vpop.permute.xlu0 %475
    %477 = vrot.lane.b32.xlu0 %v443, 16
    %v478 = vpop.permute.xlu0 %477
    %479 = vrot.lane.b32.xlu0 %v444, 16
    %v480 = vpop.permute.xlu0 %479
    %481 = vrot.lane.b32.xlu0 %v445, 16
    %v482 = vpop.permute.xlu0 %481
    %483 = vrot.lane.b32.xlu0 %v446, 16
    %v484 = vpop.permute.xlu0 %483
    %485 = vrot.lane.b32.xlu0 %v447, 16
    %v486 = vpop.permute.xlu0 %485
    %487 = vrot.lane.b32.xlu0 %v448, 16
    %v488 = vpop.permute.xlu0 %487
    %489 = vrot.lane.b32.xlu0 %v449, 16
    %v490 = vpop.permute.xlu0 %489
    %491 = vrot.lane.b32.xlu0 %v450, 16
    %v492 = vpop.permute.xlu0 %491
    %493 = vrot.lane.b32.xlu0 %v451, 16
    %v494 = vpop.permute.xlu0 %493
    %495 = vrot.lane.b32.xlu0 %v452, 16
    %v496 = vpop.permute.xlu0 %495
    %497 = vrot.lane.b32.xlu0 %v453, 16
    %v498 = vpop.permute.xlu0 %497
    %499 = vrot.lane.b32.xlu0 %v454, 16
    %v500 = vpop.permute.xlu0 %499
    %501 = vrot.lane.b32.xlu0 %v455, 16
    %v502 = vpop.permute.xlu0 %501
    %503 = vrot.lane.b32.xlu0 %v456, 16
    %v504 = vpop.permute.xlu0 %503
    %vm521 = vcmask 162944
    %522 = vst.msk [vmem:[#allocation5] sm:$0xff] %vm521, %v474
    %523 = vst.msk [vmem:[#allocation5 + $0x8] sm:$0xff] %vm521, %v476
    %524 = vst.msk [vmem:[#allocation5 + $0x10] sm:$0xff] %vm521, %v478
    %525 = vst.msk [vmem:[#allocation5 + $0x18] sm:$0xff] %vm521, %v480
    %526 = vst.msk [vmem:[#allocation5 + $0x20] sm:$0xff] %vm521, %v482
    %527 = vst.msk [vmem:[#allocation5 + $0x28] sm:$0xff] %vm521, %v484
    %528 = vst.msk [vmem:[#allocation5 + $0x30] sm:$0xff] %vm521, %v486
    %529 = vst.msk [vmem:[#allocation5 + $0x38] sm:$0xff] %vm521, %v488
    %530 = vst.msk [vmem:[#allocation5 + $0x40] sm:$0xff] %vm521, %v490
    %531 = vst.msk [vmem:[#allocation5 + $0x48] sm:$0xff] %vm521, %v492
    %532 = vst.msk [vmem:[#allocation5 + $0x50] sm:$0xff] %vm521, %v494
    %533 = vst.msk [vmem:[#allocation5 + $0x58] sm:$0xff] %vm521, %v496
    %534 = vst.msk [vmem:[#allocation5 + $0x60] sm:$0xff] %vm521, %v498
    %535 = vst.msk [vmem:[#allocation5 + $0x68] sm:$0xff] %vm521, %v500
    %536 = vst.msk [vmem:[#allocation5 + $0x70] sm:$0xff] %vm521, %v502
    %537 = vst.msk [vmem:[#allocation5 + $0x78] sm:$0xff] %vm521, %v504
    %v538 = vld [vmem:[%s101 + $0x2] sm:$0xff]
    %v539 = vld [vmem:[%s101 + $0x12] sm:$0xff]
    %v540 = vld [vmem:[%s101 + $0x22] sm:$0xff]
    %v541 = vld [vmem:[%s101 + $0x32] sm:$0xff]
    %v542 = vld [vmem:[%s101 + $0x42] sm:$0xff]
    %v543 = vld [vmem:[%s101 + $0x52] sm:$0xff]
    %v544 = vld [vmem:[%s101 + $0x62] sm:$0xff]
    %v545 = vld [vmem:[%s101 + $0x72] sm:$0xff]
    %v546 = vld [vmem:[%s101 + $0xa2] sm:$0xff]
    %v547 = vld [vmem:[%s101 + $0xb2] sm:$0xff]
    %v548 = vld [vmem:[%s101 + $0xc2] sm:$0xff]
    %v549 = vld [vmem:[%s101 + $0xd2] sm:$0xff]
    %v550 = vld [vmem:[%s101 + $0xe2] sm:$0xff]
    %v551 = vld [vmem:[%s101 + $0xf2] sm:$0xff]
    %v552 = vld [vmem:[%s101 + $0x102] sm:$0xff]
    %v553 = vld [vmem:[%s101 + $0x112] sm:$0xff]
    %570 = vrot.lane.b32.xlu0 %v538, 20
    %v571 = vpop.permute.xlu0 %570
    %572 = vrot.lane.b32.xlu0 %v539, 20
    %v573 = vpop.permute.xlu0 %572
    %574 = vrot.lane.b32.xlu0 %v540, 20
    %v575 = vpop.permute.xlu0 %574
    %576 = vrot.lane.b32.xlu0 %v541, 20
    %v577 = vpop.permute.xlu0 %576
    %578 = vrot.lane.b32.xlu0 %v542, 20
    %v579 = vpop.permute.xlu0 %578
    %580 = vrot.lane.b32.xlu0 %v543, 20
    %v581 = vpop.permute.xlu0 %580
    %582 = vrot.lane.b32.xlu0 %v544, 20
    %v583 = vpop.permute.xlu0 %582
    %584 = vrot.lane.b32.xlu0 %v545, 20
    %v585 = vpop.permute.xlu0 %584
    %586 = vrot.lane.b32.xlu0 %v546, 20
    %v587 = vpop.permute.xlu0 %586
    %588 = vrot.lane.b32.xlu0 %v547, 20
    %v589 = vpop.permute.xlu0 %588
    %590 = vrot.lane.b32.xlu0 %v548, 20
    %v591 = vpop.permute.xlu0 %590
    %592 = vrot.lane.b32.xlu0 %v549, 20
    %v593 = vpop.permute.xlu0 %592
    %594 = vrot.lane.b32.xlu0 %v550, 20
    %v595 = vpop.permute.xlu0 %594
    %596 = vrot.lane.b32.xlu0 %v551, 20
    %v597 = vpop.permute.xlu0 %596
    %598 = vrot.lane.b32.xlu0 %v552, 20
    %v599 = vpop.permute.xlu0 %598
    %600 = vrot.lane.b32.xlu0 %v553, 20
    %v601 = vpop.permute.xlu0 %600
    %vm618 = vcmask 195744
    %619 = vst.msk [vmem:[#allocation5] sm:$0xff] %vm618, %v571
    %620 = vst.msk [vmem:[#allocation5 + $0x8] sm:$0xff] %vm618, %v573
    %621 = vst.msk [vmem:[#allocation5 + $0x10] sm:$0xff] %vm618, %v575
    %622 = vst.msk [vmem:[#allocation5 + $0x18] sm:$0xff] %vm618, %v577
    %623 = vst.msk [vmem:[#allocation5 + $0x20] sm:$0xff] %vm618, %v579
    %624 = vst.msk [vmem:[#allocation5 + $0x28] sm:$0xff] %vm618, %v581
    %625 = vst.msk [vmem:[#allocation5 + $0x30] sm:$0xff] %vm618, %v583
    %626 = vst.msk [vmem:[#allocation5 + $0x38] sm:$0xff] %vm618, %v585
    %627 = vst.msk [vmem:[#allocation5 + $0x40] sm:$0xff] %vm618, %v587
    %628 = vst.msk [vmem:[#allocation5 + $0x48] sm:$0xff] %vm618, %v589
    %629 = vst.msk [vmem:[#allocation5 + $0x50] sm:$0xff] %vm618, %v591
    %630 = vst.msk [vmem:[#allocation5 + $0x58] sm:$0xff] %vm618, %v593
    %631 = vst.msk [vmem:[#allocation5 + $0x60] sm:$0xff] %vm618, %v595
    %632 = vst.msk [vmem:[#allocation5 + $0x68] sm:$0xff] %vm618, %v597
    %633 = vst.msk [vmem:[#allocation5 + $0x70] sm:$0xff] %vm618, %v599
    %634 = vst.msk [vmem:[#allocation5 + $0x78] sm:$0xff] %vm618, %v601
    %s635 = scalar_lea.vmem [#allocation2], 32
    %v636 = vld [vmem:[%s635] sm:$0xff]
    %v637 = vld [vmem:[%s635 + $0x10] sm:$0xff]
    %v638 = vld [vmem:[%s635 + $0x20] sm:$0xff]
    %v639 = vld [vmem:[%s635 + $0x30] sm:$0xff]
    %v640 = vld [vmem:[%s635 + $0x40] sm:$0xff]
    %v641 = vld [vmem:[%s635 + $0x50] sm:$0xff]
    %v642 = vld [vmem:[%s635 + $0x60] sm:$0xff]
    %v643 = vld [vmem:[%s635 + $0x70] sm:$0xff]
    %v644 = vld [vmem:[%s635 + $0xa0] sm:$0xff]
    %v645 = vld [vmem:[%s635 + $0xb0] sm:$0xff]
    %v646 = vld [vmem:[%s635 + $0xc0] sm:$0xff]
    %v647 = vld [vmem:[%s635 + $0xd0] sm:$0xff]
    %v648 = vld [vmem:[%s635 + $0xe0] sm:$0xff]
    %v649 = vld [vmem:[%s635 + $0xf0] sm:$0xff]
    %v650 = vld [vmem:[%s635 + $0x100] sm:$0xff]
    %v651 = vld [vmem:[%s635 + $0x110] sm:$0xff]
    %668 = vrot.lane.b32.xlu0 %v636, 24
    %v669 = vpop.permute.xlu0 %668
    %670 = vrot.lane.b32.xlu0 %v637, 24
    %v671 = vpop.permute.xlu0 %670
    %672 = vrot.lane.b32.xlu0 %v638, 24
    %v673 = vpop.permute.xlu0 %672
    %674 = vrot.lane.b32.xlu0 %v639, 24
    %v675 = vpop.permute.xlu0 %674
    %676 = vrot.lane.b32.xlu0 %v640, 24
    %v677 = vpop.permute.xlu0 %676
    %678 = vrot.lane.b32.xlu0 %v641, 24
    %v679 = vpop.permute.xlu0 %678
    %680 = vrot.lane.b32.xlu0 %v642, 24
    %v681 = vpop.permute.xlu0 %680
    %682 = vrot.lane.b32.xlu0 %v643, 24
    %v683 = vpop.permute.xlu0 %682
    %684 = vrot.lane.b32.xlu0 %v644, 24
    %v685 = vpop.permute.xlu0 %684
    %686 = vrot.lane.b32.xlu0 %v645, 24
    %v687 = vpop.permute.xlu0 %686
    %688 = vrot.lane.b32.xlu0 %v646, 24
    %v689 = vpop.permute.xlu0 %688
    %690 = vrot.lane.b32.xlu0 %v647, 24
    %v691 = vpop.permute.xlu0 %690
    %692 = vrot.lane.b32.xlu0 %v648, 24
    %v693 = vpop.permute.xlu0 %692
    %694 = vrot.lane.b32.xlu0 %v649, 24
    %v695 = vpop.permute.xlu0 %694
    %696 = vrot.lane.b32.xlu0 %v650, 24
    %v697 = vpop.permute.xlu0 %696
    %698 = vrot.lane.b32.xlu0 %v651, 24
    %v699 = vpop.permute.xlu0 %698
    %vm716 = vcmask 228544
    %717 = vst.msk [vmem:[#allocation5] sm:$0xff] %vm716, %v669
    %718 = vst.msk [vmem:[#allocation5 + $0x8] sm:$0xff] %vm716, %v671
    %719 = vst.msk [vmem:[#allocation5 + $0x10] sm:$0xff] %vm716, %v673
    %720 = vst.msk [vmem:[#allocation5 + $0x18] sm:$0xff] %vm716, %v675
    %721 = vst.msk [vmem:[#allocation5 + $0x20] sm:$0xff] %vm716, %v677
    %722 = vst.msk [vmem:[#allocation5 + $0x28] sm:$0xff] %vm716, %v679
    %723 = vst.msk [vmem:[#allocation5 + $0x30] sm:$0xff] %vm716, %v681
    %724 = vst.msk [vmem:[#allocation5 + $0x38] sm:$0xff] %vm716, %v683
    %725 = vst.msk [vmem:[#allocation5 + $0x40] sm:$0xff] %vm716, %v685
    %726 = vst.msk [vmem:[#allocation5 + $0x48] sm:$0xff] %vm716, %v687
    %727 = vst.msk [vmem:[#allocation5 + $0x50] sm:$0xff] %vm716, %v689
    %728 = vst.msk [vmem:[#allocation5 + $0x58] sm:$0xff] %vm716, %v691
    %729 = vst.msk [vmem:[#allocation5 + $0x60] sm:$0xff] %vm716, %v693
    %730 = vst.msk [vmem:[#allocation5 + $0x68] sm:$0xff] %vm716, %v695
    %731 = vst.msk [vmem:[#allocation5 + $0x70] sm:$0xff] %vm716, %v697
    %732 = vst.msk [vmem:[#allocation5 + $0x78] sm:$0xff] %vm716, %v699
    %v733 = vld [vmem:[%s635 + $0x1] sm:$0xff]
    %v734 = vld [vmem:[%s635 + $0x11] sm:$0xff]
    %v735 = vld [vmem:[%s635 + $0x21] sm:$0xff]
    %v736 = vld [vmem:[%s635 + $0x31] sm:$0xff]
    %v737 = vld [vmem:[%s635 + $0x41] sm:$0xff]
    %v738 = vld [vmem:[%s635 + $0x51] sm:$0xff]
    %v739 = vld [vmem:[%s635 + $0x61] sm:$0xff]
    %v740 = vld [vmem:[%s635 + $0x71] sm:$0xff]
    %v741 = vld [vmem:[%s635 + $0xa1] sm:$0xff]
    %v742 = vld [vmem:[%s635 + $0xb1] sm:$0xff]
    %v743 = vld [vmem:[%s635 + $0xc1] sm:$0xff]
    %v744 = vld [vmem:[%s635 + $0xd1] sm:$0xff]
    %v745 = vld [vmem:[%s635 + $0xe1] sm:$0xff]
    %v746 = vld [vmem:[%s635 + $0xf1] sm:$0xff]
    %v747 = vld [vmem:[%s635 + $0x101] sm:$0xff]
    %v748 = vld [vmem:[%s635 + $0x111] sm:$0xff]
    %765 = vrot.lane.b32.xlu0 %v733, 28
    %v766 = vpop.permute.xlu0 %765
    %767 = vrot.lane.b32.xlu0 %v734, 28
    %v768 = vpop.permute.xlu0 %767
    %769 = vrot.lane.b32.xlu0 %v735, 28
    %v770 = vpop.permute.xlu0 %769
    %771 = vrot.lane.b32.xlu0 %v736, 28
    %v772 = vpop.permute.xlu0 %771
    %773 = vrot.lane.b32.xlu0 %v737, 28
    %v774 = vpop.permute.xlu0 %773
    %775 = vrot.lane.b32.xlu0 %v738, 28
    %v776 = vpop.permute.xlu0 %775
    %777 = vrot.lane.b32.xlu0 %v739, 28
    %v778 = vpop.permute.xlu0 %777
    %779 = vrot.lane.b32.xlu0 %v740, 28
    %v780 = vpop.permute.xlu0 %779
    %781 = vrot.lane.b32.xlu0 %v741, 28
    %v782 = vpop.permute.xlu0 %781
    %783 = vrot.lane.b32.xlu0 %v742, 28
    %v784 = vpop.permute.xlu0 %783
    %785 = vrot.lane.b32.xlu0 %v743, 28
    %v786 = vpop.permute.xlu0 %785
    %787 = vrot.lane.b32.xlu0 %v744, 28
    %v788 = vpop.permute.xlu0 %787
    %789 = vrot.lane.b32.xlu0 %v745, 28
    %v790 = vpop.permute.xlu0 %789
    %791 = vrot.lane.b32.xlu0 %v746, 28
    %v792 = vpop.permute.xlu0 %791
    %793 = vrot.lane.b32.xlu0 %v747, 28
    %v794 = vpop.permute.xlu0 %793
    %795 = vrot.lane.b32.xlu0 %v748, 28
    %v796 = vpop.permute.xlu0 %795
    %vm813 = vcmask 261344
    %814 = vst.msk [vmem:[#allocation5] sm:$0xff] %vm813, %v766
    %815 = vst.msk [vmem:[#allocation5 + $0x8] sm:$0xff] %vm813, %v768
    %816 = vst.msk [vmem:[#allocation5 + $0x10] sm:$0xff] %vm813, %v770
    %817 = vst.msk [vmem:[#allocation5 + $0x18] sm:$0xff] %vm813, %v772
    %818 = vst.msk [vmem:[#allocation5 + $0x20] sm:$0xff] %vm813, %v774
    %819 = vst.msk [vmem:[#allocation5 + $0x28] sm:$0xff] %vm813, %v776
    %820 = vst.msk [vmem:[#allocation5 + $0x30] sm:$0xff] %vm813, %v778
    %821 = vst.msk [vmem:[#allocation5 + $0x38] sm:$0xff] %vm813, %v780
    %822 = vst.msk [vmem:[#allocation5 + $0x40] sm:$0xff] %vm813, %v782
    %823 = vst.msk [vmem:[#allocation5 + $0x48] sm:$0xff] %vm813, %v784
    %824 = vst.msk [vmem:[#allocation5 + $0x50] sm:$0xff] %vm813, %v786
    %825 = vst.msk [vmem:[#allocation5 + $0x58] sm:$0xff] %vm813, %v788
    %826 = vst.msk [vmem:[#allocation5 + $0x60] sm:$0xff] %vm813, %v790
    %827 = vst.msk [vmem:[#allocation5 + $0x68] sm:$0xff] %vm813, %v792
    %828 = vst.msk [vmem:[#allocation5 + $0x70] sm:$0xff] %vm813, %v794
    %829 = vst.msk [vmem:[#allocation5 + $0x78] sm:$0xff] %vm813, %v796
    %v830 = vld [vmem:[%s635 + $0x2] sm:$0xff]
    %v831 = vld [vmem:[%s635 + $0x12] sm:$0xff]
    %v832 = vld [vmem:[%s635 + $0x22] sm:$0xff]
    %v833 = vld [vmem:[%s635 + $0x32] sm:$0xff]
    %v834 = vld [vmem:[%s635 + $0x42] sm:$0xff]
    %v835 = vld [vmem:[%s635 + $0x52] sm:$0xff]
    %v836 = vld [vmem:[%s635 + $0x62] sm:$0xff]
    %v837 = vld [vmem:[%s635 + $0x72] sm:$0xff]
    %v838 = vld [vmem:[%s635 + $0xa2] sm:$0xff]
    %v839 = vld [vmem:[%s635 + $0xb2] sm:$0xff]
    %v840 = vld [vmem:[%s635 + $0xc2] sm:$0xff]
    %v841 = vld [vmem:[%s635 + $0xd2] sm:$0xff]
    %v842 = vld [vmem:[%s635 + $0xe2] sm:$0xff]
    %v843 = vld [vmem:[%s635 + $0xf2] sm:$0xff]
    %v844 = vld [vmem:[%s635 + $0x102] sm:$0xff]
    %v845 = vld [vmem:[%s635 + $0x112] sm:$0xff]
    %862 = vrot.lane.b32.xlu0 %v830, 32
    %v863 = vpop.permute.xlu0 %862
    %864 = vrot.lane.b32.xlu0 %v831, 32
    %v865 = vpop.permute.xlu0 %864
    %866 = vrot.lane.b32.xlu0 %v832, 32
    %v867 = vpop.permute.xlu0 %866
    %868 = vrot.lane.b32.xlu0 %v833, 32
    %v869 = vpop.permute.xlu0 %868
    %870 = vrot.lane.b32.xlu0 %v834, 32
    %v871 = vpop.permute.xlu0 %870
    %872 = vrot.lane.b32.xlu0 %v835, 32
    %v873 = vpop.permute.xlu0 %872
    %874 = vrot.lane.b32.xlu0 %v836, 32
    %v875 = vpop.permute.xlu0 %874
    %876 = vrot.lane.b32.xlu0 %v837, 32
    %v877 = vpop.permute.xlu0 %876
    %878 = vrot.lane.b32.xlu0 %v838, 32
    %v879 = vpop.permute.xlu0 %878
    %880 = vrot.lane.b32.xlu0 %v839, 32
    %v881 = vpop.permute.xlu0 %880
    %882 = vrot.lane.b32.xlu0 %v840, 32
    %v883 = vpop.permute.xlu0 %882
    %884 = vrot.lane.b32.xlu0 %v841, 32
    %v885 = vpop.permute.xlu0 %884
    %886 = vrot.lane.b32.xlu0 %v842, 32
    %v887 = vpop.permute.xlu0 %886
    %888 = vrot.lane.b32.xlu0 %v843, 32
    %v889 = vpop.permute.xlu0 %888
    %890 = vrot.lane.b32.xlu0 %v844, 32
    %v891 = vpop.permute.xlu0 %890
    %892 = vrot.lane.b32.xlu0 %v845, 32
    %v893 = vpop.permute.xlu0 %892
    %vm910 = vcmask 294144
    %911 = vst.msk [vmem:[#allocation5] sm:$0xff] %vm910, %v863
    %912 = vst.msk [vmem:[#allocation5 + $0x8] sm:$0xff] %vm910, %v865
    %913 = vst.msk [vmem:[#allocation5 + $0x10] sm:$0xff] %vm910, %v867
    %914 = vst.msk [vmem:[#allocation5 + $0x18] sm:$0xff] %vm910, %v869
    %915 = vst.msk [vmem:[#allocation5 + $0x20] sm:$0xff] %vm910, %v871
    %916 = vst.msk [vmem:[#allocation5 + $0x28] sm:$0xff] %vm910, %v873
    %917 = vst.msk [vmem:[#allocation5 + $0x30] sm:$0xff] %vm910, %v875
    %918 = vst.msk [vmem:[#allocation5 + $0x38] sm:$0xff] %vm910, %v877
    %919 = vst.msk [vmem:[#allocation5 + $0x40] sm:$0xff] %vm910, %v879
    %920 = vst.msk [vmem:[#allocation5 + $0x48] sm:$0xff] %vm910, %v881
    %921 = vst.msk [vmem:[#allocation5 + $0x50] sm:$0xff] %vm910, %v883
    %922 = vst.msk [vmem:[#allocation5 + $0x58] sm:$0xff] %vm910, %v885
    %923 = vst.msk [vmem:[#allocation5 + $0x60] sm:$0xff] %vm910, %v887
    %924 = vst.msk [vmem:[#allocation5 + $0x68] sm:$0xff] %vm910, %v889
    %925 = vst.msk [vmem:[#allocation5 + $0x70] sm:$0xff] %vm910, %v891
    %926 = vst.msk [vmem:[#allocation5 + $0x78] sm:$0xff] %vm910, %v893
    %v927 = vld [vmem:[#allocation5] sm:$0xff]
    %v928 = vld [vmem:[#allocation5 + $0x8] sm:$0xff]
    %v929 = vld [vmem:[#allocation5 + $0x10] sm:$0xff]
    %v930 = vld [vmem:[#allocation5 + $0x18] sm:$0xff]
    %v931 = vld [vmem:[#allocation5 + $0x20] sm:$0xff]
    %v932 = vld [vmem:[#allocation5 + $0x28] sm:$0xff]
    %v933 = vld [vmem:[#allocation5 + $0x30] sm:$0xff]
    %v934 = vld [vmem:[#allocation5 + $0x38] sm:$0xff]
    %v935 = vld [vmem:[#allocation5 + $0x40] sm:$0xff]
    %v936 = vld [vmem:[#allocation5 + $0x48] sm:$0xff]
    %v937 = vld [vmem:[#allocation5 + $0x50] sm:$0xff]
    %v938 = vld [vmem:[#allocation5 + $0x58] sm:$0xff]
    %v939 = vld [vmem:[#allocation5 + $0x60] sm:$0xff]
    %v940 = vld [vmem:[#allocation5 + $0x68] sm:$0xff]
    %v941 = vld [vmem:[#allocation5 + $0x70] sm:$0xff]
    %v942 = vld [vmem:[#allocation5 + $0x78] sm:$0xff]
    %v943 = vld [vmem:[%s1] sm:$0xff]
    %v944 = vld [vmem:[%s1 + $0x8] sm:$0xff]
    %v945 = vld [vmem:[%s1 + $0x10] sm:$0xff]
    %v946 = vld [vmem:[%s1 + $0x18] sm:$0xff]
    %v947 = vld [vmem:[%s1 + $0x20] sm:$0xf]
    %vm948 = vcmask 293888
    %v950 = vsel %vm948, %v927, 0
    %v953 = vsel %vm948, %v928, 0
    %v956 = vsel %vm948, %v929, 0
    %v959 = vsel %vm948, %v930, 0
    %v962 = vsel %vm948, %v931, 0
    %v965 = vsel %vm948, %v932, 0
    %v968 = vsel %vm948, %v933, 0
    %v971 = vsel %vm948, %v934, 0
    %v974 = vsel %vm948, %v935, 0
    %v977 = vsel %vm948, %v936, 0
    %v980 = vsel %vm948, %v937, 0
    %v983 = vsel %vm948, %v938, 0
    %v986 = vsel %vm948, %v939, 0
    %v989 = vsel %vm948, %v940, 0
    %v992 = vsel %vm948, %v941, 0
    %v995 = vsel %vm948, %v942, 0
    %vm997 = vcmask 1043456
    %v999 = vsel %vm997, %v947, 0
    %1001 = vmatpush.msra.mxu0 0.0
    %1002 = vmatpush.msra.mxu0 0.0
    %1003 = vmatpush.msra.mxu0 0.0
    %1004 = vmatpush.msra.mxu0 0.0
    %1005 = vmatpush.msra.mxu0 0.0
    %1006 = vmatpush.msra.mxu0 0.0
    %1007 = vmatpush.msra.mxu0 0.0
    %1008 = vmatpush.msra.mxu0 0.0
    %1009 = vmatpush.msra.mxu0 0.0
    %1010 = vmatpush.msra.mxu0 0.0
    %1011 = vmatpush.msra.mxu0 0.0
    %1012 = vmatpush.msra.mxu0 %v999
    %1013 = vmatpush.msra.mxu0 %v946
    %1014 = vmatpush.msra.mxu0 %v945
    %1015 = vmatpush.msra.mxu0 %v944
    %1016 = vmatpush.msra.mxu0 %v943
    %1017 = vmatmul.f32.gmra.mxu0 %v950
    %v1018 = vpop.f32.mrf.mxu0
    %v1019 = vadd.f32 0.0, %v1018
    %1020 = vmatmul.f32.gmra.mxu0 %v953
    %v1021 = vpop.f32.mrf.mxu0
    %v1022 = vadd.f32 0.0, %v1021
    %1023 = vmatmul.f32.gmra.mxu0 %v956
    %v1024 = vpop.f32.mrf.mxu0
    %v1025 = vadd.f32 0.0, %v1024
    %1026 = vmatmul.f32.gmra.mxu0 %v959
    %v1027 = vpop.f32.mrf.mxu0
    %v1028 = vadd.f32 0.0, %v1027
    %1029 = vmatmul.f32.gmra.mxu0 %v962
    %v1030 = vpop.f32.mrf.mxu0
    %v1031 = vadd.f32 0.0, %v1030
    %1032 = vmatmul.f32.gmra.mxu0 %v965
    %v1033 = vpop.f32.mrf.mxu0
    %v1034 = vadd.f32 0.0, %v1033
    %1035 = vmatmul.f32.gmra.mxu0 %v968
    %v1036 = vpop.f32.mrf.mxu0
    %v1037 = vadd.f32 0.0, %v1036
    %1038 = vmatmul.f32.gmra.mxu0 %v971
    %v1039 = vpop.f32.mrf.mxu0
    %v1040 = vadd.f32 0.0, %v1039
    %1041 = vmatmul.f32.gmra.mxu0 %v974
    %v1042 = vpop.f32.mrf.mxu0
    %v1043 = vadd.f32 0.0, %v1042
    %1044 = vmatmul.f32.gmra.mxu0 %v977
    %v1045 = vpop.f32.mrf.mxu0
    %v1046 = vadd.f32 0.0, %v1045
    %1047 = vmatmul.f32.gmra.mxu0 %v980
    %v1048 = vpop.f32.mrf.mxu0
    %v1049 = vadd.f32 0.0, %v1048
    %1050 = vmatmul.f32.gmra.mxu0 %v983
    %v1051 = vpop.f32.mrf.mxu0
    %v1052 = vadd.f32 0.0, %v1051
    %1053 = vmatmul.f32.gmra.mxu0 %v986
    %v1054 = vpop.f32.mrf.mxu0
    %v1055 = vadd.f32 0.0, %v1054
    %1056 = vmatmul.f32.gmra.mxu0 %v989
    %v1057 = vpop.f32.mrf.mxu0
    %v1058 = vadd.f32 0.0, %v1057
    %1059 = vmatmul.f32.gmra.mxu0 %v992
    %v1060 = vpop.f32.mrf.mxu0
    %v1061 = vadd.f32 0.0, %v1060
    %1062 = vmatmul.f32.gmra.mxu0 %v995
    %v1063 = vpop.f32.mrf.mxu0
    %v1064 = vadd.f32 0.0, %v1063
    %1065 = vdwg.mxu0
    %vm1066 = vcmask 261120
    %v1067 = vsel %vm1066, %v1019, 0.0
    %v1068 = vsel %vm1066, %v1022, 0.0
    %v1069 = vadd.f32 %v1067, %v1068
    %v1070 = vsel %vm1066, %v1025, 0.0
    %v1071 = vadd.f32 %v1069, %v1070
    %v1072 = vsel %vm1066, %v1028, 0.0
    %v1073 = vadd.f32 %v1071, %v1072
    %v1074 = vsel %vm1066, %v1031, 0.0
    %v1075 = vadd.f32 %v1073, %v1074
    %v1076 = vsel %vm1066, %v1034, 0.0
    %v1077 = vadd.f32 %v1075, %v1076
    %v1078 = vsel %vm1066, %v1037, 0.0
    %v1079 = vadd.f32 %v1077, %v1078
    %v1080 = vsel %vm1066, %v1040, 0.0
    %v1081 = vadd.f32 %v1079, %v1080
    %v1082 = vsel %vm1066, %v1043, 0.0
    %v1083 = vadd.f32 %v1081, %v1082
    %v1084 = vsel %vm1066, %v1046, 0.0
    %v1085 = vadd.f32 %v1083, %v1084
    %v1086 = vsel %vm1066, %v1049, 0.0
    %v1087 = vadd.f32 %v1085, %v1086
    %v1088 = vsel %vm1066, %v1052, 0.0
    %v1089 = vadd.f32 %v1087, %v1088
    %v1090 = vsel %vm1066, %v1055, 0.0
    %v1091 = vadd.f32 %v1089, %v1090
    %v1092 = vsel %vm1066, %v1058, 0.0
    %v1093 = vadd.f32 %v1091, %v1092
    %v1094 = vsel %vm1066, %v1061, 0.0
    %v1095 = vadd.f32 %v1093, %v1094
    %v1096 = vsel %vm1066, %v1064, 0.0
    %v1097 = vadd.f32 %v1095, %v1096
    %v1098 = vrot.slane %v1097, 4
    %v1099 = vadd.f32 %v1097, %v1098
    %v1100 = vrot.slane %v1099, 2
    %v1101 = vadd.f32 %v1099, %v1100
    %v1102 = vrot.slane %v1101, 1
    %v1103 = vadd.f32 %v1101, %v1102
    %v1104 = vrcp.pop 128.0
    %v1105 = vmul.f32 128.0, %v1104
    %v1106 = vsub.f32 1.0, %v1105
    %v1107 = vmul.f32 %v1104, %v1106
    %v1108 = vadd.f32 %v1104, %v1107
    %vm1109 = vweird.f32 %v1104
    %v1110 = vsel %vm1109, %v1104, %v1108
    %v1111 = vmul.f32 %v1103, %v1110
    %v1112 = vsub.f32 %v1019, %v1111
    %v1113 = vsub.f32 %v1022, %v1111
    %v1114 = vsub.f32 %v1025, %v1111
    %v1115 = vsub.f32 %v1028, %v1111
    %v1116 = vsub.f32 %v1031, %v1111
    %v1117 = vsub.f32 %v1034, %v1111
    %v1118 = vsub.f32 %v1037, %v1111
    %v1119 = vsub.f32 %v1040, %v1111
    %v1120 = vsub.f32 %v1043, %v1111
    %v1121 = vsub.f32 %v1046, %v1111
    %v1122 = vsub.f32 %v1049, %v1111
    %v1123 = vsub.f32 %v1052, %v1111
    %v1124 = vsub.f32 %v1055, %v1111
    %v1125 = vsub.f32 %v1058, %v1111
    %v1126 = vsub.f32 %v1061, %v1111
    %v1127 = vsub.f32 %v1064, %v1111
    %v1128 = vmul.f32 %v1112, %v1112
    %v1129 = vmul.f32 %v1113, %v1113
    %v1130 = vmul.f32 %v1114, %v1114
    %v1131 = vmul.f32 %v1115, %v1115
    %v1132 = vmul.f32 %v1116, %v1116
    %v1133 = vmul.f32 %v1117, %v1117
    %v1134 = vmul.f32 %v1118, %v1118
    %v1135 = vmul.f32 %v1119, %v1119
    %v1136 = vmul.f32 %v1120, %v1120
    %v1137 = vmul.f32 %v1121, %v1121
    %v1138 = vmul.f32 %v1122, %v1122
    %v1139 = vmul.f32 %v1123, %v1123
    %v1140 = vmul.f32 %v1124, %v1124
    %v1141 = vmul.f32 %v1125, %v1125
    %v1142 = vmul.f32 %v1126, %v1126
    %v1143 = vmul.f32 %v1127, %v1127
    %v1144 = vsel %vm1066, %v1128, 0.0
    %v1145 = vsel %vm1066, %v1129, 0.0
    %v1146 = vadd.f32 %v1144, %v1145
    %v1147 = vsel %vm1066, %v1130, 0.0
    %v1148 = vadd.f32 %v1146, %v1147
    %v1149 = vsel %vm1066, %v1131, 0.0
    %v1150 = vadd.f32 %v1148, %v1149
    %v1151 = vsel %vm1066, %v1132, 0.0
    %v1152 = vadd.f32 %v1150, %v1151
    %v1153 = vsel %vm1066, %v1133, 0.0
    %v1154 = vadd.f32 %v1152, %v1153
    %v1155 = vsel %vm1066, %v1134, 0.0
    %v1156 = vadd.f32 %v1154, %v1155
    %v1157 = vsel %vm1066, %v1135, 0.0
    %v1158 = vadd.f32 %v1156, %v1157
    %v1159 = vsel %vm1066, %v1136, 0.0
    %v1160 = vadd.f32 %v1158, %v1159
    %v1161 = vsel %vm1066, %v1137, 0.0
    %v1162 = vadd.f32 %v1160, %v1161
    %v1163 = vsel %vm1066, %v1138, 0.0
    %v1164 = vadd.f32 %v1162, %v1163
    %v1165 = vsel %vm1066, %v1139, 0.0
    %v1166 = vadd.f32 %v1164, %v1165
    %v1167 = vsel %vm1066, %v1140, 0.0
    %v1168 = vadd.f32 %v1166, %v1167
    %v1169 = vsel %vm1066, %v1141, 0.0
    %v1170 = vadd.f32 %v1168, %v1169
    %v1171 = vsel %vm1066, %v1142, 0.0
    %v1172 = vadd.f32 %v1170, %v1171
    %v1173 = vsel %vm1066, %v1143, 0.0
    %v1174 = vadd.f32 %v1172, %v1173
    %v1175 = vrot.slane %v1174, 4
    %v1176 = vadd.f32 %v1174, %v1175
    %v1177 = vrot.slane %v1176, 2
    %v1178 = vadd.f32 %v1176, %v1177
    %v1179 = vrot.slane %v1178, 1
    %v1180 = vadd.f32 %v1178, %v1179
    %v1181 = vmul.f32 %v1180, %v1110
    %v1182 = vadd.f32 %v1181, 1e-05
    %v1183 = vrsqrt.pop %v1182
    %v1184 = vmul.f32 %v1183, %v1182
    %v1185 = vmul.f32 %v1184, %v1183
    %v1186 = vmul.f32 0.5, %v1185
    %v1187 = vsub.f32 1.5, %v1186
    %v1188 = vmul.f32 %v1183, %v1187
    %vm1189 = vweird.f32 %v1182
    %vm1190 = vweird.f32 %v1183
    %vm1191 = vmor %vm1189, %vm1190
    %v1192 = vsel %vm1191, %v1183, %v1188
    %v1193 = vmul.f32 %v1112, %v1192
    %v1194 = vmul.f32 %v1113, %v1192
    %v1195 = vmul.f32 %v1114, %v1192
    %v1196 = vmul.f32 %v1115, %v1192
    %v1197 = vmul.f32 %v1116, %v1192
    %v1198 = vmul.f32 %v1117, %v1192
    %v1199 = vmul.f32 %v1118, %v1192
    %v1200 = vmul.f32 %v1119, %v1192
    %v1201 = vmul.f32 %v1120, %v1192
    %v1202 = vmul.f32 %v1121, %v1192
    %v1203 = vmul.f32 %v1122, %v1192
    %v1204 = vmul.f32 %v1123, %v1192
    %v1205 = vmul.f32 %v1124, %v1192
    %v1206 = vmul.f32 %v1125, %v1192
    %v1207 = vmul.f32 %v1126, %v1192
    %v1208 = vmul.f32 %v1127, %v1192
    %v1209 = vld [vmem:[%s3] sm:$0x1]
    %v1211 = vperm.slane %v1209, 0
    %v1213 = vmul.f32 %v1193, %v1211
    %v1214 = vmul.f32 %v1194, %v1211
    %v1215 = vmul.f32 %v1195, %v1211
    %v1216 = vmul.f32 %v1196, %v1211
    %v1217 = vmul.f32 %v1197, %v1211
    %v1218 = vmul.f32 %v1198, %v1211
    %v1219 = vmul.f32 %v1199, %v1211
    %v1220 = vmul.f32 %v1200, %v1211
    %v1221 = vmul.f32 %v1201, %v1211
    %v1222 = vmul.f32 %v1202, %v1211
    %v1223 = vmul.f32 %v1203, %v1211
    %v1224 = vmul.f32 %v1204, %v1211
    %v1225 = vmul.f32 %v1205, %v1211
    %v1226 = vmul.f32 %v1206, %v1211
    %v1227 = vmul.f32 %v1207, %v1211
    %v1228 = vmul.f32 %v1208, %v1211
    %v1229 = vld [vmem:[%s4] sm:$0x1]
    %v1231 = vperm.slane %v1229, 0
    %v1233 = vadd.f32 %v1213, %v1231
    %v1234 = vadd.f32 %v1214, %v1231
    %v1235 = vadd.f32 %v1215, %v1231
    %v1236 = vadd.f32 %v1216, %v1231
    %v1237 = vadd.f32 %v1217, %v1231
    %v1238 = vadd.f32 %v1218, %v1231
    %v1239 = vadd.f32 %v1219, %v1231
    %v1240 = vadd.f32 %v1220, %v1231
    %v1241 = vadd.f32 %v1221, %v1231
    %v1242 = vadd.f32 %v1222, %v1231
    %v1243 = vadd.f32 %v1223, %v1231
    %v1244 = vadd.f32 %v1224, %v1231
    %v1245 = vadd.f32 %v1225, %v1231
    %v1246 = vadd.f32 %v1226, %v1231
    %v1247 = vadd.f32 %v1227, %v1231
    %v1248 = vadd.f32 %v1228, %v1231
    %v1249 = vmax.f32 %v1233, 0.0
    %v1250 = vmax.f32 %v1234, 0.0
    %v1251 = vmax.f32 %v1235, 0.0
    %v1252 = vmax.f32 %v1236, 0.0
    %v1253 = vmax.f32 %v1237, 0.0
    %v1254 = vmax.f32 %v1238, 0.0
    %v1255 = vmax.f32 %v1239, 0.0
    %v1256 = vmax.f32 %v1240, 0.0
    %v1257 = vmax.f32 %v1241, 0.0
    %v1258 = vmax.f32 %v1242, 0.0
    %v1259 = vmax.f32 %v1243, 0.0
    %v1260 = vmax.f32 %v1244, 0.0
    %v1261 = vmax.f32 %v1245, 0.0
    %v1262 = vmax.f32 %v1246, 0.0
    %v1263 = vmax.f32 %v1247, 0.0
    %v1264 = vmax.f32 %v1248, 0.0
    %1265 = vst.msk [vmem:[#allocation3] sm:$0xff] %vm1066, 0.0
    %vm1266 = vcmask 254976
    %1267 = vst.msk [vmem:[#allocation3 + $0x8] sm:$0x3] %vm1266, 0.0
    %1268 = vst.msk [vmem:[#allocation3 + $0x10] sm:$0xff] %vm1066, 0.0
    %1269 = vst.msk [vmem:[#allocation3 + $0x18] sm:$0x3] %vm1266, 0.0
    %1270 = vst.msk [vmem:[#allocation3 + $0x20] sm:$0xff] %vm1066, 0.0
    %1271 = vst.msk [vmem:[#allocation3 + $0x28] sm:$0x3] %vm1266, 0.0
    %1272 = vst.msk [vmem:[#allocation3 + $0x30] sm:$0xff] %vm1066, 0.0
    %1273 = vst.msk [vmem:[#allocation3 + $0x38] sm:$0x3] %vm1266, 0.0
    %1274 = vst.msk [vmem:[#allocation3 + $0x40] sm:$0xff] %vm1066, 0.0
    %1275 = vst.msk [vmem:[#allocation3 + $0x48] sm:$0x3] %vm1266, 0.0
    %1276 = vst.msk [vmem:[#allocation3 + $0x50] sm:$0xff] %vm1066, 0.0
    %1277 = vst.msk [vmem:[#allocation3 + $0x58] sm:$0x3] %vm1266, 0.0
    %1278 = vst.msk [vmem:[#allocation3 + $0x60] sm:$0xff] %vm1066, 0.0
    %1279 = vst.msk [vmem:[#allocation3 + $0x68] sm:$0x3] %vm1266, 0.0
    %1280 = vst.msk [vmem:[#allocation3 + $0x70] sm:$0xff] %vm1066, 0.0
    %1281 = vst.msk [vmem:[#allocation3 + $0x78] sm:$0x3] %vm1266, 0.0
    %1282 = vst.msk [vmem:[#allocation3 + $0x80] sm:$0xff] %vm1066, 0.0
    %1283 = vst.msk [vmem:[#allocation3 + $0x88] sm:$0x3] %vm1266, 0.0
    %1284 = vst.msk [vmem:[#allocation3 + $0x90] sm:$0xff] %vm1066, 0.0
    %1285 = vst.msk [vmem:[#allocation3 + $0x98] sm:$0x3] %vm1266, 0.0
    %1286 = vst.msk [vmem:[#allocation3 + $0xa0] sm:$0xff] %vm1066, 0.0
    %1287 = vst.msk [vmem:[#allocation3 + $0xa8] sm:$0x3] %vm1266, 0.0
    %1288 = vst.msk [vmem:[#allocation3 + $0xb0] sm:$0xff] %vm1066, 0.0
    %1289 = vst.msk [vmem:[#allocation3 + $0xb8] sm:$0x3] %vm1266, 0.0
    %1290 = vst.msk [vmem:[#allocation3 + $0xc0] sm:$0xff] %vm1066, 0.0
    %1291 = vst.msk [vmem:[#allocation3 + $0xc8] sm:$0x3] %vm1266, 0.0
    %1292 = vst.msk [vmem:[#allocation3 + $0xd0] sm:$0xff] %vm1066, 0.0
    %1293 = vst.msk [vmem:[#allocation3 + $0xd8] sm:$0x3] %vm1266, 0.0
    %1294 = vst.msk [vmem:[#allocation3 + $0xe0] sm:$0xff] %vm1066, 0.0
    %1295 = vst.msk [vmem:[#allocation3 + $0xe8] sm:$0x3] %vm1266, 0.0
    %1296 = vst.msk [vmem:[#allocation3 + $0xf0] sm:$0xff] %vm1066, 0.0
    %1297 = vst.msk [vmem:[#allocation3 + $0xf8] sm:$0x3] %vm1266, 0.0
    %1298 = vst.msk [vmem:[#allocation3 + $0x100] sm:$0xff] %vm1066, 0.0
    %1299 = vst.msk [vmem:[#allocation3 + $0x108] sm:$0x3] %vm1266, 0.0
    %1300 = vst.msk [vmem:[#allocation3 + $0x110] sm:$0xff] %vm1066, 0.0
    %1301 = vst.msk [vmem:[#allocation3 + $0x118] sm:$0x3] %vm1266, 0.0
    %1302 = vst.msk [vmem:[#allocation3 + $0x120] sm:$0xff] %vm1066, 0.0
    %1303 = vst.msk [vmem:[#allocation3 + $0x128] sm:$0x3] %vm1266, 0.0
    %1304 = vst.msk [vmem:[#allocation3 + $0x130] sm:$0xff] %vm1066, 0.0
    %1305 = vst.msk [vmem:[#allocation3 + $0x138] sm:$0x3] %vm1266, 0.0
    %s1306 = scalar_lea.vmem [#allocation3], 16
    %1307 = vst.msk [vmem:[%s1306 + $0x1] sm:$0xff] %vm1066, %v1249
    %1308 = vst.msk [vmem:[%s1306 + $0x11] sm:$0xff] %vm1066, %v1250
    %1309 = vst.msk [vmem:[%s1306 + $0x21] sm:$0xff] %vm1066, %v1251
    %1310 = vst.msk [vmem:[%s1306 + $0x31] sm:$0xff] %vm1066, %v1252
    %1311 = vst.msk [vmem:[%s1306 + $0x41] sm:$0xff] %vm1066, %v1253
    %1312 = vst.msk [vmem:[%s1306 + $0x51] sm:$0xff] %vm1066, %v1254
    %1313 = vst.msk [vmem:[%s1306 + $0x61] sm:$0xff] %vm1066, %v1255
    %1314 = vst.msk [vmem:[%s1306 + $0x71] sm:$0xff] %vm1066, %v1256
    %1315 = vst.msk [vmem:[%s1306 + $0xa1] sm:$0xff] %vm1066, %v1257
    %1316 = vst.msk [vmem:[%s1306 + $0xb1] sm:$0xff] %vm1066, %v1258
    %1317 = vst.msk [vmem:[%s1306 + $0xc1] sm:$0xff] %vm1066, %v1259
    %1318 = vst.msk [vmem:[%s1306 + $0xd1] sm:$0xff] %vm1066, %v1260
    %1319 = vst.msk [vmem:[%s1306 + $0xe1] sm:$0xff] %vm1066, %v1261
    %1320 = vst.msk [vmem:[%s1306 + $0xf1] sm:$0xff] %vm1066, %v1262
    %1321 = vst.msk [vmem:[%s1306 + $0x101] sm:$0xff] %vm1066, %v1263
    %1322 = vst.msk [vmem:[%s1306 + $0x111] sm:$0xff] %vm1066, %v1264
    %v1323 = vld [vmem:[#allocation3] sm:$0xff]
    %v1324 = vld [vmem:[#allocation3 + $0x10] sm:$0xff]
    %v1325 = vld [vmem:[#allocation3 + $0x20] sm:$0xff]
    %v1326 = vld [vmem:[#allocation3 + $0x30] sm:$0xff]
    %v1327 = vld [vmem:[#allocation3 + $0x40] sm:$0xff]
    %v1328 = vld [vmem:[#allocation3 + $0x50] sm:$0xff]
    %v1329 = vld [vmem:[#allocation3 + $0x60] sm:$0xff]
    %v1330 = vld [vmem:[#allocation3 + $0x70] sm:$0xff]
    %v1331 = vld [vmem:[#allocation3 + $0xa0] sm:$0xff]
    %v1332 = vld [vmem:[#allocation3 + $0xb0] sm:$0xff]
    %v1333 = vld [vmem:[#allocation3 + $0xc0] sm:$0xff]
    %v1334 = vld [vmem:[#allocation3 + $0xd0] sm:$0xff]
    %v1335 = vld [vmem:[#allocation3 + $0xe0] sm:$0xff]
    %v1336 = vld [vmem:[#allocation3 + $0xf0] sm:$0xff]
    %v1337 = vld [vmem:[#allocation3 + $0x100] sm:$0xff]
    %v1338 = vld [vmem:[#allocation3 + $0x110] sm:$0xff]
    %1339 = vst.msk [vmem:[#allocation6] sm:$0xff] %vm1066, %v1323
    %1340 = vst.msk [vmem:[#allocation6 + $0x18] sm:$0xff] %vm1066, %v1324
    %1341 = vst.msk [vmem:[#allocation6 + $0x30] sm:$0xff] %vm1066, %v1325
    %1342 = vst.msk [vmem:[#allocation6 + $0x48] sm:$0xff] %vm1066, %v1326
    %1343 = vst.msk [vmem:[#allocation6 + $0x60] sm:$0xff] %vm1066, %v1327
    %1344 = vst.msk [vmem:[#allocation6 + $0x78] sm:$0xff] %vm1066, %v1328
    %1345 = vst.msk [vmem:[#allocation6 + $0x90] sm:$0xff] %vm1066, %v1329
    %1346 = vst.msk [vmem:[#allocation6 + $0xa8] sm:$0xff] %vm1066, %v1330
    %1347 = vst.msk [vmem:[#allocation6 + $0xc0] sm:$0xff] %vm1066, %v1331
    %1348 = vst.msk [vmem:[#allocation6 + $0xd8] sm:$0xff] %vm1066, %v1332
    %1349 = vst.msk [vmem:[#allocation6 + $0xf0] sm:$0xff] %vm1066, %v1333
    %1350 = vst.msk [vmem:[#allocation6 + $0x108] sm:$0xff] %vm1066, %v1334
    %1351 = vst.msk [vmem:[#allocation6 + $0x120] sm:$0xff] %vm1066, %v1335
    %1352 = vst.msk [vmem:[#allocation6 + $0x138] sm:$0xff] %vm1066, %v1336
    %1353 = vst.msk [vmem:[#allocation6 + $0x150] sm:$0xff] %vm1066, %v1337
    %1354 = vst.msk [vmem:[#allocation6 + $0x168] sm:$0xff] %vm1066, %v1338
    %v1355 = vld [vmem:[#allocation3 + $0x1] sm:$0xff]
    %v1356 = vld [vmem:[#allocation3 + $0x11] sm:$0xff]
    %v1357 = vld [vmem:[#allocation3 + $0x21] sm:$0xff]
    %v1358 = vld [vmem:[#allocation3 + $0x31] sm:$0xff]
    %v1359 = vld [vmem:[#allocation3 + $0x41] sm:$0xff]
    %v1360 = vld [vmem:[#allocation3 + $0x51] sm:$0xff]
    %v1361 = vld [vmem:[#allocation3 + $0x61] sm:$0xff]
    %v1362 = vld [vmem:[#allocation3 + $0x71] sm:$0xff]
    %v1363 = vld [vmem:[#allocation3 + $0xa1] sm:$0xff]
    %v1364 = vld [vmem:[#allocation3 + $0xb1] sm:$0xff]
    %v1365 = vld [vmem:[#allocation3 + $0xc1] sm:$0xff]
    %v1366 = vld [vmem:[#allocation3 + $0xd1] sm:$0xff]
    %v1367 = vld [vmem:[#allocation3 + $0xe1] sm:$0xff]
    %v1368 = vld [vmem:[#allocation3 + $0xf1] sm:$0xff]
    %v1369 = vld [vmem:[#allocation3 + $0x101] sm:$0xff]
    %v1370 = vld [vmem:[#allocation3 + $0x111] sm:$0xff]
    %1387 = vrot.lane.b32.xlu0 %v1355, 32
    %v1388 = vpop.permute.xlu0 %1387
    %1389 = vrot.lane.b32.xlu0 %v1356, 32
    %v1390 = vpop.permute.xlu0 %1389
    %1391 = vrot.lane.b32.xlu0 %v1357, 32
    %v1392 = vpop.permute.xlu0 %1391
    %1393 = vrot.lane.b32.xlu0 %v1358, 32
    %v1394 = vpop.permute.xlu0 %1393
    %1395 = vrot.lane.b32.xlu0 %v1359, 32
    %v1396 = vpop.permute.xlu0 %1395
    %1397 = vrot.lane.b32.xlu0 %v1360, 32
    %v1398 = vpop.permute.xlu0 %1397
    %1399 = vrot.lane.b32.xlu0 %v1361, 32
    %v1400 = vpop.permute.xlu0 %1399
    %1401 = vrot.lane.b32.xlu0 %v1362, 32
    %v1402 = vpop.permute.xlu0 %1401
    %1403 = vrot.lane.b32.xlu0 %v1363, 32
    %v1404 = vpop.permute.xlu0 %1403
    %1405 = vrot.lane.b32.xlu0 %v1364, 32
    %v1406 = vpop.permute.xlu0 %1405
    %1407 = vrot.lane.b32.xlu0 %v1365, 32
    %v1408 = vpop.permute.xlu0 %1407
    %1409 = vrot.lane.b32.xlu0 %v1366, 32
    %v1410 = vpop.permute.xlu0 %1409
    %1411 = vrot.lane.b32.xlu0 %v1367, 32
    %v1412 = vpop.permute.xlu0 %1411
    %1413 = vrot.lane.b32.xlu0 %v1368, 32
    %v1414 = vpop.permute.xlu0 %1413
    %1415 = vrot.lane.b32.xlu0 %v1369, 32
    %v1416 = vpop.permute.xlu0 %1415
    %1417 = vrot.lane.b32.xlu0 %v1370, 32
    %v1418 = vpop.permute.xlu0 %1417
    %vm1435 = vcmask 523520
    %1436 = vst.msk [vmem:[#allocation6] sm:$0xff] %vm1435, %v1388
    %1437 = vst.msk [vmem:[#allocation6 + $0x18] sm:$0xff] %vm1435, %v1390
    %1438 = vst.msk [vmem:[#allocation6 + $0x30] sm:$0xff] %vm1435, %v1392
    %1439 = vst.msk [vmem:[#allocation6 + $0x48] sm:$0xff] %vm1435, %v1394
    %1440 = vst.msk [vmem:[#allocation6 + $0x60] sm:$0xff] %vm1435, %v1396
    %1441 = vst.msk [vmem:[#allocation6 + $0x78] sm:$0xff] %vm1435, %v1398
    %1442 = vst.msk [vmem:[#allocation6 + $0x90] sm:$0xff] %vm1435, %v1400
    %1443 = vst.msk [vmem:[#allocation6 + $0xa8] sm:$0xff] %vm1435, %v1402
    %1444 = vst.msk [vmem:[#allocation6 + $0xc0] sm:$0xff] %vm1435, %v1404
    %1445 = vst.msk [vmem:[#allocation6 + $0xd8] sm:$0xff] %vm1435, %v1406
    %1446 = vst.msk [vmem:[#allocation6 + $0xf0] sm:$0xff] %vm1435, %v1408
    %1447 = vst.msk [vmem:[#allocation6 + $0x108] sm:$0xff] %vm1435, %v1410
    %1448 = vst.msk [vmem:[#allocation6 + $0x120] sm:$0xff] %vm1435, %v1412
    %1449 = vst.msk [vmem:[#allocation6 + $0x138] sm:$0xff] %vm1435, %v1414
    %1450 = vst.msk [vmem:[#allocation6 + $0x150] sm:$0xff] %vm1435, %v1416
    %1451 = vst.msk [vmem:[#allocation6 + $0x168] sm:$0xff] %vm1435, %v1418
    %v1452 = vld [vmem:[#allocation3 + $0x2] sm:$0xff]
    %v1453 = vld [vmem:[#allocation3 + $0x12] sm:$0xff]
    %v1454 = vld [vmem:[#allocation3 + $0x22] sm:$0xff]
    %v1455 = vld [vmem:[#allocation3 + $0x32] sm:$0xff]
    %v1456 = vld [vmem:[#allocation3 + $0x42] sm:$0xff]
    %v1457 = vld [vmem:[#allocation3 + $0x52] sm:$0xff]
    %v1458 = vld [vmem:[#allocation3 + $0x62] sm:$0xff]
    %v1459 = vld [vmem:[#allocation3 + $0x72] sm:$0xff]
    %v1460 = vld [vmem:[#allocation3 + $0xa2] sm:$0xff]
    %v1461 = vld [vmem:[#allocation3 + $0xb2] sm:$0xff]
    %v1462 = vld [vmem:[#allocation3 + $0xc2] sm:$0xff]
    %v1463 = vld [vmem:[#allocation3 + $0xd2] sm:$0xff]
    %v1464 = vld [vmem:[#allocation3 + $0xe2] sm:$0xff]
    %v1465 = vld [vmem:[#allocation3 + $0xf2] sm:$0xff]
    %v1466 = vld [vmem:[#allocation3 + $0x102] sm:$0xff]
    %v1467 = vld [vmem:[#allocation3 + $0x112] sm:$0xff]
    %1484 = vrot.lane.b32.xlu0 %v1452, 64
    %v1485 = vpop.permute.xlu0 %1484
    %1486 = vrot.lane.b32.xlu0 %v1453, 64
    %v1487 = vpop.permute.xlu0 %1486
    %1488 = vrot.lane.b32.xlu0 %v1454, 64
    %v1489 = vpop.permute.xlu0 %1488
    %1490 = vrot.lane.b32.xlu0 %v1455, 64
    %v1491 = vpop.permute.xlu0 %1490
    %1492 = vrot.lane.b32.xlu0 %v1456, 64
    %v1493 = vpop.permute.xlu0 %1492
    %1494 = vrot.lane.b32.xlu0 %v1457, 64
    %v1495 = vpop.permute.xlu0 %1494
    %1496 = vrot.lane.b32.xlu0 %v1458, 64
    %v1497 = vpop.permute.xlu0 %1496
    %1498 = vrot.lane.b32.xlu0 %v1459, 64
    %v1499 = vpop.permute.xlu0 %1498
    %1500 = vrot.lane.b32.xlu0 %v1460, 64
    %v1501 = vpop.permute.xlu0 %1500
    %1502 = vrot.lane.b32.xlu0 %v1461, 64
    %v1503 = vpop.permute.xlu0 %1502
    %1504 = vrot.lane.b32.xlu0 %v1462, 64
    %v1505 = vpop.permute.xlu0 %1504
    %1506 = vrot.lane.b32.xlu0 %v1463, 64
    %v1507 = vpop.permute.xlu0 %1506
    %1508 = vrot.lane.b32.xlu0 %v1464, 64
    %v1509 = vpop.permute.xlu0 %1508
    %1510 = vrot.lane.b32.xlu0 %v1465, 64
    %v1511 = vpop.permute.xlu0 %1510
    %1512 = vrot.lane.b32.xlu0 %v1466, 64
    %v1513 = vpop.permute.xlu0 %1512
    %1514 = vrot.lane.b32.xlu0 %v1467, 64
    %v1515 = vpop.permute.xlu0 %1514
    %vm1532 = vcmask 785920
    %1533 = vst.msk [vmem:[#allocation6] sm:$0xff] %vm1532, %v1485
    %1534 = vst.msk [vmem:[#allocation6 + $0x18] sm:$0xff] %vm1532, %v1487
    %1535 = vst.msk [vmem:[#allocation6 + $0x30] sm:$0xff] %vm1532, %v1489
    %1536 = vst.msk [vmem:[#allocation6 + $0x48] sm:$0xff] %vm1532, %v1491
    %1537 = vst.msk [vmem:[#allocation6 + $0x60] sm:$0xff] %vm1532, %v1493
    %1538 = vst.msk [vmem:[#allocation6 + $0x78] sm:$0xff] %vm1532, %v1495
    %1539 = vst.msk [vmem:[#allocation6 + $0x90] sm:$0xff] %vm1532, %v1497
    %1540 = vst.msk [vmem:[#allocation6 + $0xa8] sm:$0xff] %vm1532, %v1499
    %1541 = vst.msk [vmem:[#allocation6 + $0xc0] sm:$0xff] %vm1532, %v1501
    %1542 = vst.msk [vmem:[#allocation6 + $0xd8] sm:$0xff] %vm1532, %v1503
    %1543 = vst.msk [vmem:[#allocation6 + $0xf0] sm:$0xff] %vm1532, %v1505
    %1544 = vst.msk [vmem:[#allocation6 + $0x108] sm:$0xff] %vm1532, %v1507
    %1545 = vst.msk [vmem:[#allocation6 + $0x120] sm:$0xff] %vm1532, %v1509
    %1546 = vst.msk [vmem:[#allocation6 + $0x138] sm:$0xff] %vm1532, %v1511
    %1547 = vst.msk [vmem:[#allocation6 + $0x150] sm:$0xff] %vm1532, %v1513
    %1548 = vst.msk [vmem:[#allocation6 + $0x168] sm:$0xff] %vm1532, %v1515
    %v1549 = vld [vmem:[%s1306] sm:$0xff]
    %v1550 = vld [vmem:[%s1306 + $0x10] sm:$0xff]
    %v1551 = vld [vmem:[%s1306 + $0x20] sm:$0xff]
    %v1552 = vld [vmem:[%s1306 + $0x30] sm:$0xff]
    %v1553 = vld [vmem:[%s1306 + $0x40] sm:$0xff]
    %v1554 = vld [vmem:[%s1306 + $0x50] sm:$0xff]
    %v1555 = vld [vmem:[%s1306 + $0x60] sm:$0xff]
    %v1556 = vld [vmem:[%s1306 + $0x70] sm:$0xff]
    %v1557 = vld [vmem:[%s1306 + $0xa0] sm:$0xff]
    %v1558 = vld [vmem:[%s1306 + $0xb0] sm:$0xff]
    %v1559 = vld [vmem:[%s1306 + $0xc0] sm:$0xff]
    %v1560 = vld [vmem:[%s1306 + $0xd0] sm:$0xff]
    %v1561 = vld [vmem:[%s1306 + $0xe0] sm:$0xff]
    %v1562 = vld [vmem:[%s1306 + $0xf0] sm:$0xff]
    %v1563 = vld [vmem:[%s1306 + $0x100] sm:$0xff]
    %v1564 = vld [vmem:[%s1306 + $0x110] sm:$0xff]
    %1581 = vrot.lane.b32.xlu0 %v1549, 96
    %v1582 = vpop.permute.xlu0 %1581
    %1583 = vrot.lane.b32.xlu0 %v1550, 96
    %v1584 = vpop.permute.xlu0 %1583
    %1585 = vrot.lane.b32.xlu0 %v1551, 96
    %v1586 = vpop.permute.xlu0 %1585
    %1587 = vrot.lane.b32.xlu0 %v1552, 96
    %v1588 = vpop.permute.xlu0 %1587
    %1589 = vrot.lane.b32.xlu0 %v1553, 96
    %v1590 = vpop.permute.xlu0 %1589
    %1591 = vrot.lane.b32.xlu0 %v1554, 96
    %v1592 = vpop.permute.xlu0 %1591
    %1593 = vrot.lane.b32.xlu0 %v1555, 96
    %v1594 = vpop.permute.xlu0 %1593
    %1595 = vrot.lane.b32.xlu0 %v1556, 96
    %v1596 = vpop.permute.xlu0 %1595
    %1597 = vrot.lane.b32.xlu0 %v1557, 96
    %v1598 = vpop.permute.xlu0 %1597
    %1599 = vrot.lane.b32.xlu0 %v1558, 96
    %v1600 = vpop.permute.xlu0 %1599
    %1601 = vrot.lane.b32.xlu0 %v1559, 96
    %v1602 = vpop.permute.xlu0 %1601
    %1603 = vrot.lane.b32.xlu0 %v1560, 96
    %v1604 = vpop.permute.xlu0 %1603
    %1605 = vrot.lane.b32.xlu0 %v1561, 96
    %v1606 = vpop.permute.xlu0 %1605
    %1607 = vrot.lane.b32.xlu0 %v1562, 96
    %v1608 = vpop.permute.xlu0 %1607
    %1609 = vrot.lane.b32.xlu0 %v1563, 96
    %v1610 = vpop.permute.xlu0 %1609
    %1611 = vrot.lane.b32.xlu0 %v1564, 96
    %v1612 = vpop.permute.xlu0 %1611
    %vm1629 = vcmask 1048320
    %1630 = vst.msk [vmem:[#allocation6] sm:$0xff] %vm1629, %v1582
    %1631 = vst.msk [vmem:[#allocation6 + $0x18] sm:$0xff] %vm1629, %v1584
    %1632 = vst.msk [vmem:[#allocation6 + $0x30] sm:$0xff] %vm1629, %v1586
    %1633 = vst.msk [vmem:[#allocation6 + $0x48] sm:$0xff] %vm1629, %v1588
    %1634 = vst.msk [vmem:[#allocation6 + $0x60] sm:$0xff] %vm1629, %v1590
    %1635 = vst.msk [vmem:[#allocation6 + $0x78] sm:$0xff] %vm1629, %v1592
    %1636 = vst.msk [vmem:[#allocation6 + $0x90] sm:$0xff] %vm1629, %v1594
    %1637 = vst.msk [vmem:[#allocation6 + $0xa8] sm:$0xff] %vm1629, %v1596
    %1638 = vst.msk [vmem:[#allocation6 + $0xc0] sm:$0xff] %vm1629, %v1598
    %1639 = vst.msk [vmem:[#allocation6 + $0xd8] sm:$0xff] %vm1629, %v1600
    %1640 = vst.msk [vmem:[#allocation6 + $0xf0] sm:$0xff] %vm1629, %v1602
    %1641 = vst.msk [vmem:[#allocation6 + $0x108] sm:$0xff] %vm1629, %v1604
    %1642 = vst.msk [vmem:[#allocation6 + $0x120] sm:$0xff] %vm1629, %v1606
    %1643 = vst.msk [vmem:[#allocation6 + $0x138] sm:$0xff] %vm1629, %v1608
    %1644 = vst.msk [vmem:[#allocation6 + $0x150] sm:$0xff] %vm1629, %v1610
    %1645 = vst.msk [vmem:[#allocation6 + $0x168] sm:$0xff] %vm1629, %v1612
    %v1646 = vld [vmem:[%s1306 + $0x1] sm:$0xff]
    %v1647 = vld [vmem:[%s1306 + $0x11] sm:$0xff]
    %v1648 = vld [vmem:[%s1306 + $0x21] sm:$0xff]
    %v1649 = vld [vmem:[%s1306 + $0x31] sm:$0xff]
    %v1650 = vld [vmem:[%s1306 + $0x41] sm:$0xff]
    %v1651 = vld [vmem:[%s1306 + $0x51] sm:$0xff]
    %v1652 = vld [vmem:[%s1306 + $0x61] sm:$0xff]
    %v1653 = vld [vmem:[%s1306 + $0x71] sm:$0xff]
    %v1654 = vld [vmem:[%s1306 + $0xa1] sm:$0xff]
    %v1655 = vld [vmem:[%s1306 + $0xb1] sm:$0xff]
    %v1656 = vld [vmem:[%s1306 + $0xc1] sm:$0xff]
    %v1657 = vld [vmem:[%s1306 + $0xd1] sm:$0xff]
    %v1658 = vld [vmem:[%s1306 + $0xe1] sm:$0xff]
    %v1659 = vld [vmem:[%s1306 + $0xf1] sm:$0xff]
    %v1660 = vld [vmem:[%s1306 + $0x101] sm:$0xff]
    %v1661 = vld [vmem:[%s1306 + $0x111] sm:$0xff]
    %1662 = vst.msk [vmem:[#allocation6 + $0x8] sm:$0xff] %vm1066, %v1646
    %1663 = vst.msk [vmem:[#allocation6 + $0x20] sm:$0xff] %vm1066, %v1647
    %1664 = vst.msk [vmem:[#allocation6 + $0x38] sm:$0xff] %vm1066, %v1648
    %1665 = vst.msk [vmem:[#allocation6 + $0x50] sm:$0xff] %vm1066, %v1649
    %1666 = vst.msk [vmem:[#allocation6 + $0x68] sm:$0xff] %vm1066, %v1650
    %1667 = vst.msk [vmem:[#allocation6 + $0x80] sm:$0xff] %vm1066, %v1651
    %1668 = vst.msk [vmem:[#allocation6 + $0x98] sm:$0xff] %vm1066, %v1652
    %1669 = vst.msk [vmem:[#allocation6 + $0xb0] sm:$0xff] %vm1066, %v1653
    %1670 = vst.msk [vmem:[#allocation6 + $0xc8] sm:$0xff] %vm1066, %v1654
    %1671 = vst.msk [vmem:[#allocation6 + $0xe0] sm:$0xff] %vm1066, %v1655
    %1672 = vst.msk [vmem:[#allocation6 + $0xf8] sm:$0xff] %vm1066, %v1656
    %1673 = vst.msk [vmem:[#allocation6 + $0x110] sm:$0xff] %vm1066, %v1657
    %1674 = vst.msk [vmem:[#allocation6 + $0x128] sm:$0xff] %vm1066, %v1658
    %1675 = vst.msk [vmem:[#allocation6 + $0x140] sm:$0xff] %vm1066, %v1659
    %1676 = vst.msk [vmem:[#allocation6 + $0x158] sm:$0xff] %vm1066, %v1660
    %1677 = vst.msk [vmem:[#allocation6 + $0x170] sm:$0xff] %vm1066, %v1661
    %v1678 = vld [vmem:[%s1306 + $0x2] sm:$0xff]
    %v1679 = vld [vmem:[%s1306 + $0x12] sm:$0xff]
    %v1680 = vld [vmem:[%s1306 + $0x22] sm:$0xff]
    %v1681 = vld [vmem:[%s1306 + $0x32] sm:$0xff]
    %v1682 = vld [vmem:[%s1306 + $0x42] sm:$0xff]
    %v1683 = vld [vmem:[%s1306 + $0x52] sm:$0xff]
    %v1684 = vld [vmem:[%s1306 + $0x62] sm:$0xff]
    %v1685 = vld [vmem:[%s1306 + $0x72] sm:$0xff]
    %v1686 = vld [vmem:[%s1306 + $0xa2] sm:$0xff]
    %v1687 = vld [vmem:[%s1306 + $0xb2] sm:$0xff]
    %v1688 = vld [vmem:[%s1306 + $0xc2] sm:$0xff]
    %v1689 = vld [vmem:[%s1306 + $0xd2] sm:$0xff]
    %v1690 = vld [vmem:[%s1306 + $0xe2] sm:$0xff]
    %v1691 = vld [vmem:[%s1306 + $0xf2] sm:$0xff]
    %v1692 = vld [vmem:[%s1306 + $0x102] sm:$0xff]
    %v1693 = vld [vmem:[%s1306 + $0x112] sm:$0xff]
    %1710 = vrot.lane.b32.xlu0 %v1678, 32
    %v1711 = vpop.permute.xlu0 %1710
    %1712 = vrot.lane.b32.xlu0 %v1679, 32
    %v1713 = vpop.permute.xlu0 %1712
    %1714 = vrot.lane.b32.xlu0 %v1680, 32
    %v1715 = vpop.permute.xlu0 %1714
    %1716 = vrot.lane.b32.xlu0 %v1681, 32
    %v1717 = vpop.permute.xlu0 %1716
    %1718 = vrot.lane.b32.xlu0 %v1682, 32
    %v1719 = vpop.permute.xlu0 %1718
    %1720 = vrot.lane.b32.xlu0 %v1683, 32
    %v1721 = vpop.permute.xlu0 %1720
    %1722 = vrot.lane.b32.xlu0 %v1684, 32
    %v1723 = vpop.permute.xlu0 %1722
    %1724 = vrot.lane.b32.xlu0 %v1685, 32
    %v1725 = vpop.permute.xlu0 %1724
    %1726 = vrot.lane.b32.xlu0 %v1686, 32
    %v1727 = vpop.permute.xlu0 %1726
    %1728 = vrot.lane.b32.xlu0 %v1687, 32
    %v1729 = vpop.permute.xlu0 %1728
    %1730 = vrot.lane.b32.xlu0 %v1688, 32
    %v1731 = vpop.permute.xlu0 %1730
    %1732 = vrot.lane.b32.xlu0 %v1689, 32
    %v1733 = vpop.permute.xlu0 %1732
    %1734 = vrot.lane.b32.xlu0 %v1690, 32
    %v1735 = vpop.permute.xlu0 %1734
    %1736 = vrot.lane.b32.xlu0 %v1691, 32
    %v1737 = vpop.permute.xlu0 %1736
    %1738 = vrot.lane.b32.xlu0 %v1692, 32
    %v1739 = vpop.permute.xlu0 %1738
    %1740 = vrot.lane.b32.xlu0 %v1693, 32
    %v1741 = vpop.permute.xlu0 %1740
    %1758 = vst.msk [vmem:[#allocation6 + $0x8] sm:$0xff] %vm1435, %v1711
    %1759 = vst.msk [vmem:[#allocation6 + $0x20] sm:$0xff] %vm1435, %v1713
    %1760 = vst.msk [vmem:[#allocation6 + $0x38] sm:$0xff] %vm1435, %v1715
    %1761 = vst.msk [vmem:[#allocation6 + $0x50] sm:$0xff] %vm1435, %v1717
    %1762 = vst.msk [vmem:[#allocation6 + $0x68] sm:$0xff] %vm1435, %v1719
    %1763 = vst.msk [vmem:[#allocation6 + $0x80] sm:$0xff] %vm1435, %v1721
    %1764 = vst.msk [vmem:[#allocation6 + $0x98] sm:$0xff] %vm1435, %v1723
    %1765 = vst.msk [vmem:[#allocation6 + $0xb0] sm:$0xff] %vm1435, %v1725
    %1766 = vst.msk [vmem:[#allocation6 + $0xc8] sm:$0xff] %vm1435, %v1727
    %1767 = vst.msk [vmem:[#allocation6 + $0xe0] sm:$0xff] %vm1435, %v1729
    %1768 = vst.msk [vmem:[#allocation6 + $0xf8] sm:$0xff] %vm1435, %v1731
    %1769 = vst.msk [vmem:[#allocation6 + $0x110] sm:$0xff] %vm1435, %v1733
    %1770 = vst.msk [vmem:[#allocation6 + $0x128] sm:$0xff] %vm1435, %v1735
    %1771 = vst.msk [vmem:[#allocation6 + $0x140] sm:$0xff] %vm1435, %v1737
    %1772 = vst.msk [vmem:[#allocation6 + $0x158] sm:$0xff] %vm1435, %v1739
    %1773 = vst.msk [vmem:[#allocation6 + $0x170] sm:$0xff] %vm1435, %v1741
    %s1774 = scalar_lea.vmem [#allocation3], 32
    %v1775 = vld [vmem:[%s1774] sm:$0xff]
    %v1776 = vld [vmem:[%s1774 + $0x10] sm:$0xff]
    %v1777 = vld [vmem:[%s1774 + $0x20] sm:$0xff]
    %v1778 = vld [vmem:[%s1774 + $0x30] sm:$0xff]
    %v1779 = vld [vmem:[%s1774 + $0x40] sm:$0xff]
    %v1780 = vld [vmem:[%s1774 + $0x50] sm:$0xff]
    %v1781 = vld [vmem:[%s1774 + $0x60] sm:$0xff]
    %v1782 = vld [vmem:[%s1774 + $0x70] sm:$0xff]
    %v1783 = vld [vmem:[%s1774 + $0xa0] sm:$0xff]
    %v1784 = vld [vmem:[%s1774 + $0xb0] sm:$0xff]
    %v1785 = vld [vmem:[%s1774 + $0xc0] sm:$0xff]
    %v1786 = vld [vmem:[%s1774 + $0xd0] sm:$0xff]
    %v1787 = vld [vmem:[%s1774 + $0xe0] sm:$0xff]
    %v1788 = vld [vmem:[%s1774 + $0xf0] sm:$0xff]
    %v1789 = vld [vmem:[%s1774 + $0x100] sm:$0xff]
    %v1790 = vld [vmem:[%s1774 + $0x110] sm:$0xff]
    %1807 = vrot.lane.b32.xlu0 %v1775, 64
    %v1808 = vpop.permute.xlu0 %1807
    %1809 = vrot.lane.b32.xlu0 %v1776, 64
    %v1810 = vpop.permute.xlu0 %1809
    %1811 = vrot.lane.b32.xlu0 %v1777, 64
    %v1812 = vpop.permute.xlu0 %1811
    %1813 = vrot.lane.b32.xlu0 %v1778, 64
    %v1814 = vpop.permute.xlu0 %1813
    %1815 = vrot.lane.b32.xlu0 %v1779, 64
    %v1816 = vpop.permute.xlu0 %1815
    %1817 = vrot.lane.b32.xlu0 %v1780, 64
    %v1818 = vpop.permute.xlu0 %1817
    %1819 = vrot.lane.b32.xlu0 %v1781, 64
    %v1820 = vpop.permute.xlu0 %1819
    %1821 = vrot.lane.b32.xlu0 %v1782, 64
    %v1822 = vpop.permute.xlu0 %1821
    %1823 = vrot.lane.b32.xlu0 %v1783, 64
    %v1824 = vpop.permute.xlu0 %1823
    %1825 = vrot.lane.b32.xlu0 %v1784, 64
    %v1826 = vpop.permute.xlu0 %1825
    %1827 = vrot.lane.b32.xlu0 %v1785, 64
    %v1828 = vpop.permute.xlu0 %1827
    %1829 = vrot.lane.b32.xlu0 %v1786, 64
    %v1830 = vpop.permute.xlu0 %1829
    %1831 = vrot.lane.b32.xlu0 %v1787, 64
    %v1832 = vpop.permute.xlu0 %1831
    %1833 = vrot.lane.b32.xlu0 %v1788, 64
    %v1834 = vpop.permute.xlu0 %1833
    %1835 = vrot.lane.b32.xlu0 %v1789, 64
    %v1836 = vpop.permute.xlu0 %1835
    %1837 = vrot.lane.b32.xlu0 %v1790, 64
    %v1838 = vpop.permute.xlu0 %1837
    %1855 = vst.msk [vmem:[#allocation6 + $0x8] sm:$0xff] %vm1532, %v1808
    %1856 = vst.msk [vmem:[#allocation6 + $0x20] sm:$0xff] %vm1532, %v1810
    %1857 = vst.msk [vmem:[#allocation6 + $0x38] sm:$0xff] %vm1532, %v1812
    %1858 = vst.msk [vmem:[#allocation6 + $0x50] sm:$0xff] %vm1532, %v1814
    %1859 = vst.msk [vmem:[#allocation6 + $0x68] sm:$0xff] %vm1532, %v1816
    %1860 = vst.msk [vmem:[#allocation6 + $0x80] sm:$0xff] %vm1532, %v1818
    %1861 = vst.msk [vmem:[#allocation6 + $0x98] sm:$0xff] %vm1532, %v1820
    %1862 = vst.msk [vmem:[#allocation6 + $0xb0] sm:$0xff] %vm1532, %v1822
    %1863 = vst.msk [vmem:[#allocation6 + $0xc8] sm:$0xff] %vm1532, %v1824
    %1864 = vst.msk [vmem:[#allocation6 + $0xe0] sm:$0xff] %vm1532, %v1826
    %1865 = vst.msk [vmem:[#allocation6 + $0xf8] sm:$0xff] %vm1532, %v1828
    %1866 = vst.msk [vmem:[#allocation6 + $0x110] sm:$0xff] %vm1532, %v1830
    %1867 = vst.msk [vmem:[#allocation6 + $0x128] sm:$0xff] %vm1532, %v1832
    %1868 = vst.msk [vmem:[#allocation6 + $0x140] sm:$0xff] %vm1532, %v1834
    %1869 = vst.msk [vmem:[#allocation6 + $0x158] sm:$0xff] %vm1532, %v1836
    %1870 = vst.msk [vmem:[#allocation6 + $0x170] sm:$0xff] %vm1532, %v1838
    %v1871 = vld [vmem:[%s1774 + $0x1] sm:$0xff]
    %v1872 = vld [vmem:[%s1774 + $0x11] sm:$0xff]
    %v1873 = vld [vmem:[%s1774 + $0x21] sm:$0xff]
    %v1874 = vld [vmem:[%s1774 + $0x31] sm:$0xff]
    %v1875 = vld [vmem:[%s1774 + $0x41] sm:$0xff]
    %v1876 = vld [vmem:[%s1774 + $0x51] sm:$0xff]
    %v1877 = vld [vmem:[%s1774 + $0x61] sm:$0xff]
    %v1878 = vld [vmem:[%s1774 + $0x71] sm:$0xff]
    %v1879 = vld [vmem:[%s1774 + $0xa1] sm:$0xff]
    %v1880 = vld [vmem:[%s1774 + $0xb1] sm:$0xff]
    %v1881 = vld [vmem:[%s1774 + $0xc1] sm:$0xff]
    %v1882 = vld [vmem:[%s1774 + $0xd1] sm:$0xff]
    %v1883 = vld [vmem:[%s1774 + $0xe1] sm:$0xff]
    %v1884 = vld [vmem:[%s1774 + $0xf1] sm:$0xff]
    %v1885 = vld [vmem:[%s1774 + $0x101] sm:$0xff]
    %v1886 = vld [vmem:[%s1774 + $0x111] sm:$0xff]
    %1903 = vrot.lane.b32.xlu0 %v1871, 96
    %v1904 = vpop.permute.xlu0 %1903
    %1905 = vrot.lane.b32.xlu0 %v1872, 96
    %v1906 = vpop.permute.xlu0 %1905
    %1907 = vrot.lane.b32.xlu0 %v1873, 96
    %v1908 = vpop.permute.xlu0 %1907
    %1909 = vrot.lane.b32.xlu0 %v1874, 96
    %v1910 = vpop.permute.xlu0 %1909
    %1911 = vrot.lane.b32.xlu0 %v1875, 96
    %v1912 = vpop.permute.xlu0 %1911
    %1913 = vrot.lane.b32.xlu0 %v1876, 96
    %v1914 = vpop.permute.xlu0 %1913
    %1915 = vrot.lane.b32.xlu0 %v1877, 96
    %v1916 = vpop.permute.xlu0 %1915
    %1917 = vrot.lane.b32.xlu0 %v1878, 96
    %v1918 = vpop.permute.xlu0 %1917
    %1919 = vrot.lane.b32.xlu0 %v1879, 96
    %v1920 = vpop.permute.xlu0 %1919
    %1921 = vrot.lane.b32.xlu0 %v1880, 96
    %v1922 = vpop.permute.xlu0 %1921
    %1923 = vrot.lane.b32.xlu0 %v1881, 96
    %v1924 = vpop.permute.xlu0 %1923
    %1925 = vrot.lane.b32.xlu0 %v1882, 96
    %v1926 = vpop.permute.xlu0 %1925
    %1927 = vrot.lane.b32.xlu0 %v1883, 96
    %v1928 = vpop.permute.xlu0 %1927
    %1929 = vrot.lane.b32.xlu0 %v1884, 96
    %v1930 = vpop.permute.xlu0 %1929
    %1931 = vrot.lane.b32.xlu0 %v1885, 96
    %v1932 = vpop.permute.xlu0 %1931
    %1933 = vrot.lane.b32.xlu0 %v1886, 96
    %v1934 = vpop.permute.xlu0 %1933
    %1951 = vst.msk [vmem:[#allocation6 + $0x8] sm:$0xff] %vm1629, %v1904
    %1952 = vst.msk [vmem:[#allocation6 + $0x20] sm:$0xff] %vm1629, %v1906
    %1953 = vst.msk [vmem:[#allocation6 + $0x38] sm:$0xff] %vm1629, %v1908
    %1954 = vst.msk [vmem:[#allocation6 + $0x50] sm:$0xff] %vm1629, %v1910
    %1955 = vst.msk [vmem:[#allocation6 + $0x68] sm:$0xff] %vm1629, %v1912
    %1956 = vst.msk [vmem:[#allocation6 + $0x80] sm:$0xff] %vm1629, %v1914
    %1957 = vst.msk [vmem:[#allocation6 + $0x98] sm:$0xff] %vm1629, %v1916
    %1958 = vst.msk [vmem:[#allocation6 + $0xb0] sm:$0xff] %vm1629, %v1918
    %1959 = vst.msk [vmem:[#allocation6 + $0xc8] sm:$0xff] %vm1629, %v1920
    %1960 = vst.msk [vmem:[#allocation6 + $0xe0] sm:$0xff] %vm1629, %v1922
    %1961 = vst.msk [vmem:[#allocation6 + $0xf8] sm:$0xff] %vm1629, %v1924
    %1962 = vst.msk [vmem:[#allocation6 + $0x110] sm:$0xff] %vm1629, %v1926
    %1963 = vst.msk [vmem:[#allocation6 + $0x128] sm:$0xff] %vm1629, %v1928
    %1964 = vst.msk [vmem:[#allocation6 + $0x140] sm:$0xff] %vm1629, %v1930
    %1965 = vst.msk [vmem:[#allocation6 + $0x158] sm:$0xff] %vm1629, %v1932
    %1966 = vst.msk [vmem:[#allocation6 + $0x170] sm:$0xff] %vm1629, %v1934
    %v1967 = vld [vmem:[%s1774 + $0x2] sm:$0xff]
    %v1968 = vld [vmem:[%s1774 + $0x12] sm:$0xff]
    %v1969 = vld [vmem:[%s1774 + $0x22] sm:$0xff]
    %v1970 = vld [vmem:[%s1774 + $0x32] sm:$0xff]
    %v1971 = vld [vmem:[%s1774 + $0x42] sm:$0xff]
    %v1972 = vld [vmem:[%s1774 + $0x52] sm:$0xff]
    %v1973 = vld [vmem:[%s1774 + $0x62] sm:$0xff]
    %v1974 = vld [vmem:[%s1774 + $0x72] sm:$0xff]
    %v1975 = vld [vmem:[%s1774 + $0xa2] sm:$0xff]
    %v1976 = vld [vmem:[%s1774 + $0xb2] sm:$0xff]
    %v1977 = vld [vmem:[%s1774 + $0xc2] sm:$0xff]
    %v1978 = vld [vmem:[%s1774 + $0xd2] sm:$0xff]
    %v1979 = vld [vmem:[%s1774 + $0xe2] sm:$0xff]
    %v1980 = vld [vmem:[%s1774 + $0xf2] sm:$0xff]
    %v1981 = vld [vmem:[%s1774 + $0x102] sm:$0xff]
    %v1982 = vld [vmem:[%s1774 + $0x112] sm:$0xff]
    %1983 = vst.msk [vmem:[#allocation6 + $0x10] sm:$0xff] %vm1066, %v1967
    %1984 = vst.msk [vmem:[#allocation6 + $0x28] sm:$0xff] %vm1066, %v1968
    %1985 = vst.msk [vmem:[#allocation6 + $0x40] sm:$0xff] %vm1066, %v1969
    %1986 = vst.msk [vmem:[#allocation6 + $0x58] sm:$0xff] %vm1066, %v1970
    %1987 = vst.msk [vmem:[#allocation6 + $0x70] sm:$0xff] %vm1066, %v1971
    %1988 = vst.msk [vmem:[#allocation6 + $0x88] sm:$0xff] %vm1066, %v1972
    %1989 = vst.msk [vmem:[#allocation6 + $0xa0] sm:$0xff] %vm1066, %v1973
    %1990 = vst.msk [vmem:[#allocation6 + $0xb8] sm:$0xff] %vm1066, %v1974
    %1991 = vst.msk [vmem:[#allocation6 + $0xd0] sm:$0xff] %vm1066, %v1975
    %1992 = vst.msk [vmem:[#allocation6 + $0xe8] sm:$0xff] %vm1066, %v1976
    %1993 = vst.msk [vmem:[#allocation6 + $0x100] sm:$0xff] %vm1066, %v1977
    %1994 = vst.msk [vmem:[#allocation6 + $0x118] sm:$0xff] %vm1066, %v1978
    %1995 = vst.msk [vmem:[#allocation6 + $0x130] sm:$0xff] %vm1066, %v1979
    %1996 = vst.msk [vmem:[#allocation6 + $0x148] sm:$0xff] %vm1066, %v1980
    %1997 = vst.msk [vmem:[#allocation6 + $0x160] sm:$0xff] %vm1066, %v1981
    %1998 = vst.msk [vmem:[#allocation6 + $0x178] sm:$0xff] %vm1066, %v1982
    %v1999 = vld [vmem:[#allocation6] sm:$0xff]
    %v2000 = vld [vmem:[#allocation6 + $0x8] sm:$0xff]
    %v2001 = vld [vmem:[#allocation6 + $0x10] sm:$0xff]
    %v2002 = vld [vmem:[#allocation6 + $0x18] sm:$0xff]
    %v2003 = vld [vmem:[#allocation6 + $0x20] sm:$0xff]
    %v2004 = vld [vmem:[#allocation6 + $0x28] sm:$0xff]
    %v2005 = vld [vmem:[#allocation6 + $0x30] sm:$0xff]
    %v2006 = vld [vmem:[#allocation6 + $0x38] sm:$0xff]
    %v2007 = vld [vmem:[#allocation6 + $0x40] sm:$0xff]
    %v2008 = vld [vmem:[#allocation6 + $0x48] sm:$0xff]
    %v2009 = vld [vmem:[#allocation6 + $0x50] sm:$0xff]
    %v2010 = vld [vmem:[#allocation6 + $0x58] sm:$0xff]
    %v2011 = vld [vmem:[#allocation6 + $0x60] sm:$0xff]
    %v2012 = vld [vmem:[#allocation6 + $0x68] sm:$0xff]
    %v2013 = vld [vmem:[#allocation6 + $0x70] sm:$0xff]
    %v2014 = vld [vmem:[#allocation6 + $0x78] sm:$0xff]
    %v2015 = vld [vmem:[#allocation6 + $0x80] sm:$0xff]
    %v2016 = vld [vmem:[#allocation6 + $0x88] sm:$0xff]
    %v2017 = vld [vmem:[#allocation6 + $0x90] sm:$0xff]
    %v2018 = vld [vmem:[#allocation6 + $0x98] sm:$0xff]
    %v2019 = vld [vmem:[#allocation6 + $0xa0] sm:$0xff]
    %v2020 = vld [vmem:[#allocation6 + $0xa8] sm:$0xff]
    %v2021 = vld [vmem:[#allocation6 + $0xb0] sm:$0xff]
    %v2022 = vld [vmem:[#allocation6 + $0xb8] sm:$0xff]
    %v2023 = vld [vmem:[#allocation6 + $0xc0] sm:$0xff]
    %v2024 = vld [vmem:[#allocation6 + $0xc8] sm:$0xff]
    %v2025 = vld [vmem:[#allocation6 + $0xd0] sm:$0xff]
    %v2026 = vld [vmem:[#allocation6 + $0xd8] sm:$0xff]
    %v2027 = vld [vmem:[#allocation6 + $0xe0] sm:$0xff]
    %v2028 = vld [vmem:[#allocation6 + $0xe8] sm:$0xff]
    %v2029 = vld [vmem:[#allocation6 + $0xf0] sm:$0xff]
    %v2030 = vld [vmem:[#allocation6 + $0xf8] sm:$0xff]
    %v2031 = vld [vmem:[#allocation6 + $0x100] sm:$0xff]
    %v2032 = vld [vmem:[#allocation6 + $0x108] sm:$0xff]
    %v2033 = vld [vmem:[#allocation6 + $0x110] sm:$0xff]
    %v2034 = vld [vmem:[#allocation6 + $0x118] sm:$0xff]
    %v2035 = vld [vmem:[#allocation6 + $0x120] sm:$0xff]
    %v2036 = vld [vmem:[#allocation6 + $0x128] sm:$0xff]
    %v2037 = vld [vmem:[#allocation6 + $0x130] sm:$0xff]
    %v2038 = vld [vmem:[#allocation6 + $0x138] sm:$0xff]
    %v2039 = vld [vmem:[#allocation6 + $0x140] sm:$0xff]
    %v2040 = vld [vmem:[#allocation6 + $0x148] sm:$0xff]
    %v2041 = vld [vmem:[#allocation6 + $0x150] sm:$0xff]
    %v2042 = vld [vmem:[#allocation6 + $0x158] sm:$0xff]
    %v2043 = vld [vmem:[#allocation6 + $0x160] sm:$0xff]
    %v2044 = vld [vmem:[#allocation6 + $0x168] sm:$0xff]
    %v2045 = vld [vmem:[#allocation6 + $0x170] sm:$0xff]
    %v2046 = vld [vmem:[#allocation6 + $0x178] sm:$0xff]
    %v2047 = vld [vmem:[%s2] sm:$0xff]
    %v2048 = vld [vmem:[%s2 + $0x8] sm:$0xff]
    %v2049 = vld [vmem:[%s2 + $0x10] sm:$0xff]
    %v2050 = vld [vmem:[%s2 + $0x18] sm:$0xff]
    %v2051 = vld [vmem:[%s2 + $0x20] sm:$0xff]
    %v2052 = vld [vmem:[%s2 + $0x28] sm:$0xff]
    %v2053 = vld [vmem:[%s2 + $0x30] sm:$0xff]
    %v2054 = vld [vmem:[%s2 + $0x38] sm:$0xff]
    %v2055 = vld [vmem:[%s2 + $0x40] sm:$0xff]
    %v2056 = vld [vmem:[%s2 + $0x48] sm:$0xff]
    %v2057 = vld [vmem:[%s2 + $0x50] sm:$0xff]
    %v2058 = vld [vmem:[%s2 + $0x58] sm:$0xff]
    %v2059 = vld [vmem:[%s2 + $0x60] sm:$0xff]
    %v2060 = vld [vmem:[%s2 + $0x68] sm:$0xff]
    %v2061 = vld [vmem:[%s2 + $0x70] sm:$0xff]
    %v2062 = vld [vmem:[%s2 + $0x78] sm:$0xff]
    %v2063 = vld [vmem:[%s2 + $0x80] sm:$0xff]
    %v2064 = vld [vmem:[%s2 + $0x88] sm:$0xff]
    %v2065 = vld [vmem:[%s2 + $0x90] sm:$0xff]
    %v2066 = vld [vmem:[%s2 + $0x98] sm:$0xff]
    %v2067 = vld [vmem:[%s2 + $0xa0] sm:$0xff]
    %v2068 = vld [vmem:[%s2 + $0xa8] sm:$0xff]
    %v2069 = vld [vmem:[%s2 + $0xb0] sm:$0xff]
    %v2070 = vld [vmem:[%s2 + $0xb8] sm:$0xff]
    %v2071 = vld [vmem:[%s2 + $0xc0] sm:$0xff]
    %v2072 = vld [vmem:[%s2 + $0xc8] sm:$0xff]
    %v2073 = vld [vmem:[%s2 + $0xd0] sm:$0xff]
    %v2074 = vld [vmem:[%s2 + $0xd8] sm:$0xff]
    %v2075 = vld [vmem:[%s2 + $0xe0] sm:$0xff]
    %v2076 = vld [vmem:[%s2 + $0xe8] sm:$0xff]
    %v2077 = vld [vmem:[%s2 + $0xf0] sm:$0xff]
    %v2078 = vld [vmem:[%s2 + $0xf8] sm:$0xff]
    %v2079 = vld [vmem:[%s2 + $0x100] sm:$0xff]
    %v2080 = vld [vmem:[%s2 + $0x108] sm:$0xff]
    %v2081 = vld [vmem:[%s2 + $0x110] sm:$0xff]
    %v2082 = vld [vmem:[%s2 + $0x118] sm:$0xff]
    %v2084 = vsel %vm1066, %v2001, 0
    %v2087 = vsel %vm1066, %v2004, 0
    %v2090 = vsel %vm1066, %v2007, 0
    %v2093 = vsel %vm1066, %v2010, 0
    %v2096 = vsel %vm1066, %v2013, 0
    %v2099 = vsel %vm1066, %v2016, 0
    %v2102 = vsel %vm1066, %v2019, 0
    %v2105 = vsel %vm1066, %v2022, 0
    %v2108 = vsel %vm1066, %v2025, 0
    %v2111 = vsel %vm1066, %v2028, 0
    %v2114 = vsel %vm1066, %v2031, 0
    %v2117 = vsel %vm1066, %v2034, 0
    %v2120 = vsel %vm1066, %v2037, 0
    %v2123 = vsel %vm1066, %v2040, 0
    %v2126 = vsel %vm1066, %v2043, 0
    %v2129 = vsel %vm1066, %v2046, 0
    %2131 = vmatpush.msra.mxu0 %v2062
    %2132 = vmatpush.msra.mxu0 %v2061
    %2133 = vmatpush.msra.mxu0 %v2060
    %2134 = vmatpush.msra.mxu0 %v2059
    %2135 = vmatpush.msra.mxu0 %v2058
    %2136 = vmatpush.msra.mxu0 %v2057
    %2137 = vmatpush.msra.mxu0 %v2056
    %2138 = vmatpush.msra.mxu0 %v2055
    %2139 = vmatpush.msra.mxu0 %v2054
    %2140 = vmatpush.msra.mxu0 %v2053
    %2141 = vmatpush.msra.mxu0 %v2052
    %2142 = vmatpush.msra.mxu0 %v2051
    %2143 = vmatpush.msra.mxu0 %v2050
    %2144 = vmatpush.msra.mxu0 %v2049
    %2145 = vmatpush.msra.mxu0 %v2048
    %2146 = vmatpush.msra.mxu0 %v2047
    %2147 = vmatmul.f32.gmra.mxu0 %v1999
    %v2148 = vpop.f32.mrf.mxu0
    %v2149 = vadd.f32 0.0, %v2148
    %2150 = vmatmul.f32.gmra.mxu0 %v2002
    %v2151 = vpop.f32.mrf.mxu0
    %v2152 = vadd.f32 0.0, %v2151
    %2153 = vmatmul.f32.gmra.mxu0 %v2005
    %v2154 = vpop.f32.mrf.mxu0
    %v2155 = vadd.f32 0.0, %v2154
    %2156 = vmatmul.f32.gmra.mxu0 %v2008
    %v2157 = vpop.f32.mrf.mxu0
    %v2158 = vadd.f32 0.0, %v2157
    %2159 = vmatmul.f32.gmra.mxu0 %v2011
    %v2160 = vpop.f32.mrf.mxu0
    %v2161 = vadd.f32 0.0, %v2160
    %2162 = vmatmul.f32.gmra.mxu0 %v2014
    %v2163 = vpop.f32.mrf.mxu0
    %v2164 = vadd.f32 0.0, %v2163
    %2165 = vmatmul.f32.gmra.mxu0 %v2017
    %v2166 = vpop.f32.mrf.mxu0
    %v2167 = vadd.f32 0.0, %v2166
    %2168 = vmatmul.f32.gmra.mxu0 %v2020
    %v2169 = vpop.f32.mrf.mxu0
    %v2170 = vadd.f32 0.0, %v2169
    %2171 = vmatmul.f32.gmra.mxu0 %v2023
    %v2172 = vpop.f32.mrf.mxu0
    %v2173 = vadd.f32 0.0, %v2172
    %2174 = vmatmul.f32.gmra.mxu0 %v2026
    %v2175 = vpop.f32.mrf.mxu0
    %v2176 = vadd.f32 0.0, %v2175
    %2177 = vmatmul.f32.gmra.mxu0 %v2029
    %v2178 = vpop.f32.mrf.mxu0
    %v2179 = vadd.f32 0.0, %v2178
    %2180 = vmatmul.f32.gmra.mxu0 %v2032
    %v2181 = vpop.f32.mrf.mxu0
    %v2182 = vadd.f32 0.0, %v2181
    %2183 = vmatmul.f32.gmra.mxu0 %v2035
    %v2184 = vpop.f32.mrf.mxu0
    %v2185 = vadd.f32 0.0, %v2184
    %2186 = vmatmul.f32.gmra.mxu0 %v2038
    %v2187 = vpop.f32.mrf.mxu0
    %v2188 = vadd.f32 0.0, %v2187
    %2189 = vmatmul.f32.gmra.mxu0 %v2041
    %v2190 = vpop.f32.mrf.mxu0
    %v2191 = vadd.f32 0.0, %v2190
    %2192 = vmatmul.f32.gmra.mxu0 %v2044
    %v2193 = vpop.f32.mrf.mxu0
    %v2194 = vadd.f32 0.0, %v2193
    %2195 = vdwg.mxu0
    %2196 = vmatpush.msra.mxu0 %v2078
    %2197 = vmatpush.msra.mxu0 %v2077
    %2198 = vmatpush.msra.mxu0 %v2076
    %2199 = vmatpush.msra.mxu0 %v2075
    %2200 = vmatpush.msra.mxu0 %v2074
    %2201 = vmatpush.msra.mxu0 %v2073
    %2202 = vmatpush.msra.mxu0 %v2072
    %2203 = vmatpush.msra.mxu0 %v2071
    %2204 = vmatpush.msra.mxu0 %v2070
    %2205 = vmatpush.msra.mxu0 %v2069
    %2206 = vmatpush.msra.mxu0 %v2068
    %2207 = vmatpush.msra.mxu0 %v2067
    %2208 = vmatpush.msra.mxu0 %v2066
    %2209 = vmatpush.msra.mxu0 %v2065
    %2210 = vmatpush.msra.mxu0 %v2064
    %2211 = vmatpush.msra.mxu0 %v2063
    %2212 = vmatmul.f32.gmra.mxu0 %v2000
    %v2213 = vpop.f32.mrf.mxu0
    %v2214 = vadd.f32 %v2149, %v2213
    %2215 = vmatmul.f32.gmra.mxu0 %v2003
    %v2216 = vpop.f32.mrf.mxu0
    %v2217 = vadd.f32 %v2152, %v2216
    %2218 = vmatmul.f32.gmra.mxu0 %v2006
    %v2219 = vpop.f32.mrf.mxu0
    %v2220 = vadd.f32 %v2155, %v2219
    %2221 = vmatmul.f32.gmra.mxu0 %v2009
    %v2222 = vpop.f32.mrf.mxu0
    %v2223 = vadd.f32 %v2158, %v2222
    %2224 = vmatmul.f32.gmra.mxu0 %v2012
    %v2225 = vpop.f32.mrf.mxu0
    %v2226 = vadd.f32 %v2161, %v2225
    %2227 = vmatmul.f32.gmra.mxu0 %v2015
    %v2228 = vpop.f32.mrf.mxu0
    %v2229 = vadd.f32 %v2164, %v2228
    %2230 = vmatmul.f32.gmra.mxu0 %v2018
    %v2231 = vpop.f32.mrf.mxu0
    %v2232 = vadd.f32 %v2167, %v2231
    %2233 = vmatmul.f32.gmra.mxu0 %v2021
    %v2234 = vpop.f32.mrf.mxu0
    %v2235 = vadd.f32 %v2170, %v2234
    %2236 = vmatmul.f32.gmra.mxu0 %v2024
    %v2237 = vpop.f32.mrf.mxu0
    %v2238 = vadd.f32 %v2173, %v2237
    %2239 = vmatmul.f32.gmra.mxu0 %v2027
    %v2240 = vpop.f32.mrf.mxu0
    %v2241 = vadd.f32 %v2176, %v2240
    %2242 = vmatmul.f32.gmra.mxu0 %v2030
    %v2243 = vpop.f32.mrf.mxu0
    %v2244 = vadd.f32 %v2179, %v2243
    %2245 = vmatmul.f32.gmra.mxu0 %v2033
    %v2246 = vpop.f32.mrf.mxu0
    %v2247 = vadd.f32 %v2182, %v2246
    %2248 = vmatmul.f32.gmra.mxu0 %v2036
    %v2249 = vpop.f32.mrf.mxu0
    %v2250 = vadd.f32 %v2185, %v2249
    %2251 = vmatmul.f32.gmra.mxu0 %v2039
    %v2252 = vpop.f32.mrf.mxu0
    %v2253 = vadd.f32 %v2188, %v2252
    %2254 = vmatmul.f32.gmra.mxu0 %v2042
    %v2255 = vpop.f32.mrf.mxu0
    %v2256 = vadd.f32 %v2191, %v2255
    %2257 = vmatmul.f32.gmra.mxu0 %v2045
    %v2258 = vpop.f32.mrf.mxu0
    %v2259 = vadd.f32 %v2194, %v2258
    %2260 = vdwg.mxu0
    %2261 = vmatpush.msra.mxu0 0.0
    %2262 = vmatpush.msra.mxu0 0.0
    %2263 = vmatpush.msra.mxu0 0.0
    %2264 = vmatpush.msra.mxu0 0.0
    %2265 = vmatpush.msra.mxu0 0.0
    %2266 = vmatpush.msra.mxu0 0.0
    %2267 = vmatpush.msra.mxu0 0.0
    %2268 = vmatpush.msra.mxu0 0.0
    %2269 = vmatpush.msra.mxu0 0.0
    %2270 = vmatpush.msra.mxu0 0.0
    %2271 = vmatpush.msra.mxu0 0.0
    %2272 = vmatpush.msra.mxu0 0.0
    %2273 = vmatpush.msra.mxu0 %v2082
    %2274 = vmatpush.msra.mxu0 %v2081
    %2275 = vmatpush.msra.mxu0 %v2080
    %2276 = vmatpush.msra.mxu0 %v2079
    %2277 = vmatmul.f32.gmra.mxu0 %v2084
    %v2278 = vpop.f32.mrf.mxu0
    %v2279 = vadd.f32 %v2214, %v2278
    %2280 = vmatmul.f32.gmra.mxu0 %v2087
    %v2281 = vpop.f32.mrf.mxu0
    %v2282 = vadd.f32 %v2217, %v2281
    %2283 = vmatmul.f32.gmra.mxu0 %v2090
    %v2284 = vpop.f32.mrf.mxu0
    %v2285 = vadd.f32 %v2220, %v2284
    %2286 = vmatmul.f32.gmra.mxu0 %v2093
    %v2287 = vpop.f32.mrf.mxu0
    %v2288 = vadd.f32 %v2223, %v2287
    %2289 = vmatmul.f32.gmra.mxu0 %v2096
    %v2290 = vpop.f32.mrf.mxu0
    %v2291 = vadd.f32 %v2226, %v2290
    %2292 = vmatmul.f32.gmra.mxu0 %v2099
    %v2293 = vpop.f32.mrf.mxu0
    %v2294 = vadd.f32 %v2229, %v2293
    %2295 = vmatmul.f32.gmra.mxu0 %v2102
    %v2296 = vpop.f32.mrf.mxu0
    %v2297 = vadd.f32 %v2232, %v2296
    %2298 = vmatmul.f32.gmra.mxu0 %v2105
    %v2299 = vpop.f32.mrf.mxu0
    %v2300 = vadd.f32 %v2235, %v2299
    %2301 = vmatmul.f32.gmra.mxu0 %v2108
    %v2302 = vpop.f32.mrf.mxu0
    %v2303 = vadd.f32 %v2238, %v2302
    %2304 = vmatmul.f32.gmra.mxu0 %v2111
    %v2305 = vpop.f32.mrf.mxu0
    %v2306 = vadd.f32 %v2241, %v2305
    %2307 = vmatmul.f32.gmra.mxu0 %v2114
    %v2308 = vpop.f32.mrf.mxu0
    %v2309 = vadd.f32 %v2244, %v2308
    %2310 = vmatmul.f32.gmra.mxu0 %v2117
    %v2311 = vpop.f32.mrf.mxu0
    %v2312 = vadd.f32 %v2247, %v2311
    %2313 = vmatmul.f32.gmra.mxu0 %v2120
    %v2314 = vpop.f32.mrf.mxu0
    %v2315 = vadd.f32 %v2250, %v2314
    %2316 = vmatmul.f32.gmra.mxu0 %v2123
    %v2317 = vpop.f32.mrf.mxu0
    %v2318 = vadd.f32 %v2253, %v2317
    %2319 = vmatmul.f32.gmra.mxu0 %v2126
    %v2320 = vpop.f32.mrf.mxu0
    %v2321 = vadd.f32 %v2256, %v2320
    %2322 = vmatmul.f32.gmra.mxu0 %v2129
    %v2323 = vpop.f32.mrf.mxu0
    %v2324 = vadd.f32 %v2259, %v2323
    %2325 = vdwg.mxu0
    %v2326 = vsel %vm1066, %v2279, 0.0
    %v2327 = vsel %vm1066, %v2282, 0.0
    %v2328 = vadd.f32 %v2326, %v2327
    %v2329 = vsel %vm1066, %v2285, 0.0
    %v2330 = vadd.f32 %v2328, %v2329
    %v2331 = vsel %vm1066, %v2288, 0.0
    %v2332 = vadd.f32 %v2330, %v2331
    %v2333 = vsel %vm1066, %v2291, 0.0
    %v2334 = vadd.f32 %v2332, %v2333
    %v2335 = vsel %vm1066, %v2294, 0.0
    %v2336 = vadd.f32 %v2334, %v2335
    %v2337 = vsel %vm1066, %v2297, 0.0
    %v2338 = vadd.f32 %v2336, %v2337
    %v2339 = vsel %vm1066, %v2300, 0.0
    %v2340 = vadd.f32 %v2338, %v2339
    %v2341 = vsel %vm1066, %v2303, 0.0
    %v2342 = vadd.f32 %v2340, %v2341
    %v2343 = vsel %vm1066, %v2306, 0.0
    %v2344 = vadd.f32 %v2342, %v2343
    %v2345 = vsel %vm1066, %v2309, 0.0
    %v2346 = vadd.f32 %v2344, %v2345
    %v2347 = vsel %vm1066, %v2312, 0.0
    %v2348 = vadd.f32 %v2346, %v2347
    %v2349 = vsel %vm1066, %v2315, 0.0
    %v2350 = vadd.f32 %v2348, %v2349
    %v2351 = vsel %vm1066, %v2318, 0.0
    %v2352 = vadd.f32 %v2350, %v2351
    %v2353 = vsel %vm1066, %v2321, 0.0
    %v2354 = vadd.f32 %v2352, %v2353
    %v2355 = vsel %vm1066, %v2324, 0.0
    %v2356 = vadd.f32 %v2354, %v2355
    %v2357 = vrot.slane %v2356, 4
    %v2358 = vadd.f32 %v2356, %v2357
    %v2359 = vrot.slane %v2358, 2
    %v2360 = vadd.f32 %v2358, %v2359
    %v2361 = vrot.slane %v2360, 1
    %v2362 = vadd.f32 %v2360, %v2361
    %v2363 = vmul.f32 %v2362, %v1110
    %v2364 = vsub.f32 %v2279, %v2363
    %v2365 = vsub.f32 %v2282, %v2363
    %v2366 = vsub.f32 %v2285, %v2363
    %v2367 = vsub.f32 %v2288, %v2363
    %v2368 = vsub.f32 %v2291, %v2363
    %v2369 = vsub.f32 %v2294, %v2363
    %v2370 = vsub.f32 %v2297, %v2363
    %v2371 = vsub.f32 %v2300, %v2363
    %v2372 = vsub.f32 %v2303, %v2363
    %v2373 = vsub.f32 %v2306, %v2363
    %v2374 = vsub.f32 %v2309, %v2363
    %v2375 = vsub.f32 %v2312, %v2363
    %v2376 = vsub.f32 %v2315, %v2363
    %v2377 = vsub.f32 %v2318, %v2363
    %v2378 = vsub.f32 %v2321, %v2363
    %v2379 = vsub.f32 %v2324, %v2363
    %v2380 = vmul.f32 %v2364, %v2364
    %v2381 = vmul.f32 %v2365, %v2365
    %v2382 = vmul.f32 %v2366, %v2366
    %v2383 = vmul.f32 %v2367, %v2367
    %v2384 = vmul.f32 %v2368, %v2368
    %v2385 = vmul.f32 %v2369, %v2369
    %v2386 = vmul.f32 %v2370, %v2370
    %v2387 = vmul.f32 %v2371, %v2371
    %v2388 = vmul.f32 %v2372, %v2372
    %v2389 = vmul.f32 %v2373, %v2373
    %v2390 = vmul.f32 %v2374, %v2374
    %v2391 = vmul.f32 %v2375, %v2375
    %v2392 = vmul.f32 %v2376, %v2376
    %v2393 = vmul.f32 %v2377, %v2377
    %v2394 = vmul.f32 %v2378, %v2378
    %v2395 = vmul.f32 %v2379, %v2379
    %v2396 = vsel %vm1066, %v2380, 0.0
    %v2397 = vsel %vm1066, %v2381, 0.0
    %v2398 = vadd.f32 %v2396, %v2397
    %v2399 = vsel %vm1066, %v2382, 0.0
    %v2400 = vadd.f32 %v2398, %v2399
    %v2401 = vsel %vm1066, %v2383, 0.0
    %v2402 = vadd.f32 %v2400, %v2401
    %v2403 = vsel %vm1066, %v2384, 0.0
    %v2404 = vadd.f32 %v2402, %v2403
    %v2405 = vsel %vm1066, %v2385, 0.0
    %v2406 = vadd.f32 %v2404, %v2405
    %v2407 = vsel %vm1066, %v2386, 0.0
    %v2408 = vadd.f32 %v2406, %v2407
    %v2409 = vsel %vm1066, %v2387, 0.0
    %v2410 = vadd.f32 %v2408, %v2409
    %v2411 = vsel %vm1066, %v2388, 0.0
    %v2412 = vadd.f32 %v2410, %v2411
    %v2413 = vsel %vm1066, %v2389, 0.0
    %v2414 = vadd.f32 %v2412, %v2413
    %v2415 = vsel %vm1066, %v2390, 0.0
    %v2416 = vadd.f32 %v2414, %v2415
    %v2417 = vsel %vm1066, %v2391, 0.0
    %v2418 = vadd.f32 %v2416, %v2417
    %v2419 = vsel %vm1066, %v2392, 0.0
    %v2420 = vadd.f32 %v2418, %v2419
    %v2421 = vsel %vm1066, %v2393, 0.0
    %v2422 = vadd.f32 %v2420, %v2421
    %v2423 = vsel %vm1066, %v2394, 0.0
    %v2424 = vadd.f32 %v2422, %v2423
    %v2425 = vsel %vm1066, %v2395, 0.0
    %v2426 = vadd.f32 %v2424, %v2425
    %v2427 = vrot.slane %v2426, 4
    %v2428 = vadd.f32 %v2426, %v2427
    %v2429 = vrot.slane %v2428, 2
    %v2430 = vadd.f32 %v2428, %v2429
    %v2431 = vrot.slane %v2430, 1
    %v2432 = vadd.f32 %v2430, %v2431
    %v2433 = vmul.f32 %v2432, %v1110
    %v2434 = vadd.f32 %v2433, 1e-05
    %v2435 = vrsqrt.pop %v2434
    %v2436 = vmul.f32 %v2435, %v2434
    %v2437 = vmul.f32 %v2436, %v2435
    %v2438 = vmul.f32 0.5, %v2437
    %v2439 = vsub.f32 1.5, %v2438
    %v2440 = vmul.f32 %v2435, %v2439
    %vm2441 = vweird.f32 %v2434
    %vm2442 = vweird.f32 %v2435
    %vm2443 = vmor %vm2441, %vm2442
    %v2444 = vsel %vm2443, %v2435, %v2440
    %v2445 = vmul.f32 %v2364, %v2444
    %v2446 = vmul.f32 %v2365, %v2444
    %v2447 = vmul.f32 %v2366, %v2444
    %v2448 = vmul.f32 %v2367, %v2444
    %v2449 = vmul.f32 %v2368, %v2444
    %v2450 = vmul.f32 %v2369, %v2444
    %v2451 = vmul.f32 %v2370, %v2444
    %v2452 = vmul.f32 %v2371, %v2444
    %v2453 = vmul.f32 %v2372, %v2444
    %v2454 = vmul.f32 %v2373, %v2444
    %v2455 = vmul.f32 %v2374, %v2444
    %v2456 = vmul.f32 %v2375, %v2444
    %v2457 = vmul.f32 %v2376, %v2444
    %v2458 = vmul.f32 %v2377, %v2444
    %v2459 = vmul.f32 %v2378, %v2444
    %v2460 = vmul.f32 %v2379, %v2444
    %v2461 = vld [vmem:[%s3] sm:$0x1]
    %v2463 = vperm.slane %v2461, 0
    %v2465 = vmul.f32 %v2445, %v2463
    %v2466 = vmul.f32 %v2446, %v2463
    %v2467 = vmul.f32 %v2447, %v2463
    %v2468 = vmul.f32 %v2448, %v2463
    %v2469 = vmul.f32 %v2449, %v2463
    %v2470 = vmul.f32 %v2450, %v2463
    %v2471 = vmul.f32 %v2451, %v2463
    %v2472 = vmul.f32 %v2452, %v2463
    %v2473 = vmul.f32 %v2453, %v2463
    %v2474 = vmul.f32 %v2454, %v2463
    %v2475 = vmul.f32 %v2455, %v2463
    %v2476 = vmul.f32 %v2456, %v2463
    %v2477 = vmul.f32 %v2457, %v2463
    %v2478 = vmul.f32 %v2458, %v2463
    %v2479 = vmul.f32 %v2459, %v2463
    %v2480 = vmul.f32 %v2460, %v2463
    %v2481 = vld [vmem:[%s4] sm:$0x1]
    %v2483 = vperm.slane %v2481, 0
    %v2485 = vadd.f32 %v2465, %v2483
    %v2486 = vadd.f32 %v2466, %v2483
    %v2487 = vadd.f32 %v2467, %v2483
    %v2488 = vadd.f32 %v2468, %v2483
    %v2489 = vadd.f32 %v2469, %v2483
    %v2490 = vadd.f32 %v2470, %v2483
    %v2491 = vadd.f32 %v2471, %v2483
    %v2492 = vadd.f32 %v2472, %v2483
    %v2493 = vadd.f32 %v2473, %v2483
    %v2494 = vadd.f32 %v2474, %v2483
    %v2495 = vadd.f32 %v2475, %v2483
    %v2496 = vadd.f32 %v2476, %v2483
    %v2497 = vadd.f32 %v2477, %v2483
    %v2498 = vadd.f32 %v2478, %v2483
    %v2499 = vadd.f32 %v2479, %v2483
    %v2500 = vadd.f32 %v2480, %v2483
    %v2501 = vmax.f32 %v2485, 0.0
    %v2502 = vmax.f32 %v2486, 0.0
    %v2503 = vmax.f32 %v2487, 0.0
    %v2504 = vmax.f32 %v2488, 0.0
    %v2505 = vmax.f32 %v2489, 0.0
    %v2506 = vmax.f32 %v2490, 0.0
    %v2507 = vmax.f32 %v2491, 0.0
    %v2508 = vmax.f32 %v2492, 0.0
    %v2509 = vmax.f32 %v2493, 0.0
    %v2510 = vmax.f32 %v2494, 0.0
    %v2511 = vmax.f32 %v2495, 0.0
    %v2512 = vmax.f32 %v2496, 0.0
    %v2513 = vmax.f32 %v2497, 0.0
    %v2514 = vmax.f32 %v2498, 0.0
    %v2515 = vmax.f32 %v2499, 0.0
    %v2516 = vmax.f32 %v2500, 0.0
    %2517 = vst.msk [vmem:[#allocation4] sm:$0xff] %vm1066, -inf
    %2518 = vst.msk [vmem:[#allocation4 + $0x8] sm:$0x3] %vm1266, -inf
    %2519 = vst.msk [vmem:[#allocation4 + $0x10] sm:$0xff] %vm1066, -inf
    %2520 = vst.msk [vmem:[#allocation4 + $0x18] sm:$0x3] %vm1266, -inf
    %2521 = vst.msk [vmem:[#allocation4 + $0x20] sm:$0xff] %vm1066, -inf
    %2522 = vst.msk [vmem:[#allocation4 + $0x28] sm:$0x3] %vm1266, -inf
    %2523 = vst.msk [vmem:[#allocation4 + $0x30] sm:$0xff] %vm1066, -inf
    %2524 = vst.msk [vmem:[#allocation4 + $0x38] sm:$0x3] %vm1266, -inf
    %2525 = vst.msk [vmem:[#allocation4 + $0x40] sm:$0xff] %vm1066, -inf
    %2526 = vst.msk [vmem:[#allocation4 + $0x48] sm:$0x3] %vm1266, -inf
    %2527 = vst.msk [vmem:[#allocation4 + $0x50] sm:$0xff] %vm1066, -inf
    %2528 = vst.msk [vmem:[#allocation4 + $0x58] sm:$0x3] %vm1266, -inf
    %2529 = vst.msk [vmem:[#allocation4 + $0x60] sm:$0xff] %vm1066, -inf
    %2530 = vst.msk [vmem:[#allocation4 + $0x68] sm:$0x3] %vm1266, -inf
    %2531 = vst.msk [vmem:[#allocation4 + $0x70] sm:$0xff] %vm1066, -inf
    %2532 = vst.msk [vmem:[#allocation4 + $0x78] sm:$0x3] %vm1266, -inf
    %2533 = vst.msk [vmem:[#allocation4 + $0x80] sm:$0xff] %vm1066, -inf
    %2534 = vst.msk [vmem:[#allocation4 + $0x88] sm:$0x3] %vm1266, -inf
    %2535 = vst.msk [vmem:[#allocation4 + $0x90] sm:$0xff] %vm1066, -inf
    %2536 = vst.msk [vmem:[#allocation4 + $0x98] sm:$0x3] %vm1266, -inf
    %2537 = vst.msk [vmem:[#allocation4 + $0xa0] sm:$0xff] %vm1066, -inf
    %2538 = vst.msk [vmem:[#allocation4 + $0xa8] sm:$0x3] %vm1266, -inf
    %2539 = vst.msk [vmem:[#allocation4 + $0xb0] sm:$0xff] %vm1066, -inf
    %2540 = vst.msk [vmem:[#allocation4 + $0xb8] sm:$0x3] %vm1266, -inf
    %2541 = vst.msk [vmem:[#allocation4 + $0xc0] sm:$0xff] %vm1066, -inf
    %2542 = vst.msk [vmem:[#allocation4 + $0xc8] sm:$0x3] %vm1266, -inf
    %2543 = vst.msk [vmem:[#allocation4 + $0xd0] sm:$0xff] %vm1066, -inf
    %2544 = vst.msk [vmem:[#allocation4 + $0xd8] sm:$0x3] %vm1266, -inf
    %2545 = vst.msk [vmem:[#allocation4 + $0xe0] sm:$0xff] %vm1066, -inf
    %2546 = vst.msk [vmem:[#allocation4 + $0xe8] sm:$0x3] %vm1266, -inf
    %2547 = vst.msk [vmem:[#allocation4 + $0xf0] sm:$0xff] %vm1066, -inf
    %2548 = vst.msk [vmem:[#allocation4 + $0xf8] sm:$0x3] %vm1266, -inf
    %2549 = vst.msk [vmem:[#allocation4 + $0x100] sm:$0xff] %vm1066, -inf
    %2550 = vst.msk [vmem:[#allocation4 + $0x108] sm:$0x3] %vm1266, -inf
    %2551 = vst.msk [vmem:[#allocation4 + $0x110] sm:$0xff] %vm1066, -inf
    %2552 = vst.msk [vmem:[#allocation4 + $0x118] sm:$0x3] %vm1266, -inf
    %2553 = vst.msk [vmem:[#allocation4 + $0x120] sm:$0xff] %vm1066, -inf
    %2554 = vst.msk [vmem:[#allocation4 + $0x128] sm:$0x3] %vm1266, -inf
    %2555 = vst.msk [vmem:[#allocation4 + $0x130] sm:$0xff] %vm1066, -inf
    %2556 = vst.msk [vmem:[#allocation4 + $0x138] sm:$0x3] %vm1266, -inf
    %s2557 = scalar_lea.vmem [#allocation4], 16
    %2558 = vst.msk [vmem:[%s2557 + $0x1] sm:$0xff] %vm1066, %v2501
    %2559 = vst.msk [vmem:[%s2557 + $0x11] sm:$0xff] %vm1066, %v2502
    %2560 = vst.msk [vmem:[%s2557 + $0x21] sm:$0xff] %vm1066, %v2503
    %2561 = vst.msk [vmem:[%s2557 + $0x31] sm:$0xff] %vm1066, %v2504
    %2562 = vst.msk [vmem:[%s2557 + $0x41] sm:$0xff] %vm1066, %v2505
    %2563 = vst.msk [vmem:[%s2557 + $0x51] sm:$0xff] %vm1066, %v2506
    %2564 = vst.msk [vmem:[%s2557 + $0x61] sm:$0xff] %vm1066, %v2507
    %2565 = vst.msk [vmem:[%s2557 + $0x71] sm:$0xff] %vm1066, %v2508
    %2566 = vst.msk [vmem:[%s2557 + $0xa1] sm:$0xff] %vm1066, %v2509
    %2567 = vst.msk [vmem:[%s2557 + $0xb1] sm:$0xff] %vm1066, %v2510
    %2568 = vst.msk [vmem:[%s2557 + $0xc1] sm:$0xff] %vm1066, %v2511
    %2569 = vst.msk [vmem:[%s2557 + $0xd1] sm:$0xff] %vm1066, %v2512
    %2570 = vst.msk [vmem:[%s2557 + $0xe1] sm:$0xff] %vm1066, %v2513
    %2571 = vst.msk [vmem:[%s2557 + $0xf1] sm:$0xff] %vm1066, %v2514
    %2572 = vst.msk [vmem:[%s2557 + $0x101] sm:$0xff] %vm1066, %v2515
    %2573 = vst.msk [vmem:[%s2557 + $0x111] sm:$0xff] %vm1066, %v2516
    %v2574 = vld [vmem:[#allocation4] sm:$0xff]
    %v2575 = vld [vmem:[#allocation4 + $0x10] sm:$0xff]
    %v2576 = vld [vmem:[#allocation4 + $0x20] sm:$0xff]
    %v2577 = vld [vmem:[#allocation4 + $0x30] sm:$0xff]
    %v2578 = vld [vmem:[#allocation4 + $0x40] sm:$0xff]
    %v2579 = vld [vmem:[#allocation4 + $0x50] sm:$0xff]
    %v2580 = vld [vmem:[#allocation4 + $0x60] sm:$0xff]
    %v2581 = vld [vmem:[#allocation4 + $0x70] sm:$0xff]
    %v2582 = vld [vmem:[#allocation4 + $0xa0] sm:$0xff]
    %v2583 = vld [vmem:[#allocation4 + $0xb0] sm:$0xff]
    %v2584 = vld [vmem:[#allocation4 + $0xc0] sm:$0xff]
    %v2585 = vld [vmem:[#allocation4 + $0xd0] sm:$0xff]
    %v2586 = vld [vmem:[#allocation4 + $0xe0] sm:$0xff]
    %v2587 = vld [vmem:[#allocation4 + $0xf0] sm:$0xff]
    %v2588 = vld [vmem:[#allocation4 + $0x100] sm:$0xff]
    %v2589 = vld [vmem:[#allocation4 + $0x110] sm:$0xff]
    %v2590 = vld [vmem:[#allocation4 + $0x1] sm:$0xff]
    %v2591 = vld [vmem:[#allocation4 + $0x11] sm:$0xff]
    %v2592 = vld [vmem:[#allocation4 + $0x21] sm:$0xff]
    %v2593 = vld [vmem:[#allocation4 + $0x31] sm:$0xff]
    %v2594 = vld [vmem:[#allocation4 + $0x41] sm:$0xff]
    %v2595 = vld [vmem:[#allocation4 + $0x51] sm:$0xff]
    %v2596 = vld [vmem:[#allocation4 + $0x61] sm:$0xff]
    %v2597 = vld [vmem:[#allocation4 + $0x71] sm:$0xff]
    %v2598 = vld [vmem:[#allocation4 + $0xa1] sm:$0xff]
    %v2599 = vld [vmem:[#allocation4 + $0xb1] sm:$0xff]
    %v2600 = vld [vmem:[#allocation4 + $0xc1] sm:$0xff]
    %v2601 = vld [vmem:[#allocation4 + $0xd1] sm:$0xff]
    %v2602 = vld [vmem:[#allocation4 + $0xe1] sm:$0xff]
    %v2603 = vld [vmem:[#allocation4 + $0xf1] sm:$0xff]
    %v2604 = vld [vmem:[#allocation4 + $0x101] sm:$0xff]
    %v2605 = vld [vmem:[#allocation4 + $0x111] sm:$0xff]
    %v2606 = vmax.f32 %v2574, %v2590
    %v2607 = vmax.f32 %v2575, %v2591
    %v2608 = vmax.f32 %v2576, %v2592
    %v2609 = vmax.f32 %v2577, %v2593
    %v2610 = vmax.f32 %v2578, %v2594
    %v2611 = vmax.f32 %v2579, %v2595
    %v2612 = vmax.f32 %v2580, %v2596
    %v2613 = vmax.f32 %v2581, %v2597
    %v2614 = vmax.f32 %v2582, %v2598
    %v2615 = vmax.f32 %v2583, %v2599
    %v2616 = vmax.f32 %v2584, %v2600
    %v2617 = vmax.f32 %v2585, %v2601
    %v2618 = vmax.f32 %v2586, %v2602
    %v2619 = vmax.f32 %v2587, %v2603
    %v2620 = vmax.f32 %v2588, %v2604
    %v2621 = vmax.f32 %v2589, %v2605
    %v2622 = vld [vmem:[#allocation4 + $0x2] sm:$0xff]
    %v2623 = vld [vmem:[#allocation4 + $0x12] sm:$0xff]
    %v2624 = vld [vmem:[#allocation4 + $0x22] sm:$0xff]
    %v2625 = vld [vmem:[#allocation4 + $0x32] sm:$0xff]
    %v2626 = vld [vmem:[#allocation4 + $0x42] sm:$0xff]
    %v2627 = vld [vmem:[#allocation4 + $0x52] sm:$0xff]
    %v2628 = vld [vmem:[#allocation4 + $0x62] sm:$0xff]
    %v2629 = vld [vmem:[#allocation4 + $0x72] sm:$0xff]
    %v2630 = vld [vmem:[#allocation4 + $0xa2] sm:$0xff]
    %v2631 = vld [vmem:[#allocation4 + $0xb2] sm:$0xff]
    %v2632 = vld [vmem:[#allocation4 + $0xc2] sm:$0xff]
    %v2633 = vld [vmem:[#allocation4 + $0xd2] sm:$0xff]
    %v2634 = vld [vmem:[#allocation4 + $0xe2] sm:$0xff]
    %v2635 = vld [vmem:[#allocation4 + $0xf2] sm:$0xff]
    %v2636 = vld [vmem:[#allocation4 + $0x102] sm:$0xff]
    %v2637 = vld [vmem:[#allocation4 + $0x112] sm:$0xff]
    %v2638 = vmax.f32 %v2606, %v2622
    %v2639 = vmax.f32 %v2607, %v2623
    %v2640 = vmax.f32 %v2608, %v2624
    %v2641 = vmax.f32 %v2609, %v2625
    %v2642 = vmax.f32 %v2610, %v2626
    %v2643 = vmax.f32 %v2611, %v2627
    %v2644 = vmax.f32 %v2612, %v2628
    %v2645 = vmax.f32 %v2613, %v2629
    %v2646 = vmax.f32 %v2614, %v2630
    %v2647 = vmax.f32 %v2615, %v2631
    %v2648 = vmax.f32 %v2616, %v2632
    %v2649 = vmax.f32 %v2617, %v2633
    %v2650 = vmax.f32 %v2618, %v2634
    %v2651 = vmax.f32 %v2619, %v2635
    %v2652 = vmax.f32 %v2620, %v2636
    %v2653 = vmax.f32 %v2621, %v2637
    %v2654 = vld [vmem:[%s2557] sm:$0xff]
    %v2655 = vld [vmem:[%s2557 + $0x10] sm:$0xff]
    %v2656 = vld [vmem:[%s2557 + $0x20] sm:$0xff]
    %v2657 = vld [vmem:[%s2557 + $0x30] sm:$0xff]
    %v2658 = vld [vmem:[%s2557 + $0x40] sm:$0xff]
    %v2659 = vld [vmem:[%s2557 + $0x50] sm:$0xff]
    %v2660 = vld [vmem:[%s2557 + $0x60] sm:$0xff]
    %v2661 = vld [vmem:[%s2557 + $0x70] sm:$0xff]
    %v2662 = vld [vmem:[%s2557 + $0xa0] sm:$0xff]
    %v2663 = vld [vmem:[%s2557 + $0xb0] sm:$0xff]
    %v2664 = vld [vmem:[%s2557 + $0xc0] sm:$0xff]
    %v2665 = vld [vmem:[%s2557 + $0xd0] sm:$0xff]
    %v2666 = vld [vmem:[%s2557 + $0xe0] sm:$0xff]
    %v2667 = vld [vmem:[%s2557 + $0xf0] sm:$0xff]
    %v2668 = vld [vmem:[%s2557 + $0x100] sm:$0xff]
    %v2669 = vld [vmem:[%s2557 + $0x110] sm:$0xff]
    %v2670 = vmax.f32 %v2638, %v2654
    %v2671 = vmax.f32 %v2639, %v2655
    %v2672 = vmax.f32 %v2640, %v2656
    %v2673 = vmax.f32 %v2641, %v2657
    %v2674 = vmax.f32 %v2642, %v2658
    %v2675 = vmax.f32 %v2643, %v2659
    %v2676 = vmax.f32 %v2644, %v2660
    %v2677 = vmax.f32 %v2645, %v2661
    %v2678 = vmax.f32 %v2646, %v2662
    %v2679 = vmax.f32 %v2647, %v2663
    %v2680 = vmax.f32 %v2648, %v2664
    %v2681 = vmax.f32 %v2649, %v2665
    %v2682 = vmax.f32 %v2650, %v2666
    %v2683 = vmax.f32 %v2651, %v2667
    %v2684 = vmax.f32 %v2652, %v2668
    %v2685 = vmax.f32 %v2653, %v2669
    %v2686 = vld [vmem:[%s2557 + $0x1] sm:$0xff]
    %v2687 = vld [vmem:[%s2557 + $0x11] sm:$0xff]
    %v2688 = vld [vmem:[%s2557 + $0x21] sm:$0xff]
    %v2689 = vld [vmem:[%s2557 + $0x31] sm:$0xff]
    %v2690 = vld [vmem:[%s2557 + $0x41] sm:$0xff]
    %v2691 = vld [vmem:[%s2557 + $0x51] sm:$0xff]
    %v2692 = vld [vmem:[%s2557 + $0x61] sm:$0xff]
    %v2693 = vld [vmem:[%s2557 + $0x71] sm:$0xff]
    %v2694 = vld [vmem:[%s2557 + $0xa1] sm:$0xff]
    %v2695 = vld [vmem:[%s2557 + $0xb1] sm:$0xff]
    %v2696 = vld [vmem:[%s2557 + $0xc1] sm:$0xff]
    %v2697 = vld [vmem:[%s2557 + $0xd1] sm:$0xff]
    %v2698 = vld [vmem:[%s2557 + $0xe1] sm:$0xff]
    %v2699 = vld [vmem:[%s2557 + $0xf1] sm:$0xff]
    %v2700 = vld [vmem:[%s2557 + $0x101] sm:$0xff]
    %v2701 = vld [vmem:[%s2557 + $0x111] sm:$0xff]
    %v2702 = vmax.f32 %v2670, %v2686
    %v2703 = vmax.f32 %v2671, %v2687
    %v2704 = vmax.f32 %v2672, %v2688
    %v2705 = vmax.f32 %v2673, %v2689
    %v2706 = vmax.f32 %v2674, %v2690
    %v2707 = vmax.f32 %v2675, %v2691
    %v2708 = vmax.f32 %v2676, %v2692
    %v2709 = vmax.f32 %v2677, %v2693
    %v2710 = vmax.f32 %v2678, %v2694
    %v2711 = vmax.f32 %v2679, %v2695
    %v2712 = vmax.f32 %v2680, %v2696
    %v2713 = vmax.f32 %v2681, %v2697
    %v2714 = vmax.f32 %v2682, %v2698
    %v2715 = vmax.f32 %v2683, %v2699
    %v2716 = vmax.f32 %v2684, %v2700
    %v2717 = vmax.f32 %v2685, %v2701
    %v2718 = vld [vmem:[%s2557 + $0x2] sm:$0xff]
    %v2719 = vld [vmem:[%s2557 + $0x12] sm:$0xff]
    %v2720 = vld [vmem:[%s2557 + $0x22] sm:$0xff]
    %v2721 = vld [vmem:[%s2557 + $0x32] sm:$0xff]
    %v2722 = vld [vmem:[%s2557 + $0x42] sm:$0xff]
    %v2723 = vld [vmem:[%s2557 + $0x52] sm:$0xff]
    %v2724 = vld [vmem:[%s2557 + $0x62] sm:$0xff]
    %v2725 = vld [vmem:[%s2557 + $0x72] sm:$0xff]
    %v2726 = vld [vmem:[%s2557 + $0xa2] sm:$0xff]
    %v2727 = vld [vmem:[%s2557 + $0xb2] sm:$0xff]
    %v2728 = vld [vmem:[%s2557 + $0xc2] sm:$0xff]
    %v2729 = vld [vmem:[%s2557 + $0xd2] sm:$0xff]
    %v2730 = vld [vmem:[%s2557 + $0xe2] sm:$0xff]
    %v2731 = vld [vmem:[%s2557 + $0xf2] sm:$0xff]
    %v2732 = vld [vmem:[%s2557 + $0x102] sm:$0xff]
    %v2733 = vld [vmem:[%s2557 + $0x112] sm:$0xff]
    %v2734 = vmax.f32 %v2702, %v2718
    %v2735 = vmax.f32 %v2703, %v2719
    %v2736 = vmax.f32 %v2704, %v2720
    %v2737 = vmax.f32 %v2705, %v2721
    %v2738 = vmax.f32 %v2706, %v2722
    %v2739 = vmax.f32 %v2707, %v2723
    %v2740 = vmax.f32 %v2708, %v2724
    %v2741 = vmax.f32 %v2709, %v2725
    %v2742 = vmax.f32 %v2710, %v2726
    %v2743 = vmax.f32 %v2711, %v2727
    %v2744 = vmax.f32 %v2712, %v2728
    %v2745 = vmax.f32 %v2713, %v2729
    %v2746 = vmax.f32 %v2714, %v2730
    %v2747 = vmax.f32 %v2715, %v2731
    %v2748 = vmax.f32 %v2716, %v2732
    %v2749 = vmax.f32 %v2717, %v2733
    %s2750 = scalar_lea.vmem [#allocation4], 32
    %v2751 = vld [vmem:[%s2750] sm:$0xff]
    %v2752 = vld [vmem:[%s2750 + $0x10] sm:$0xff]
    %v2753 = vld [vmem:[%s2750 + $0x20] sm:$0xff]
    %v2754 = vld [vmem:[%s2750 + $0x30] sm:$0xff]
    %v2755 = vld [vmem:[%s2750 + $0x40] sm:$0xff]
    %v2756 = vld [vmem:[%s2750 + $0x50] sm:$0xff]
    %v2757 = vld [vmem:[%s2750 + $0x60] sm:$0xff]
    %v2758 = vld [vmem:[%s2750 + $0x70] sm:$0xff]
    %v2759 = vld [vmem:[%s2750 + $0xa0] sm:$0xff]
    %v2760 = vld [vmem:[%s2750 + $0xb0] sm:$0xff]
    %v2761 = vld [vmem:[%s2750 + $0xc0] sm:$0xff]
    %v2762 = vld [vmem:[%s2750 + $0xd0] sm:$0xff]
    %v2763 = vld [vmem:[%s2750 + $0xe0] sm:$0xff]
    %v2764 = vld [vmem:[%s2750 + $0xf0] sm:$0xff]
    %v2765 = vld [vmem:[%s2750 + $0x100] sm:$0xff]
    %v2766 = vld [vmem:[%s2750 + $0x110] sm:$0xff]
    %v2767 = vmax.f32 %v2734, %v2751
    %v2768 = vmax.f32 %v2735, %v2752
    %v2769 = vmax.f32 %v2736, %v2753
    %v2770 = vmax.f32 %v2737, %v2754
    %v2771 = vmax.f32 %v2738, %v2755
    %v2772 = vmax.f32 %v2739, %v2756
    %v2773 = vmax.f32 %v2740, %v2757
    %v2774 = vmax.f32 %v2741, %v2758
    %v2775 = vmax.f32 %v2742, %v2759
    %v2776 = vmax.f32 %v2743, %v2760
    %v2777 = vmax.f32 %v2744, %v2761
    %v2778 = vmax.f32 %v2745, %v2762
    %v2779 = vmax.f32 %v2746, %v2763
    %v2780 = vmax.f32 %v2747, %v2764
    %v2781 = vmax.f32 %v2748, %v2765
    %v2782 = vmax.f32 %v2749, %v2766
    %v2783 = vld [vmem:[%s2750 + $0x1] sm:$0xff]
    %v2784 = vld [vmem:[%s2750 + $0x11] sm:$0xff]
    %v2785 = vld [vmem:[%s2750 + $0x21] sm:$0xff]
    %v2786 = vld [vmem:[%s2750 + $0x31] sm:$0xff]
    %v2787 = vld [vmem:[%s2750 + $0x41] sm:$0xff]
    %v2788 = vld [vmem:[%s2750 + $0x51] sm:$0xff]
    %v2789 = vld [vmem:[%s2750 + $0x61] sm:$0xff]
    %v2790 = vld [vmem:[%s2750 + $0x71] sm:$0xff]
    %v2791 = vld [vmem:[%s2750 + $0xa1] sm:$0xff]
    %v2792 = vld [vmem:[%s2750 + $0xb1] sm:$0xff]
    %v2793 = vld [vmem:[%s2750 + $0xc1] sm:$0xff]
    %v2794 = vld [vmem:[%s2750 + $0xd1] sm:$0xff]
    %v2795 = vld [vmem:[%s2750 + $0xe1] sm:$0xff]
    %v2796 = vld [vmem:[%s2750 + $0xf1] sm:$0xff]
    %v2797 = vld [vmem:[%s2750 + $0x101] sm:$0xff]
    %v2798 = vld [vmem:[%s2750 + $0x111] sm:$0xff]
    %v2799 = vmax.f32 %v2767, %v2783
    %v2800 = vmax.f32 %v2768, %v2784
    %v2801 = vmax.f32 %v2769, %v2785
    %v2802 = vmax.f32 %v2770, %v2786
    %v2803 = vmax.f32 %v2771, %v2787
    %v2804 = vmax.f32 %v2772, %v2788
    %v2805 = vmax.f32 %v2773, %v2789
    %v2806 = vmax.f32 %v2774, %v2790
    %v2807 = vmax.f32 %v2775, %v2791
    %v2808 = vmax.f32 %v2776, %v2792
    %v2809 = vmax.f32 %v2777, %v2793
    %v2810 = vmax.f32 %v2778, %v2794
    %v2811 = vmax.f32 %v2779, %v2795
    %v2812 = vmax.f32 %v2780, %v2796
    %v2813 = vmax.f32 %v2781, %v2797
    %v2814 = vmax.f32 %v2782, %v2798
    %v2815 = vld [vmem:[%s2750 + $0x2] sm:$0xff]
    %v2816 = vld [vmem:[%s2750 + $0x12] sm:$0xff]
    %v2817 = vld [vmem:[%s2750 + $0x22] sm:$0xff]
    %v2818 = vld [vmem:[%s2750 + $0x32] sm:$0xff]
    %v2819 = vld [vmem:[%s2750 + $0x42] sm:$0xff]
    %v2820 = vld [vmem:[%s2750 + $0x52] sm:$0xff]
    %v2821 = vld [vmem:[%s2750 + $0x62] sm:$0xff]
    %v2822 = vld [vmem:[%s2750 + $0x72] sm:$0xff]
    %v2823 = vld [vmem:[%s2750 + $0xa2] sm:$0xff]
    %v2824 = vld [vmem:[%s2750 + $0xb2] sm:$0xff]
    %v2825 = vld [vmem:[%s2750 + $0xc2] sm:$0xff]
    %v2826 = vld [vmem:[%s2750 + $0xd2] sm:$0xff]
    %v2827 = vld [vmem:[%s2750 + $0xe2] sm:$0xff]
    %v2828 = vld [vmem:[%s2750 + $0xf2] sm:$0xff]
    %v2829 = vld [vmem:[%s2750 + $0x102] sm:$0xff]
    %v2830 = vld [vmem:[%s2750 + $0x112] sm:$0xff]
    %v2831 = vmax.f32 %v2799, %v2815
    %v2832 = vmax.f32 %v2800, %v2816
    %v2833 = vmax.f32 %v2801, %v2817
    %v2834 = vmax.f32 %v2802, %v2818
    %v2835 = vmax.f32 %v2803, %v2819
    %v2836 = vmax.f32 %v2804, %v2820
    %v2837 = vmax.f32 %v2805, %v2821
    %v2838 = vmax.f32 %v2806, %v2822
    %v2839 = vmax.f32 %v2807, %v2823
    %v2840 = vmax.f32 %v2808, %v2824
    %v2841 = vmax.f32 %v2809, %v2825
    %v2842 = vmax.f32 %v2810, %v2826
    %v2843 = vmax.f32 %v2811, %v2827
    %v2844 = vmax.f32 %v2812, %v2828
    %v2845 = vmax.f32 %v2813, %v2829
    %v2846 = vmax.f32 %v2814, %v2830
    %v2847 = vld [vmem:[%s5] sm:$0xff]
    %v2848 = vld [vmem:[%s5 + $0x8] sm:$0xff]
    %v2849 = vld [vmem:[%s5 + $0x10] sm:$0xff]
    %v2850 = vld [vmem:[%s5 + $0x18] sm:$0xff]
    %v2851 = vld [vmem:[%s6] sm:$0x1]
    %v2853 = vperm.slane %v2851, 0
    %v2856 = vsel %vm1066, %v2831, 0
    %v2859 = vsel %vm1066, %v2832, 0
    %v2862 = vsel %vm1066, %v2833, 0
    %v2865 = vsel %vm1066, %v2834, 0
    %v2868 = vsel %vm1066, %v2835, 0
    %v2871 = vsel %vm1066, %v2836, 0
    %v2874 = vsel %vm1066, %v2837, 0
    %v2877 = vsel %vm1066, %v2838, 0
    %v2880 = vsel %vm1066, %v2839, 0
    %v2883 = vsel %vm1066, %v2840, 0
    %v2886 = vsel %vm1066, %v2841, 0
    %v2889 = vsel %vm1066, %v2842, 0
    %v2892 = vsel %vm1066, %v2843, 0
    %v2895 = vsel %vm1066, %v2844, 0
    %v2898 = vsel %vm1066, %v2845, 0
    %v2901 = vsel %vm1066, %v2846, 0
    %2903 = vmatpush.msra.mxu0 0.0
    %2904 = vmatpush.msra.mxu0 0.0
    %2905 = vmatpush.msra.mxu0 0.0
    %2906 = vmatpush.msra.mxu0 0.0
    %2907 = vmatpush.msra.mxu0 0.0
    %2908 = vmatpush.msra.mxu0 0.0
    %2909 = vmatpush.msra.mxu0 0.0
    %2910 = vmatpush.msra.mxu0 0.0
    %2911 = vmatpush.msra.mxu0 0.0
    %2912 = vmatpush.msra.mxu0 0.0
    %2913 = vmatpush.msra.mxu0 0.0
    %2914 = vmatpush.msra.mxu0 0.0
    %2915 = vmatpush.msra.mxu0 %v2850
    %2916 = vmatpush.msra.mxu0 %v2849
    %2917 = vmatpush.msra.mxu0 %v2848
    %2918 = vmatpush.msra.mxu0 %v2847
    %2919 = vmatmul.f32.gmra.mxu0 %v2856
    %v2920 = vpop.f32.mrf.mxu0
    %v2921 = vadd.f32 %v2853, %v2920
    %2922 = vmatmul.f32.gmra.mxu0 %v2859
    %v2923 = vpop.f32.mrf.mxu0
    %v2924 = vadd.f32 %v2853, %v2923
    %2925 = vmatmul.f32.gmra.mxu0 %v2862
    %v2926 = vpop.f32.mrf.mxu0
    %v2927 = vadd.f32 %v2853, %v2926
    %2928 = vmatmul.f32.gmra.mxu0 %v2865
    %v2929 = vpop.f32.mrf.mxu0
    %v2930 = vadd.f32 %v2853, %v2929
    %2931 = vmatmul.f32.gmra.mxu0 %v2868
    %v2932 = vpop.f32.mrf.mxu0
    %v2933 = vadd.f32 %v2853, %v2932
    %2934 = vmatmul.f32.gmra.mxu0 %v2871
    %v2935 = vpop.f32.mrf.mxu0
    %v2936 = vadd.f32 %v2853, %v2935
    %2937 = vmatmul.f32.gmra.mxu0 %v2874
    %v2938 = vpop.f32.mrf.mxu0
    %v2939 = vadd.f32 %v2853, %v2938
    %2940 = vmatmul.f32.gmra.mxu0 %v2877
    %v2941 = vpop.f32.mrf.mxu0
    %v2942 = vadd.f32 %v2853, %v2941
    %2943 = vmatmul.f32.gmra.mxu0 %v2880
    %v2944 = vpop.f32.mrf.mxu0
    %v2945 = vadd.f32 %v2853, %v2944
    %2946 = vmatmul.f32.gmra.mxu0 %v2883
    %v2947 = vpop.f32.mrf.mxu0
    %v2948 = vadd.f32 %v2853, %v2947
    %2949 = vmatmul.f32.gmra.mxu0 %v2886
    %v2950 = vpop.f32.mrf.mxu0
    %v2951 = vadd.f32 %v2853, %v2950
    %2952 = vmatmul.f32.gmra.mxu0 %v2889
    %v2953 = vpop.f32.mrf.mxu0
    %v2954 = vadd.f32 %v2853, %v2953
    %2955 = vmatmul.f32.gmra.mxu0 %v2892
    %v2956 = vpop.f32.mrf.mxu0
    %v2957 = vadd.f32 %v2853, %v2956
    %2958 = vmatmul.f32.gmra.mxu0 %v2895
    %v2959 = vpop.f32.mrf.mxu0
    %v2960 = vadd.f32 %v2853, %v2959
    %2961 = vmatmul.f32.gmra.mxu0 %v2898
    %v2962 = vpop.f32.mrf.mxu0
    %v2963 = vadd.f32 %v2853, %v2962
    %2964 = vmatmul.f32.gmra.mxu0 %v2901
    %v2965 = vpop.f32.mrf.mxu0
    %v2966 = vadd.f32 %v2853, %v2965
    %2967 = vdwg.mxu0
    %v2968 = vmax.f32 %v2921, 0.0
    %v2969 = vmax.f32 %v2924, 0.0
    %v2970 = vmax.f32 %v2927, 0.0
    %v2971 = vmax.f32 %v2930, 0.0
    %v2972 = vmax.f32 %v2933, 0.0
    %v2973 = vmax.f32 %v2936, 0.0
    %v2974 = vmax.f32 %v2939, 0.0
    %v2975 = vmax.f32 %v2942, 0.0
    %v2976 = vmax.f32 %v2945, 0.0
    %v2977 = vmax.f32 %v2948, 0.0
    %v2978 = vmax.f32 %v2951, 0.0
    %v2979 = vmax.f32 %v2954, 0.0
    %v2980 = vmax.f32 %v2957, 0.0
    %v2981 = vmax.f32 %v2960, 0.0
    %v2982 = vmax.f32 %v2963, 0.0
    %v2983 = vmax.f32 %v2966, 0.0
    %3000 = vset.pattern.permute.xlu0 0
    %3001 = vperm.xlu0 %3000, %v2968
    %v3002 = vpop.permute.xlu0 %3001
    %3003 = vset.pattern.permute.xlu0 0
    %3004 = vperm.xlu0 %3003, %v2969
    %v3005 = vpop.permute.xlu0 %3004
    %3006 = vset.pattern.permute.xlu0 0
    %3007 = vperm.xlu0 %3006, %v2970
    %v3008 = vpop.permute.xlu0 %3007
    %3009 = vset.pattern.permute.xlu0 0
    %3010 = vperm.xlu0 %3009, %v2971
    %v3011 = vpop.permute.xlu0 %3010
    %3012 = vset.pattern.permute.xlu0 0
    %3013 = vperm.xlu0 %3012, %v2972
    %v3014 = vpop.permute.xlu0 %3013
    %3015 = vset.pattern.permute.xlu0 0
    %3016 = vperm.xlu0 %3015, %v2973
    %v3017 = vpop.permute.xlu0 %3016
    %3018 = vset.pattern.permute.xlu0 0
    %3019 = vperm.xlu0 %3018, %v2974
    %v3020 = vpop.permute.xlu0 %3019
    %3021 = vset.pattern.permute.xlu0 0
    %3022 = vperm.xlu0 %3021, %v2975
    %v3023 = vpop.permute.xlu0 %3022
    %3024 = vset.pattern.permute.xlu0 0
    %3025 = vperm.xlu0 %3024, %v2976
    %v3026 = vpop.permute.xlu0 %3025
    %3027 = vset.pattern.permute.xlu0 0
    %3028 = vperm.xlu0 %3027, %v2977
    %v3029 = vpop.permute.xlu0 %3028
    %3030 = vset.pattern.permute.xlu0 0
    %3031 = vperm.xlu0 %3030, %v2978
    %v3032 = vpop.permute.xlu0 %3031
    %3033 = vset.pattern.permute.xlu0 0
    %3034 = vperm.xlu0 %3033, %v2979
    %v3035 = vpop.permute.xlu0 %3034
    %3036 = vset.pattern.permute.xlu0 0
    %3037 = vperm.xlu0 %3036, %v2980
    %v3038 = vpop.permute.xlu0 %3037
    %3039 = vset.pattern.permute.xlu0 0
    %3040 = vperm.xlu0 %3039, %v2981
    %v3041 = vpop.permute.xlu0 %3040
    %3042 = vset.pattern.permute.xlu0 0
    %3043 = vperm.xlu0 %3042, %v2982
    %v3044 = vpop.permute.xlu0 %3043
    %3045 = vset.pattern.permute.xlu0 0
    %3046 = vperm.xlu0 %3045, %v2983
    %v3047 = vpop.permute.xlu0 %3046
    %v3048 = vlaneseq
    %v3049 = vand.u32 %v3048, 127
    %v3050 = vperm.slane %v3002, %v3049
    %v3051 = vadd.s32 %v3049, 4294967288
    %v3052 = vperm.slane %v3005, %v3051
    %vm3053 = vcmask 130112
    %v3054 = vsel %vm3053, %v3052, %v3050
    %v3055 = vadd.s32 %v3049, 4294967280
    %v3056 = vperm.slane %v3008, %v3055
    %vm3057 = vcmask 195712
    %v3058 = vsel %vm3057, %v3056, %v3054
    %v3059 = vadd.s32 %v3049, 4294967272
    %v3060 = vperm.slane %v3011, %v3059
    %vm3061 = vcmask 261312
    %v3062 = vsel %vm3061, %v3060, %v3058
    %v3063 = vadd.s32 %v3049, 4294967264
    %v3064 = vperm.slane %v3014, %v3063
    %vm3065 = vcmask 326912
    %v3066 = vsel %vm3065, %v3064, %v3062
    %v3067 = vadd.s32 %v3049, 4294967256
    %v3068 = vperm.slane %v3017, %v3067
    %vm3069 = vcmask 392512
    %v3070 = vsel %vm3069, %v3068, %v3066
    %v3071 = vadd.s32 %v3049, 4294967248
    %v3072 = vperm.slane %v3020, %v3071
    %vm3073 = vcmask 458112
    %v3074 = vsel %vm3073, %v3072, %v3070
    %v3075 = vadd.s32 %v3049, 4294967240
    %v3076 = vperm.slane %v3023, %v3075
    %vm3077 = vcmask 523712
    %v3078 = vsel %vm3077, %v3076, %v3074
    %v3079 = vperm.slane %v3026, %v3049
    %v3080 = vperm.slane %v3029, %v3051
    %v3081 = vsel %vm3053, %v3080, %v3079
    %v3082 = vperm.slane %v3032, %v3055
    %v3083 = vsel %vm3057, %v3082, %v3081
    %v3084 = vperm.slane %v3035, %v3059
    %v3085 = vsel %vm3061, %v3084, %v3083
    %v3086 = vperm.slane %v3038, %v3063
    %v3087 = vsel %vm3065, %v3086, %v3085
    %v3088 = vperm.slane %v3041, %v3067
    %v3089 = vsel %vm3069, %v3088, %v3087
    %v3090 = vperm.slane %v3044, %v3071
    %v3091 = vsel %vm3073, %v3090, %v3089
    %v3092 = vperm.slane %v3047, %v3075
    %v3093 = vsel %vm3077, %v3092, %v3091
    %vm3094 = vcmask 1041409
    %v3095 = vsel %vm3094, %v3093, %v3078
    %3097 = vset.pattern.permute.xlu0 1
    %3098 = vperm.xlu0 %3097, %v2968
    %v3099 = vpop.permute.xlu0 %3098
    %3100 = vset.pattern.permute.xlu0 1
    %3101 = vperm.xlu0 %3100, %v2969
    %v3102 = vpop.permute.xlu0 %3101
    %3103 = vset.pattern.permute.xlu0 1
    %3104 = vperm.xlu0 %3103, %v2970
    %v3105 = vpop.permute.xlu0 %3104
    %3106 = vset.pattern.permute.xlu0 1
    %3107 = vperm.xlu0 %3106, %v2971
    %v3108 = vpop.permute.xlu0 %3107
    %3109 = vset.pattern.permute.xlu0 1
    %3110 = vperm.xlu0 %3109, %v2972
    %v3111 = vpop.permute.xlu0 %3110
    %3112 = vset.pattern.permute.xlu0 1
    %3113 = vperm.xlu0 %3112, %v2973
    %v3114 = vpop.permute.xlu0 %3113
    %3115 = vset.pattern.permute.xlu0 1
    %3116 = vperm.xlu0 %3115, %v2974
    %v3117 = vpop.permute.xlu0 %3116
    %3118 = vset.pattern.permute.xlu0 1
    %3119 = vperm.xlu0 %3118, %v2975
    %v3120 = vpop.permute.xlu0 %3119
    %3121 = vset.pattern.permute.xlu0 1
    %3122 = vperm.xlu0 %3121, %v2976
    %v3123 = vpop.permute.xlu0 %3122
    %3124 = vset.pattern.permute.xlu0 1
    %3125 = vperm.xlu0 %3124, %v2977
    %v3126 = vpop.permute.xlu0 %3125
    %3127 = vset.pattern.permute.xlu0 1
    %3128 = vperm.xlu0 %3127, %v2978
    %v3129 = vpop.permute.xlu0 %3128
    %3130 = vset.pattern.permute.xlu0 1
    %3131 = vperm.xlu0 %3130, %v2979
    %v3132 = vpop.permute.xlu0 %3131
    %3133 = vset.pattern.permute.xlu0 1
    %3134 = vperm.xlu0 %3133, %v2980
    %v3135 = vpop.permute.xlu0 %3134
    %3136 = vset.pattern.permute.xlu0 1
    %3137 = vperm.xlu0 %3136, %v2981
    %v3138 = vpop.permute.xlu0 %3137
    %3139 = vset.pattern.permute.xlu0 1
    %3140 = vperm.xlu0 %3139, %v2982
    %v3141 = vpop.permute.xlu0 %3140
    %3142 = vset.pattern.permute.xlu0 1
    %3143 = vperm.xlu0 %3142, %v2983
    %v3144 = vpop.permute.xlu0 %3143
    %v3145 = vadd.s32 %v3049, 4294967232
    %v3146 = vperm.slane %v3099, %v3145
    %v3147 = vadd.s32 %v3049, 4294967224
    %v3148 = vperm.slane %v3102, %v3147
    %vm3149 = vcmask 654912
    %v3150 = vsel %vm3149, %v3148, %v3146
    %v3151 = vadd.s32 %v3049, 4294967216
    %v3152 = vperm.slane %v3105, %v3151
    %vm3153 = vcmask 720512
    %v3154 = vsel %vm3153, %v3152, %v3150
    %v3155 = vadd.s32 %v3049, 4294967208
    %v3156 = vperm.slane %v3108, %v3155
    %vm3157 = vcmask 786112
    %v3158 = vsel %vm3157, %v3156, %v3154
    %v3159 = vadd.s32 %v3049, 4294967200
    %v3160 = vperm.slane %v3111, %v3159
    %vm3161 = vcmask 851712
    %v3162 = vsel %vm3161, %v3160, %v3158
    %v3163 = vadd.s32 %v3049, 4294967192
    %v3164 = vperm.slane %v3114, %v3163
    %vm3165 = vcmask 917312
    %v3166 = vsel %vm3165, %v3164, %v3162
    %v3167 = vadd.s32 %v3049, 4294967184
    %v3168 = vperm.slane %v3117, %v3167
    %vm3169 = vcmask 982912
    %v3170 = vsel %vm3169, %v3168, %v3166
    %v3171 = vadd.s32 %v3049, 4294967176
    %v3172 = vperm.slane %v3120, %v3171
    %vm3173 = vcmask 1048512
    %v3174 = vsel %vm3173, %v3172, %v3170
    %v3175 = vperm.slane %v3123, %v3145
    %v3176 = vperm.slane %v3126, %v3147
    %v3177 = vsel %vm3149, %v3176, %v3175
    %v3178 = vperm.slane %v3129, %v3151
    %v3179 = vsel %vm3153, %v3178, %v3177
    %v3180 = vperm.slane %v3132, %v3155
    %v3181 = vsel %vm3157, %v3180, %v3179
    %v3182 = vperm.slane %v3135, %v3159
    %v3183 = vsel %vm3161, %v3182, %v3181
    %v3184 = vperm.slane %v3138, %v3163
    %v3185 = vsel %vm3165, %v3184, %v3183
    %v3186 = vperm.slane %v3141, %v3167
    %v3187 = vsel %vm3169, %v3186, %v3185
    %v3188 = vperm.slane %v3144, %v3171
    %v3189 = vsel %vm3173, %v3188, %v3187
    %v3190 = vsel %vm3094, %v3189, %v3174
    %vm3192 = vcmask 523264
    %v3193 = vsel %vm3192, %v3095, %v3190
    %v3194 = vld [vmem:[%s7] sm:$0xff]
    %v3195 = vld [vmem:[%s7 + $0x8] sm:$0xff]
    %v3196 = vld [vmem:[%s7 + $0x10] sm:$0xff]
    %v3197 = vld [vmem:[%s7 + $0x18] sm:$0xff]
    %v3198 = vld [vmem:[%s7 + $0x20] sm:$0xff]
    %v3199 = vld [vmem:[%s7 + $0x28] sm:$0xff]
    %v3200 = vld [vmem:[%s7 + $0x30] sm:$0xff]
    %v3201 = vld [vmem:[%s7 + $0x38] sm:$0xff]
    %v3202 = vld [vmem:[%s7 + $0x40] sm:$0xff]
    %v3203 = vld [vmem:[%s7 + $0x48] sm:$0xff]
    %v3204 = vld [vmem:[%s7 + $0x50] sm:$0xff]
    %v3205 = vld [vmem:[%s7 + $0x58] sm:$0xff]
    %v3206 = vld [vmem:[%s7 + $0x60] sm:$0xff]
    %v3207 = vld [vmem:[%s7 + $0x68] sm:$0xff]
    %v3208 = vld [vmem:[%s7 + $0x70] sm:$0xff]
    %v3209 = vld [vmem:[%s7 + $0x78] sm:$0xff]
    %v3210 = vld [vmem:[%s8] sm:$0x1]
    %v3212 = vperm.slane %v3210, 0
    %3214 = vmatpush.msra.mxu0 %v3209
    %3215 = vmatpush.msra.mxu0 %v3208
    %3216 = vmatpush.msra.mxu0 %v3207
    %3217 = vmatpush.msra.mxu0 %v3206
    %3218 = vmatpush.msra.mxu0 %v3205
    %3219 = vmatpush.msra.mxu0 %v3204
    %3220 = vmatpush.msra.mxu0 %v3203
    %3221 = vmatpush.msra.mxu0 %v3202
    %3222 = vmatpush.msra.mxu0 %v3201
    %3223 = vmatpush.msra.mxu0 %v3200
    %3224 = vmatpush.msra.mxu0 %v3199
    %3225 = vmatpush.msra.mxu0 %v3198
    %3226 = vmatpush.msra.mxu0 %v3197
    %3227 = vmatpush.msra.mxu0 %v3196
    %3228 = vmatpush.msra.mxu0 %v3195
    %3229 = vmatpush.msra.mxu0 %v3194
    %3230 = vmatmul.f32.gmra.mxu0 %v3193
    %v3231 = vpop.f32.mrf.mxu0
    %v3232 = vadd.f32 %v3212, %v3231
    %3233 = vdwg.mxu0
    %vm3234 = vcmask 517120
    %v3235 = vsel %vm3234, %v3232, -inf
    %3236 = vmax.xlane.f32.xlu0 %v3235
    %v3237 = vpop.xlane.xlu0 %3236
    %v3238 = vsub.f32 %v3232, %v3237
    %v3239 = vmul.f32 %v3238, 1.442695
    %v3240 = vpow.pop %v3239
    %v3241 = vsel %vm3234, %v3240, 0.0
    %3242 = vadd.xlane.f32.xlu0 %v3241
    %v3243 = vpop.xlane.xlu0 %3242
    %v3244 = vrcp.pop %v3243
    %v3245 = vmul.f32 %v3240, %v3244
    %3246 = vst.msk [vmem:[#allocation8] sm:$0x3] %vm3234, %v3245
    %v3247 = vld [vmem:[%s9] sm:$0xff]
    %v3248 = vld [vmem:[%s9 + $0x8] sm:$0xff]
    %v3249 = vld [vmem:[%s9 + $0x10] sm:$0xff]
    %v3250 = vld [vmem:[%s9 + $0x18] sm:$0xff]
    %v3251 = vld [vmem:[%s9 + $0x20] sm:$0xff]
    %v3252 = vld [vmem:[%s9 + $0x28] sm:$0xff]
    %v3253 = vld [vmem:[%s9 + $0x30] sm:$0xff]
    %v3254 = vld [vmem:[%s9 + $0x38] sm:$0xff]
    %v3255 = vld [vmem:[#allocation7] sm:$0x1]
    %v3257 = vperm.slane %v3255, 0
    %3259 = vset.pattern.permute.xlu0 2
    %3260 = vperm.xlu0 %3259, %v2968
    %v3261 = vpop.permute.xlu0 %3260
    %3262 = vset.pattern.permute.xlu0 2
    %3263 = vperm.xlu0 %3262, %v2969
    %v3264 = vpop.permute.xlu0 %3263
    %3265 = vset.pattern.permute.xlu0 2
    %3266 = vperm.xlu0 %3265, %v2970
    %v3267 = vpop.permute.xlu0 %3266
    %3268 = vset.pattern.permute.xlu0 2
    %3269 = vperm.xlu0 %3268, %v2971
    %v3270 = vpop.permute.xlu0 %3269
    %3271 = vset.pattern.permute.xlu0 2
    %3272 = vperm.xlu0 %3271, %v2972
    %v3273 = vpop.permute.xlu0 %3272
    %3274 = vset.pattern.permute.xlu0 2
    %3275 = vperm.xlu0 %3274, %v2973
    %v3276 = vpop.permute.xlu0 %3275
    %3277 = vset.pattern.permute.xlu0 2
    %3278 = vperm.xlu0 %3277, %v2974
    %v3279 = vpop.permute.xlu0 %3278
    %3280 = vset.pattern.permute.xlu0 2
    %3281 = vperm.xlu0 %3280, %v2975
    %v3282 = vpop.permute.xlu0 %3281
    %3283 = vset.pattern.permute.xlu0 2
    %3284 = vperm.xlu0 %3283, %v2976
    %v3285 = vpop.permute.xlu0 %3284
    %3286 = vset.pattern.permute.xlu0 2
    %3287 = vperm.xlu0 %3286, %v2977
    %v3288 = vpop.permute.xlu0 %3287
    %3289 = vset.pattern.permute.xlu0 2
    %3290 = vperm.xlu0 %3289, %v2978
    %v3291 = vpop.permute.xlu0 %3290
    %3292 = vset.pattern.permute.xlu0 2
    %3293 = vperm.xlu0 %3292, %v2979
    %v3294 = vpop.permute.xlu0 %3293
    %3295 = vset.pattern.permute.xlu0 2
    %3296 = vperm.xlu0 %3295, %v2980
    %v3297 = vpop.permute.xlu0 %3296
    %3298 = vset.pattern.permute.xlu0 2
    %3299 = vperm.xlu0 %3298, %v2981
    %v3300 = vpop.permute.xlu0 %3299
    %3301 = vset.pattern.permute.xlu0 2
    %3302 = vperm.xlu0 %3301, %v2982
    %v3303 = vpop.permute.xlu0 %3302
    %3304 = vset.pattern.permute.xlu0 2
    %3305 = vperm.xlu0 %3304, %v2983
    %v3306 = vpop.permute.xlu0 %3305
    %v3307 = vperm.slane %v3261, %v3049
    %v3308 = vperm.slane %v3264, %v3051
    %v3309 = vsel %vm3053, %v3308, %v3307
    %v3310 = vperm.slane %v3267, %v3055
    %v3311 = vsel %vm3057, %v3310, %v3309
    %v3312 = vperm.slane %v3270, %v3059
    %v3313 = vsel %vm3061, %v3312, %v3311
    %v3314 = vperm.slane %v3273, %v3063
    %v3315 = vsel %vm3065, %v3314, %v3313
    %v3316 = vperm.slane %v3276, %v3067
    %v3317 = vsel %vm3069, %v3316, %v3315
    %v3318 = vperm.slane %v3279, %v3071
    %v3319 = vsel %vm3073, %v3318, %v3317
    %v3320 = vperm.slane %v3282, %v3075
    %v3321 = vsel %vm3077, %v3320, %v3319
    %v3322 = vperm.slane %v3285, %v3049
    %v3323 = vperm.slane %v3288, %v3051
    %v3324 = vsel %vm3053, %v3323, %v3322
    %v3325 = vperm.slane %v3291, %v3055
    %v3326 = vsel %vm3057, %v3325, %v3324
    %v3327 = vperm.slane %v3294, %v3059
    %v3328 = vsel %vm3061, %v3327, %v3326
    %v3329 = vperm.slane %v3297, %v3063
    %v3330 = vsel %vm3065, %v3329, %v3328
    %v3331 = vperm.slane %v3300, %v3067
    %v3332 = vsel %vm3069, %v3331, %v3330
    %v3333 = vperm.slane %v3303, %v3071
    %v3334 = vsel %vm3073, %v3333, %v3332
    %v3335 = vperm.slane %v3306, %v3075
    %v3336 = vsel %vm3077, %v3335, %v3334
    %v3337 = vsel %vm3094, %v3336, %v3321
    %v3338 = vsel %vm3192, %v3337, 0
    %3340 = vmatpush.msra.mxu0 0.0
    %3341 = vmatpush.msra.mxu0 0.0
    %3342 = vmatpush.msra.mxu0 0.0
    %3343 = vmatpush.msra.mxu0 0.0
    %3344 = vmatpush.msra.mxu0 0.0
    %3345 = vmatpush.msra.mxu0 0.0
    %3346 = vmatpush.msra.mxu0 0.0
    %3347 = vmatpush.msra.mxu0 0.0
    %3348 = vmatpush.msra.mxu0 %v3254
    %3349 = vmatpush.msra.mxu0 %v3253
    %3350 = vmatpush.msra.mxu0 %v3252
    %3351 = vmatpush.msra.mxu0 %v3251
    %3352 = vmatpush.msra.mxu0 %v3250
    %3353 = vmatpush.msra.mxu0 %v3249
    %3354 = vmatpush.msra.mxu0 %v3248
    %3355 = vmatpush.msra.mxu0 %v3247
    %3356 = vmatmul.f32.gmra.mxu0 %v3338
    %v3357 = vpop.f32.mrf.mxu0
    %v3358 = vadd.f32 %v3257, %v3357
    %3359 = vdwg.mxu0
    %v3360 = vtanh.pop %v3358
    %vm3361 = vcmask 1024
    %3362 = vst.msk [vmem:[%s12] sm:$0x3] %vm3361, %v3360
    // Predicated region
    $region46: #{net_forward.1} parent=1 // pred_check
      _
    $region47: #{net_forward.1} parent=1 // pred_check_branch
      %3364 = sbr.rel (0) target = $region49
    $region48: #{net_forward.1} parent=1 // pred_region
      %3366 = vsyncadd [#allocation9], 0
      %s3368 = sshll.u32 [#allocation8], 4
      %s3369 = int_to_ptr.vmem [resolvable:$true] %s3368
      %s3370 = sshll.u32 %s11, 4
      %s3371 = int_to_ptr.hbm [resolvable:$true] %s3370
      %3373 = dma.vmem_to_hbm [thread:$0]  %s3369, 32, %s3371, [#allocation9]
    $region49: #{net_forward.1} parent=1 // pred_fallthru
      _
    // Predicated region
    $region50: #{net_forward.1} parent=1 // pred_check
      _
    $region51: #{net_forward.1} parent=1 // pred_check_branch
      %3375 = sbr.rel (0) target = $region53
    $region52: #{net_forward.1} parent=1 // pred_region
      _
    $region53: #{net_forward.1} parent=1 // pred_fallthru
      _
    // Predicated region
    $region54: #{net_forward.1} parent=1 // pred_check
      _
    $region55: #{net_forward.1} parent=1 // pred_check_branch
      %3377 = sbr.rel (0) target = $region57
    $region56: #{net_forward.1} parent=1 // pred_region
      %3379 = dma.done [#allocation9], 32
    $region57: #{net_forward.1} parent=1 // pred_fallthru
      _
    // Predicated region
    $region58: #{net_forward.1} parent=1 // pred_check
      _
    $region59: #{net_forward.1} parent=1 // pred_check_branch
      %3381 = sbr.rel (0) target = $region61
    $region60: #{net_forward.1} parent=1 // pred_region
      _
    $region61: #{net_forward.1} parent=1 // pred_fallthru
      _
    %3382 = vsyncpa [#allocation9], 1

</llo_original>
